<compile_context>
chip_gen: v7x
topology: tpu7x:2x2x1
jax: 0.10.0
libtpu: 0.0.40
codegen_flags: <defaults>
</compile_context>

<pallas_src>
import functools
import math

import jax
import jax.numpy as jnp
from jax.experimental import pallas as pl
from jax.experimental.pallas import tpu as pltpu

BN_EPS = 1e-5
VMEM_LIMIT = 32 * 1024 * 1024   # modest scoped-VMEM request (fits v5e/v6e/v7x)


def _round_up(x, m):
    return (x + m - 1) // m * m


def _fold_bn(p):
    """Fold eval-mode BatchNorm into conv weight/bias.  w: (3,3,cin,cout)."""
    scale = p["gamma"] * jax.lax.rsqrt(p["var"] + BN_EPS)
    w = (p["w"] * scale).astype(jnp.float32)
    b = (p["beta"] - p["mean"] * scale).astype(jnp.float32)
    return w, b


def _pack_conv1_weights(w, cout_p):
    """Phase-merged weights for the stride-2 conv on the space-to-depth input.

    Returns (4, 4*cin, cout_p): group g = 2*dr + dc is the spatial offset in
    phase space; K index = (2a + b)*cin + ch selects the phase channel block.
    """
    cin, cmid = w.shape[2], w.shape[3]
    w1 = jnp.zeros((4, 4 * cin, cout_p), jnp.float32)
    for dr in (0, 1):
        for dc in (0, 1):
            for a in (0, 1):
                for b in (0, 1):
                    i, j = 2 * dr + a, 2 * dc + b
                    if i <= 2 and j <= 2:
                        w1 = w1.at[2 * dr + dc,
                                   (2 * a + b) * cin:(2 * a + b + 1) * cin,
                                   :cmid].set(w[i, j])
    return w1


def _pick_rows_stage1(oh, ow):
    """Output-row tile for stage 1 (keeps the f32 accumulator small)."""
    if oh <= 16:
        return oh
    t = max(1, 1024 // max(ow, 1))
    if t >= 8:
        t = t // 8 * 8
    t = min(t, 64)
    return oh if t >= oh else t


def _pick_rows_stage2(oh, ow):
    """Row tile for stage 2; th*ow must be a multiple of 128 (lane-dense flat
    output tile) unless the tile covers the full image."""
    if oh * ow <= 2048:
        return oh
    step = 128 // math.gcd(ow, 128)
    t = max(step, (max(1, 768 // ow) // step) * step)
    return oh if t >= oh else t


# ----------------------------------------------------------------------------
# Stage 1: fused stride-2 Conv3x3 + BN + ReLU  AND  2x2 MaxPool branch
# ----------------------------------------------------------------------------
def _stem_stage1_kernel(p_ref, w_ref, b_ref, y_ref, pool_ref, *,
                        th, ow, cin, cout_p):
    """p_ref   : (1, PH_alloc, PW, 4*cin) f32  space-to-depth padded input
       w_ref   : (4, 4*cin, cout_p)       f32  phase-merged BN-folded weights
       b_ref   : (1, cout_p)              f32  BN-folded bias
       y_ref   : (1, th, ow, cout_p)      bf16 conv-branch output tile
       pool_ref: (1, th, ow, cin)         f32  max-pool branch output tile
    """
    r0 = pl.program_id(1) * th
    if th % 8 == 0:
        r0 = pl.multiple_of(r0, 8)
    ts = th * ow

    acc = jnp.zeros((ts, cout_p), jnp.float32)
    for dr in (0, 1):
        for dc in (0, 1):
            slab = p_ref[0, pl.ds(r0 + dr, th), dc:dc + ow, :]
            acc = acc + jnp.dot(slab.reshape(ts, 4 * cin),
                                w_ref[2 * dr + dc],
                                preferred_element_type=jnp.float32)
    y = jnp.maximum(acc + b_ref[...], 0.0)
    y_ref[0] = y.reshape(th, ow, cout_p).astype(y_ref.dtype)

    # MaxPool2d(2) of the original input: the four pooling taps are channel
    # groups of the space-to-depth tensor and never touch the zero padding.
    s11 = p_ref[0, pl.ds(r0, th), 0:ow, 3 * cin:4 * cin]
    s10 = p_ref[0, pl.ds(r0, th), 1:1 + ow, 2 * cin:3 * cin]
    s01 = p_ref[0, pl.ds(r0 + 1, th), 0:ow, 1 * cin:2 * cin]
    s00 = p_ref[0, pl.ds(r0 + 1, th), 1:1 + ow, 0:cin]
    pool_ref[0] = jnp.maximum(jnp.maximum(s11, s10), jnp.maximum(s01, s00))


# ----------------------------------------------------------------------------
# Stage 2: fused stride-1 Conv3x3 + BN + ReLU, writes the final NCHW output
# (conv channels first, maxpool channels appended).
# ----------------------------------------------------------------------------
def _stem_stage2_kernel(y1_ref, pool_ref, w_ref, b_ref, o_ref, pad_ref, *,
                        th, oh, ow, cmid, inc, cout_p):
    """y1_ref  : (1, oh, ow, cout_p)     bf16 stage-1 output (resident)
       pool_ref: (1, th, ow, inc)        f32  maxpool tile (pass-through)
       w_ref   : (9, cout_p, cout_p)     bf16 BN-folded weights, tap-major
       b_ref   : (1, cout_p)             f32
       o_ref   : (1, cmid+inc, th*ow)    f32  flat-spatial NCHW output tile
       pad_ref : (H_alloc, ow+2, cout_p) bf16 scratch: zero-padded stage-1 out
    """
    t = pl.program_id(1)

    @pl.when(t == 0)
    def _():
        # Build the zero-padded input once per batch element (the y1 block is
        # resident across the row-tile axis, so it is not re-DMA'd).
        pad_ref[...] = jnp.zeros_like(pad_ref)
        pad_ref[1:oh + 1, 1:ow + 1, :] = y1_ref[0]

    r0 = t * th
    if th % 8 == 0:
        r0 = pl.multiple_of(r0, 8)
    ts = th * ow

    acc = jnp.zeros((ts, cout_p), jnp.float32)
    for i in range(3):
        for j in range(3):
            slab = pad_ref[pl.ds(r0 + i, th), j:j + ow, :]
            acc = acc + jnp.dot(slab.reshape(ts, cout_p), w_ref[3 * i + j],
                                preferred_element_type=jnp.float32)
    y = jnp.maximum(acc + b_ref[...], 0.0)                  # (ts, cout_p) f32

    pool_t = pool_ref[0].reshape(ts, inc).T                 # (inc, ts)
    o_ref[0] = jnp.concatenate([y.T[:cmid, :], pool_t], axis=0)


# ----------------------------------------------------------------------------
# Stem forward (NCHW in / NCHW out, matching the PyTorch module)
# ----------------------------------------------------------------------------
def stem_forward(params, x):
    w1, b1 = _fold_bn(params["conv1"])
    w2, b2 = _fold_bn(params["conv2"])
    cin, cmid = w1.shape[2], w1.shape[3]
    B, inc, H, W = x.shape
    assert inc == cin
    assert H % 2 == 0 and W % 2 == 0, "stem expects even spatial dims"
    # TODO(synk): odd H/W (PyTorch floor-division pooling) is not supported.
    oh, ow = H // 2, W // 2
    outc = cmid + inc
    cout_p = _round_up(cmid, 8)          # 58 -> 64 intermediate channels

    # ---- parameter packing (BatchNorm folded, eval mode) --------------------
    # TODO(synk): train-mode batch statistics are not reproduced.
    w1p = _pack_conv1_weights(w1, cout_p)                       # (4, 4cin, cp)
    b1p = jnp.pad(b1, (0, cout_p - cmid)).reshape(1, cout_p)
    w2p = jnp.pad(w2, ((0, 0), (0, 0), (0, cout_p - cmid), (0, cout_p - cmid)))
    w2p = w2p.reshape(9, cout_p, cout_p).astype(jnp.bfloat16)
    b2p = jnp.pad(b2, (0, cout_p - cmid)).reshape(1, cout_p)

    # ---- space-to-depth of the zero-padded input (phases -> channels) -------
    # TODO(synk): this is one small wrapper pass over the inc-channel input.
    xh = jnp.transpose(x, (0, 2, 3, 1)).astype(jnp.float32)     # NHWC
    xp = jnp.pad(xh, ((0, 0), (1, 1), (1, 1), (0, 0)))
    ph, pw = (H + 2) // 2, (W + 2) // 2                          # = oh+1, ow+1
    p = xp.reshape(B, ph, 2, pw, 2, cin)
    p = p.transpose(0, 1, 3, 2, 4, 5).reshape(B, ph, pw, 4 * cin)

    th1 = _pick_rows_stage1(oh, ow)
    nt1 = pl.cdiv(oh, th1)
    ph_alloc = nt1 * th1 + 1
    if ph_alloc > ph:                    # protect in-kernel reads of overhang
        p = jnp.pad(p, ((0, 0), (0, ph_alloc - ph), (0, 0), (0, 0)))

    y1, pool = pl.pallas_call(
        functools.partial(_stem_stage1_kernel, th=th1, ow=ow,
                          cin=cin, cout_p=cout_p),
        out_shape=(jax.ShapeDtypeStruct((B, oh, ow, cout_p), jnp.bfloat16),
                   jax.ShapeDtypeStruct((B, oh, ow, cin), jnp.float32)),
        grid=(B, nt1),
        in_specs=[
            pl.BlockSpec((1, ph_alloc, pw, 4 * cin), lambda b, t: (b, 0, 0, 0)),
            pl.BlockSpec((4, 4 * cin, cout_p), lambda b, t: (0, 0, 0)),
            pl.BlockSpec((1, cout_p), lambda b, t: (0, 0)),
        ],
        out_specs=(
            pl.BlockSpec((1, th1, ow, cout_p), lambda b, t: (b, t, 0, 0)),
            pl.BlockSpec((1, th1, ow, cin), lambda b, t: (b, t, 0, 0)),
        ),
        compiler_params=pltpu.CompilerParams(
            dimension_semantics=("parallel", "parallel"),
            vmem_limit_bytes=VMEM_LIMIT),
    )(p, w1p, b1p)

    th2 = _pick_rows_stage2(oh, ow)
    nt2 = pl.cdiv(oh, th2)
    s = oh * ow
    ts2 = th2 * ow
    h_alloc = nt2 * th2 + 2

    out_flat = pl.pallas_call(
        functools.partial(_stem_stage2_kernel, th=th2, oh=oh, ow=ow,
                          cmid=cmid, inc=cin, cout_p=cout_p),
        out_shape=jax.ShapeDtypeStruct((B, outc, s), jnp.float32),
        grid=(B, nt2),
        in_specs=[
            pl.BlockSpec((1, oh, ow, cout_p), lambda b, t: (b, 0, 0, 0)),
            pl.BlockSpec((1, th2, ow, cin), lambda b, t: (b, t, 0, 0)),
            pl.BlockSpec((9, cout_p, cout_p), lambda b, t: (0, 0, 0)),
            pl.BlockSpec((1, cout_p), lambda b, t: (0, 0)),
        ],
        out_specs=pl.BlockSpec((1, outc, ts2), lambda b, t: (b, 0, t)),
        scratch_shapes=[pltpu.VMEM((h_alloc, ow + 2, cout_p), jnp.bfloat16)],
        compiler_params=pltpu.CompilerParams(
            # Row-tile axis is serial: the padded-input scratch is built once
            # per batch element at t == 0 (batch axis stays parallel).
            dimension_semantics=("parallel", "arbitrary"),
            vmem_limit_bytes=VMEM_LIMIT),
    )(y1, pool, w2p, b2p)

    return out_flat.reshape(B, outc, oh, ow)       # free (contiguous) reshape


# ----------------------------------------------------------------------------
# Parameter init + pure-JAX reference + demo
# ----------------------------------------------------------------------------
def init_params(key, inc, outc):
    cmid = outc - inc
    k1, k2 = jax.random.split(key)

    def conv_bn(k, cin, cout):
        kw, kg, kb, km, kv = jax.random.split(k, 5)
        std = 1.0 / math.sqrt(9 * cin)
        return {
            "w": std * jax.random.normal(kw, (3, 3, cin, cout), jnp.float32),
            "gamma": 1.0 + 0.1 * jax.random.normal(kg, (cout,), jnp.float32),
            "beta": 0.1 * jax.random.normal(kb, (cout,), jnp.float32),
            "mean": 0.1 * jax.random.normal(km, (cout,), jnp.float32),
            "var": 1.0 + 0.1 * jax.random.uniform(kv, (cout,), jnp.float32),
        }

    return {"conv1": conv_bn(k1, inc, cmid), "conv2": conv_bn(k2, cmid, cmid)}


def stem_reference(params, x):
    """Pure-JAX f32 reference (no Pallas) for the correctness check."""
    def conv_bn_relu(xh, pp, stride):
        y = jax.lax.conv_general_dilated(
            xh, pp["w"], window_strides=(stride, stride),
            padding=((1, 1), (1, 1)),
            dimension_numbers=("NHWC", "HWIO", "NHWC"))
        sc = pp["gamma"] * jax.lax.rsqrt(pp["var"] + BN_EPS)
        return jnp.maximum(y * sc + (pp["beta"] - pp["mean"] * sc), 0.0)

    xh = jnp.transpose(x, (0, 2, 3, 1)).astype(jnp.float32)
    h = conv_bn_relu(xh, params["conv1"], 2)
    h = conv_bn_relu(h, params["conv2"], 1)
    pool = jax.lax.reduce_window(xh, -jnp.inf, jax.lax.max,
                                 (1, 2, 2, 1), (1, 2, 2, 1), "VALID")
    out = jnp.concatenate([h, pool], axis=-1)
    return jnp.transpose(out, (0, 3, 1, 2))


if __name__ == "__main__":
    B, inc, H, W = 2, 4, 16, 16
    outc = 62                       # conv branch produces outc - inc = 58 ch
    key = jax.random.PRNGKey(0)
    kp, kx = jax.random.split(key)
    params = init_params(kp, inc, outc)
    x = jax.random.normal(kx, (B, inc, H, W), jnp.float32)

    out = jax.block_until_ready(jax.jit(stem_forward)(params, x))

    assert out.shape == (B, outc, H // 2, W // 2), out.shape
    assert bool(jnp.all(jnp.isfinite(out)))

    # Correctness vs. pure-JAX f32 reference (tolerance covers bf16 stage 2).
    ref = jax.jit(stem_reference)(params, x)
    err = float(jnp.max(jnp.abs(out - ref)))
    assert err < 2e-1, f"max abs err {err}"

    print("KERNEL_OK")
</pallas_src>

<mosaic_0001>
module attributes {stable_mosaic.version = 11 : i64} {
  func.func @_stem_stage1_kernel(%arg0: i32, %arg1: i32, %arg2: memref<1x9x9x16xf32, #tpu.memory_space<vmem>>, %arg3: memref<4x16x64xf32, #tpu.memory_space<vmem>>, %arg4: memref<1x64xf32, #tpu.memory_space<vmem>>, %arg5: memref<1x8x8x64xbf16, #tpu.memory_space<vmem>>, %arg6: memref<1x8x8x4xf32, #tpu.memory_space<vmem>>) attributes {dimension_semantics = [#tpu.dimension_semantics<parallel>, #tpu.dimension_semantics<parallel>], iteration_bounds = array<i64: 2, 1>, scalar_prefetch = 0 : i64, scratch_operands = 0 : i64, tpu.core_type = #tpu.core_type<tc>, window_params = [{transform_indices = @transform_0, window_bounds = array<i64: 1, 9, 9, 16>}, {pipeline_mode = #tpu.pipeline_mode<synchronous>, transform_indices = @transform_1, window_bounds = array<i64: 4, 16, 64>}, {pipeline_mode = #tpu.pipeline_mode<synchronous>, transform_indices = @transform_2, window_bounds = array<i64: 1, 64>}, {transform_indices = @transform_3, window_bounds = array<i64: 1, 8, 8, 64>}, {transform_indices = @transform_4, window_bounds = array<i64: 1, 8, 8, 4>}]} {
    %c8_i32 = arith.constant 8 : i32
    %0 = arith.muli %arg1, %c8_i32 : i32
    %1 = tpu.assume_multiple %0, 8 : i32
    %cst = arith.constant 0.000000e+00 : f32
    %2 = vector.broadcast %cst : f32 to vector<64x64xf32>
    %c0_i32 = arith.constant 0 : i32
    %3 = arith.addi %1, %c0_i32 : i32
    %c0 = arith.constant 0 : index
    %4 = arith.index_cast %3 : i32 to index
    %c0_0 = arith.constant 0 : index
    %c0_1 = arith.constant 0 : index
    %5 = vector.load %arg2[%c0, %4, %c0_0, %c0_1] : memref<1x9x9x16xf32, #tpu.memory_space<vmem>>, vector<1x8x8x16xf32>
    %6 = vector.shape_cast %5 : vector<1x8x8x16xf32> to vector<8x8x16xf32>
    %7 = vector.shape_cast %6 : vector<8x8x16xf32> to vector<64x16xf32>
    %c0_2 = arith.constant 0 : index
    %c0_3 = arith.constant 0 : index
    %c0_4 = arith.constant 0 : index
    %8 = vector.load %arg3[%c0_2, %c0_3, %c0_4] : memref<4x16x64xf32, #tpu.memory_space<vmem>>, vector<1x16x64xf32>
    %9 = vector.shape_cast %8 : vector<1x16x64xf32> to vector<16x64xf32>
    %cst_5 = arith.constant dense<0.000000e+00> : vector<64x64xf32>
    %10 = tpu.matmul %7, %9, %cst_5 {dimension_numbers = #tpu.dot_dimension_numbers<[1], [0], [0], [1], [0, 0, 1, 1], [], []>} : vector<64x16xf32>, vector<16x64xf32>, vector<64x64xf32> -> vector<64x64xf32>
    %11 = arith.addf %2, %10 : vector<64x64xf32>
    %c0_i32_6 = arith.constant 0 : i32
    %12 = arith.addi %1, %c0_i32_6 : i32
    %c0_7 = arith.constant 0 : index
    %13 = arith.index_cast %12 : i32 to index
    %c1 = arith.constant 1 : index
    %c0_8 = arith.constant 0 : index
    %14 = vector.load %arg2[%c0_7, %13, %c1, %c0_8] : memref<1x9x9x16xf32, #tpu.memory_space<vmem>>, vector<1x8x8x16xf32>
    %15 = vector.shape_cast %14 : vector<1x8x8x16xf32> to vector<8x8x16xf32>
    %16 = vector.shape_cast %15 : vector<8x8x16xf32> to vector<64x16xf32>
    %c1_9 = arith.constant 1 : index
    %c0_10 = arith.constant 0 : index
    %c0_11 = arith.constant 0 : index
    %17 = vector.load %arg3[%c1_9, %c0_10, %c0_11] : memref<4x16x64xf32, #tpu.memory_space<vmem>>, vector<1x16x64xf32>
    %18 = vector.shape_cast %17 : vector<1x16x64xf32> to vector<16x64xf32>
    %cst_12 = arith.constant dense<0.000000e+00> : vector<64x64xf32>
    %19 = tpu.matmul %16, %18, %cst_12 {dimension_numbers = #tpu.dot_dimension_numbers<[1], [0], [0], [1], [0, 0, 1, 1], [], []>} : vector<64x16xf32>, vector<16x64xf32>, vector<64x64xf32> -> vector<64x64xf32>
    %20 = arith.addf %11, %19 : vector<64x64xf32>
    %c1_i32 = arith.constant 1 : i32
    %21 = arith.addi %1, %c1_i32 : i32
    %c0_13 = arith.constant 0 : index
    %22 = arith.index_cast %21 : i32 to index
    %c0_14 = arith.constant 0 : index
    %c0_15 = arith.constant 0 : index
    %23 = vector.load %arg2[%c0_13, %22, %c0_14, %c0_15] : memref<1x9x9x16xf32, #tpu.memory_space<vmem>>, vector<1x8x8x16xf32>
    %24 = vector.shape_cast %23 : vector<1x8x8x16xf32> to vector<8x8x16xf32>
    %25 = vector.shape_cast %24 : vector<8x8x16xf32> to vector<64x16xf32>
    %c2 = arith.constant 2 : index
    %c0_16 = arith.constant 0 : index
    %c0_17 = arith.constant 0 : index
    %26 = vector.load %arg3[%c2, %c0_16, %c0_17] : memref<4x16x64xf32, #tpu.memory_space<vmem>>, vector<1x16x64xf32>
    %27 = vector.shape_cast %26 : vector<1x16x64xf32> to vector<16x64xf32>
    %cst_18 = arith.constant dense<0.000000e+00> : vector<64x64xf32>
    %28 = tpu.matmul %25, %27, %cst_18 {dimension_numbers = #tpu.dot_dimension_numbers<[1], [0], [0], [1], [0, 0, 1, 1], [], []>} : vector<64x16xf32>, vector<16x64xf32>, vector<64x64xf32> -> vector<64x64xf32>
    %29 = arith.addf %20, %28 : vector<64x64xf32>
    %c1_i32_19 = arith.constant 1 : i32
    %30 = arith.addi %1, %c1_i32_19 : i32
    %c0_20 = arith.constant 0 : index
    %31 = arith.index_cast %30 : i32 to index
    %c1_21 = arith.constant 1 : index
    %c0_22 = arith.constant 0 : index
    %32 = vector.load %arg2[%c0_20, %31, %c1_21, %c0_22] : memref<1x9x9x16xf32, #tpu.memory_space<vmem>>, vector<1x8x8x16xf32>
    %33 = vector.shape_cast %32 : vector<1x8x8x16xf32> to vector<8x8x16xf32>
    %34 = vector.shape_cast %33 : vector<8x8x16xf32> to vector<64x16xf32>
    %c3 = arith.constant 3 : index
    %c0_23 = arith.constant 0 : index
    %c0_24 = arith.constant 0 : index
    %35 = vector.load %arg3[%c3, %c0_23, %c0_24] : memref<4x16x64xf32, #tpu.memory_space<vmem>>, vector<1x16x64xf32>
    %36 = vector.shape_cast %35 : vector<1x16x64xf32> to vector<16x64xf32>
    %cst_25 = arith.constant dense<0.000000e+00> : vector<64x64xf32>
    %37 = tpu.matmul %34, %36, %cst_25 {dimension_numbers = #tpu.dot_dimension_numbers<[1], [0], [0], [1], [0, 0, 1, 1], [], []>} : vector<64x16xf32>, vector<16x64xf32>, vector<64x64xf32> -> vector<64x64xf32>
    %38 = arith.addf %29, %37 : vector<64x64xf32>
    %c0_26 = arith.constant 0 : index
    %c0_27 = arith.constant 0 : index
    %39 = vector.load %arg4[%c0_26, %c0_27] : memref<1x64xf32, #tpu.memory_space<vmem>>, vector<1x64xf32>
    %40 = vector.broadcast %39 : vector<1x64xf32> to vector<64x64xf32>
    %41 = arith.addf %38, %40 : vector<64x64xf32>
    %cst_28 = arith.constant 0.000000e+00 : f32
    %42 = vector.broadcast %cst_28 : f32 to vector<64x64xf32>
    %43 = arith.maximumf %41, %42 : vector<64x64xf32>
    %44 = vector.shape_cast %43 : vector<64x64xf32> to vector<8x8x64xf32>
    %45 = arith.truncf %44 : vector<8x8x64xf32> to vector<8x8x64xbf16>
    %c0_29 = arith.constant 0 : index
    %c0_30 = arith.constant 0 : index
    %c0_31 = arith.constant 0 : index
    %c0_32 = arith.constant 0 : index
    %46 = vector.load %arg5[%c0_29, %c0_30, %c0_31, %c0_32] : memref<1x8x8x64xbf16, #tpu.memory_space<vmem>>, vector<1x8x8x64xbf16>
    %47 = vector.shape_cast %46 : vector<1x8x8x64xbf16> to vector<8x8x64xbf16>
    %48 = vector.shape_cast %45 : vector<8x8x64xbf16> to vector<1x8x8x64xbf16>
    tpu.vector_store %arg5[%c0_29, %c0_30, %c0_31, %c0_32], %48 {strides = array<i32>} : memref<1x8x8x64xbf16, #tpu.memory_space<vmem>>, vector<1x8x8x64xbf16>,
    %c0_33 = arith.constant 0 : index
    %49 = arith.index_cast %1 : i32 to index
    %c0_34 = arith.constant 0 : index
    %c12 = arith.constant 12 : index
    %50 = vector.load %arg2[%c0_33, %49, %c0_34, %c12] : memref<1x9x9x16xf32, #tpu.memory_space<vmem>>, vector<1x8x8x4xf32>
    %51 = vector.shape_cast %50 : vector<1x8x8x4xf32> to vector<8x8x4xf32>
    %c0_35 = arith.constant 0 : index
    %52 = arith.index_cast %1 : i32 to index
    %c1_36 = arith.constant 1 : index
    %c8 = arith.constant 8 : index
    %53 = vector.load %arg2[%c0_35, %52, %c1_36, %c8] : memref<1x9x9x16xf32, #tpu.memory_space<vmem>>, vector<1x8x8x4xf32>
    %54 = vector.shape_cast %53 : vector<1x8x8x4xf32> to vector<8x8x4xf32>
    %c1_i32_37 = arith.constant 1 : i32
    %55 = arith.addi %1, %c1_i32_37 : i32
    %c0_38 = arith.constant 0 : index
    %56 = arith.index_cast %55 : i32 to index
    %c0_39 = arith.constant 0 : index
    %c4 = arith.constant 4 : index
    %57 = vector.load %arg2[%c0_38, %56, %c0_39, %c4] : memref<1x9x9x16xf32, #tpu.memory_space<vmem>>, vector<1x8x8x4xf32>
    %58 = vector.shape_cast %57 : vector<1x8x8x4xf32> to vector<8x8x4xf32>
    %c1_i32_40 = arith.constant 1 : i32
    %59 = arith.addi %1, %c1_i32_40 : i32
    %c0_41 = arith.constant 0 : index
    %60 = arith.index_cast %59 : i32 to index
    %c1_42 = arith.constant 1 : index
    %c0_43 = arith.constant 0 : index
    %61 = vector.load %arg2[%c0_41, %60, %c1_42, %c0_43] : memref<1x9x9x16xf32, #tpu.memory_space<vmem>>, vector<1x8x8x4xf32>
    %62 = vector.shape_cast %61 : vector<1x8x8x4xf32> to vector<8x8x4xf32>
    %63 = arith.maximumf %51, %54 : vector<8x8x4xf32>
    %64 = arith.maximumf %58, %62 : vector<8x8x4xf32>
    %65 = arith.maximumf %63, %64 : vector<8x8x4xf32>
    %c0_44 = arith.constant 0 : index
    %c0_45 = arith.constant 0 : index
    %c0_46 = arith.constant 0 : index
    %c0_47 = arith.constant 0 : index
    %66 = vector.load %arg6[%c0_44, %c0_45, %c0_46, %c0_47] : memref<1x8x8x4xf32, #tpu.memory_space<vmem>>, vector<1x8x8x4xf32>
    %67 = vector.shape_cast %66 : vector<1x8x8x4xf32> to vector<8x8x4xf32>
    %68 = vector.shape_cast %65 : vector<8x8x4xf32> to vector<1x8x8x4xf32>
    tpu.vector_store %arg6[%c0_44, %c0_45, %c0_46, %c0_47], %68 {strides = array<i32>} : memref<1x8x8x4xf32, #tpu.memory_space<vmem>>, vector<1x8x8x4xf32>,
    return
  }
  func.func @transform_0(%arg0: i32, %arg1: i32) -> (i32, i32, i32, i32) {
    %c0_i32 = arith.constant 0 : i32
    %c0_i32_0 = arith.constant 0 : i32
    %c0_i32_1 = arith.constant 0 : i32
    %c0_i32_2 = arith.constant 0 : i32
    return %arg0, %c0_i32, %c0_i32_0, %c0_i32_1 : i32, i32, i32, i32
  }
  func.func @transform_1(%arg0: i32, %arg1: i32) -> (i32, i32, i32) {
    %c0_i32 = arith.constant 0 : i32
    %c0_i32_0 = arith.constant 0 : i32
    %c0_i32_1 = arith.constant 0 : i32
    %c0_i32_2 = arith.constant 0 : i32
    return %c0_i32, %c0_i32_0, %c0_i32_1 : i32, i32, i32
  }
  func.func @transform_2(%arg0: i32, %arg1: i32) -> (i32, i32) {
    %c0_i32 = arith.constant 0 : i32
    %c0_i32_0 = arith.constant 0 : i32
    %c0_i32_1 = arith.constant 0 : i32
    return %c0_i32, %c0_i32_0 : i32, i32
  }
  func.func @transform_3(%arg0: i32, %arg1: i32) -> (i32, i32, i32, i32) {
    %c0_i32 = arith.constant 0 : i32
    %c0_i32_0 = arith.constant 0 : i32
    %c0_i32_1 = arith.constant 0 : i32
    return %arg0, %arg1, %c0_i32, %c0_i32_0 : i32, i32, i32, i32
  }
  func.func @transform_4(%arg0: i32, %arg1: i32) -> (i32, i32, i32, i32) {
    %c0_i32 = arith.constant 0 : i32
    %c0_i32_0 = arith.constant 0 : i32
    %c0_i32_1 = arith.constant 0 : i32
    return %arg0, %arg1, %c0_i32, %c0_i32_0 : i32, i32, i32, i32
  }
}

module attributes {stable_mosaic.version = 11 : i64} {
  func.func @_stem_stage2_kernel(%arg0: i32, %arg1: i32, %arg2: memref<1x8x8x64xbf16, #tpu.memory_space<vmem>>, %arg3: memref<1x8x8x4xf32, #tpu.memory_space<vmem>>, %arg4: memref<9x64x64xbf16, #tpu.memory_space<vmem>>, %arg5: memref<1x64xf32, #tpu.memory_space<vmem>>, %arg6: memref<1x62x64xf32, #tpu.memory_space<vmem>>, %arg7: memref<10x10x64xbf16, #tpu.memory_space<vmem>>) attributes {dimension_semantics = [#tpu.dimension_semantics<parallel>, #tpu.dimension_semantics<arbitrary>], iteration_bounds = array<i64: 2, 1>, scalar_prefetch = 0 : i64, scratch_operands = 1 : i64, tpu.core_type = #tpu.core_type<tc>, window_params = [{transform_indices = @transform_0, window_bounds = array<i64: 1, 8, 8, 64>}, {transform_indices = @transform_1, window_bounds = array<i64: 1, 8, 8, 4>}, {pipeline_mode = #tpu.pipeline_mode<synchronous>, transform_indices = @transform_2, window_bounds = array<i64: 9, 64, 64>}, {pipeline_mode = #tpu.pipeline_mode<synchronous>, transform_indices = @transform_3, window_bounds = array<i64: 1, 64>}, {transform_indices = @transform_4, window_bounds = array<i64: 1, 62, 64>}]} {
    %c0_i32 = arith.constant 0 : i32
    %0 = arith.cmpi eq, %arg1, %c0_i32 : i32
    %1 = arith.extui %0 : i1 to i32
    %c0_i32_0 = arith.constant 0 : i32
    %2 = arith.cmpi ne, %1, %c0_i32_0 : i32
    scf.if %2 {
      %cst_63 = arith.constant 0.000000e+00 : bf16
      %93 = vector.broadcast %cst_63 : bf16 to vector<10x10x64xbf16>
      %c0_64 = arith.constant 0 : index
      %c0_65 = arith.constant 0 : index
      %c0_66 = arith.constant 0 : index
      %94 = vector.load %arg7[%c0_64, %c0_65, %c0_66] : memref<10x10x64xbf16, #tpu.memory_space<vmem>>, vector<10x10x64xbf16>
      tpu.vector_store %arg7[%c0_64, %c0_65, %c0_66], %93 {strides = array<i32>} : memref<10x10x64xbf16, #tpu.memory_space<vmem>>, vector<10x10x64xbf16>,
      %c0_67 = arith.constant 0 : index
      %c0_68 = arith.constant 0 : index
      %c0_69 = arith.constant 0 : index
      %c0_70 = arith.constant 0 : index
      %95 = vector.load %arg2[%c0_67, %c0_68, %c0_69, %c0_70] : memref<1x8x8x64xbf16, #tpu.memory_space<vmem>>, vector<1x8x8x64xbf16>
      %96 = vector.shape_cast %95 : vector<1x8x8x64xbf16> to vector<8x8x64xbf16>
      %c1_71 = arith.constant 1 : index
      %c1_72 = arith.constant 1 : index
      %c0_73 = arith.constant 0 : index
      %97 = vector.load %arg7[%c1_71, %c1_72, %c0_73] : memref<10x10x64xbf16, #tpu.memory_space<vmem>>, vector<8x8x64xbf16>
      tpu.vector_store %arg7[%c1_71, %c1_72, %c0_73], %96 {strides = array<i32>} : memref<10x10x64xbf16, #tpu.memory_space<vmem>>, vector<8x8x64xbf16>,
    } else {
    }
    %c8_i32 = arith.constant 8 : i32
    %3 = arith.muli %arg1, %c8_i32 : i32
    %4 = tpu.assume_multiple %3, 8 : i32
    %cst = arith.constant 0.000000e+00 : f32
    %5 = vector.broadcast %cst : f32 to vector<64x64xf32>
    %c0_i32_1 = arith.constant 0 : i32
    %6 = arith.addi %4, %c0_i32_1 : i32
    %7 = arith.index_cast %6 : i32 to index
    %c0 = arith.constant 0 : index
    %c0_2 = arith.constant 0 : index
    %8 = vector.load %arg7[%7, %c0, %c0_2] : memref<10x10x64xbf16, #tpu.memory_space<vmem>>, vector<8x8x64xbf16>
    %9 = vector.shape_cast %8 : vector<8x8x64xbf16> to vector<64x64xbf16>
    %c0_3 = arith.constant 0 : index
    %c0_4 = arith.constant 0 : index
    %c0_5 = arith.constant 0 : index
    %10 = vector.load %arg4[%c0_3, %c0_4, %c0_5] : memref<9x64x64xbf16, #tpu.memory_space<vmem>>, vector<1x64x64xbf16>
    %11 = vector.shape_cast %10 : vector<1x64x64xbf16> to vector<64x64xbf16>
    %cst_6 = arith.constant dense<0.000000e+00> : vector<64x64xf32>
    %12 = tpu.matmul %9, %11, %cst_6 {dimension_numbers = #tpu.dot_dimension_numbers<[1], [0], [0], [1], [0, 0, 1, 1], [], []>} : vector<64x64xbf16>, vector<64x64xbf16>, vector<64x64xf32> -> vector<64x64xf32>
    %13 = arith.addf %5, %12 : vector<64x64xf32>
    %c0_i32_7 = arith.constant 0 : i32
    %14 = arith.addi %4, %c0_i32_7 : i32
    %15 = arith.index_cast %14 : i32 to index
    %c1 = arith.constant 1 : index
    %c0_8 = arith.constant 0 : index
    %16 = vector.load %arg7[%15, %c1, %c0_8] : memref<10x10x64xbf16, #tpu.memory_space<vmem>>, vector<8x8x64xbf16>
    %17 = vector.shape_cast %16 : vector<8x8x64xbf16> to vector<64x64xbf16>
    %c1_9 = arith.constant 1 : index
    %c0_10 = arith.constant 0 : index
    %c0_11 = arith.constant 0 : index
    %18 = vector.load %arg4[%c1_9, %c0_10, %c0_11] : memref<9x64x64xbf16, #tpu.memory_space<vmem>>, vector<1x64x64xbf16>
    %19 = vector.shape_cast %18 : vector<1x64x64xbf16> to vector<64x64xbf16>
    %cst_12 = arith.constant dense<0.000000e+00> : vector<64x64xf32>
    %20 = tpu.matmul %17, %19, %cst_12 {dimension_numbers = #tpu.dot_dimension_numbers<[1], [0], [0], [1], [0, 0, 1, 1], [], []>} : vector<64x64xbf16>, vector<64x64xbf16>, vector<64x64xf32> -> vector<64x64xf32>
    %21 = arith.addf %13, %20 : vector<64x64xf32>
    %c0_i32_13 = arith.constant 0 : i32
    %22 = arith.addi %4, %c0_i32_13 : i32
    %23 = arith.index_cast %22 : i32 to index
    %c2 = arith.constant 2 : index
    %c0_14 = arith.constant 0 : index
    %24 = vector.load %arg7[%23, %c2, %c0_14] : memref<10x10x64xbf16, #tpu.memory_space<vmem>>, vector<8x8x64xbf16>
    %25 = vector.shape_cast %24 : vector<8x8x64xbf16> to vector<64x64xbf16>
    %c2_15 = arith.constant 2 : index
    %c0_16 = arith.constant 0 : index
    %c0_17 = arith.constant 0 : index
    %26 = vector.load %arg4[%c2_15, %c0_16, %c0_17] : memref<9x64x64xbf16, #tpu.memory_space<vmem>>, vector<1x64x64xbf16>
    %27 = vector.shape_cast %26 : vector<1x64x64xbf16> to vector<64x64xbf16>
    %cst_18 = arith.constant dense<0.000000e+00> : vector<64x64xf32>
    %28 = tpu.matmul %25, %27, %cst_18 {dimension_numbers = #tpu.dot_dimension_numbers<[1], [0], [0], [1], [0, 0, 1, 1], [], []>} : vector<64x64xbf16>, vector<64x64xbf16>, vector<64x64xf32> -> vector<64x64xf32>
    %29 = arith.addf %21, %28 : vector<64x64xf32>
    %c1_i32 = arith.constant 1 : i32
    %30 = arith.addi %4, %c1_i32 : i32
    %31 = arith.index_cast %30 : i32 to index
    %c0_19 = arith.constant 0 : index
    %c0_20 = arith.constant 0 : index
    %32 = vector.load %arg7[%31, %c0_19, %c0_20] : memref<10x10x64xbf16, #tpu.memory_space<vmem>>, vector<8x8x64xbf16>
    %33 = vector.shape_cast %32 : vector<8x8x64xbf16> to vector<64x64xbf16>
    %c3 = arith.constant 3 : index
    %c0_21 = arith.constant 0 : index
    %c0_22 = arith.constant 0 : index
    %34 = vector.load %arg4[%c3, %c0_21, %c0_22] : memref<9x64x64xbf16, #tpu.memory_space<vmem>>, vector<1x64x64xbf16>
    %35 = vector.shape_cast %34 : vector<1x64x64xbf16> to vector<64x64xbf16>
    %cst_23 = arith.constant dense<0.000000e+00> : vector<64x64xf32>
    %36 = tpu.matmul %33, %35, %cst_23 {dimension_numbers = #tpu.dot_dimension_numbers<[1], [0], [0], [1], [0, 0, 1, 1], [], []>} : vector<64x64xbf16>, vector<64x64xbf16>, vector<64x64xf32> -> vector<64x64xf32>
    %37 = arith.addf %29, %36 : vector<64x64xf32>
    %c1_i32_24 = arith.constant 1 : i32
    %38 = arith.addi %4, %c1_i32_24 : i32
    %39 = arith.index_cast %38 : i32 to index
    %c1_25 = arith.constant 1 : index
    %c0_26 = arith.constant 0 : index
    %40 = vector.load %arg7[%39, %c1_25, %c0_26] : memref<10x10x64xbf16, #tpu.memory_space<vmem>>, vector<8x8x64xbf16>
    %41 = vector.shape_cast %40 : vector<8x8x64xbf16> to vector<64x64xbf16>
    %c4 = arith.constant 4 : index
    %c0_27 = arith.constant 0 : index
    %c0_28 = arith.constant 0 : index
    %42 = vector.load %arg4[%c4, %c0_27, %c0_28] : memref<9x64x64xbf16, #tpu.memory_space<vmem>>, vector<1x64x64xbf16>
    %43 = vector.shape_cast %42 : vector<1x64x64xbf16> to vector<64x64xbf16>
    %cst_29 = arith.constant dense<0.000000e+00> : vector<64x64xf32>
    %44 = tpu.matmul %41, %43, %cst_29 {dimension_numbers = #tpu.dot_dimension_numbers<[1], [0], [0], [1], [0, 0, 1, 1], [], []>} : vector<64x64xbf16>, vector<64x64xbf16>, vector<64x64xf32> -> vector<64x64xf32>
    %45 = arith.addf %37, %44 : vector<64x64xf32>
    %c1_i32_30 = arith.constant 1 : i32
    %46 = arith.addi %4, %c1_i32_30 : i32
    %47 = arith.index_cast %46 : i32 to index
    %c2_31 = arith.constant 2 : index
    %c0_32 = arith.constant 0 : index
    %48 = vector.load %arg7[%47, %c2_31, %c0_32] : memref<10x10x64xbf16, #tpu.memory_space<vmem>>, vector<8x8x64xbf16>
    %49 = vector.shape_cast %48 : vector<8x8x64xbf16> to vector<64x64xbf16>
    %c5 = arith.constant 5 : index
    %c0_33 = arith.constant 0 : index
    %c0_34 = arith.constant 0 : index
    %50 = vector.load %arg4[%c5, %c0_33, %c0_34] : memref<9x64x64xbf16, #tpu.memory_space<vmem>>, vector<1x64x64xbf16>
    %51 = vector.shape_cast %50 : vector<1x64x64xbf16> to vector<64x64xbf16>
    %cst_35 = arith.constant dense<0.000000e+00> : vector<64x64xf32>
    %52 = tpu.matmul %49, %51, %cst_35 {dimension_numbers = #tpu.dot_dimension_numbers<[1], [0], [0], [1], [0, 0, 1, 1], [], []>} : vector<64x64xbf16>, vector<64x64xbf16>, vector<64x64xf32> -> vector<64x64xf32>
    %53 = arith.addf %45, %52 : vector<64x64xf32>
    %c2_i32 = arith.constant 2 : i32
    %54 = arith.addi %4, %c2_i32 : i32
    %55 = arith.index_cast %54 : i32 to index
    %c0_36 = arith.constant 0 : index
    %c0_37 = arith.constant 0 : index
    %56 = vector.load %arg7[%55, %c0_36, %c0_37] : memref<10x10x64xbf16, #tpu.memory_space<vmem>>, vector<8x8x64xbf16>
    %57 = vector.shape_cast %56 : vector<8x8x64xbf16> to vector<64x64xbf16>
    %c6 = arith.constant 6 : index
    %c0_38 = arith.constant 0 : index
    %c0_39 = arith.constant 0 : index
    %58 = vector.load %arg4[%c6, %c0_38, %c0_39] : memref<9x64x64xbf16, #tpu.memory_space<vmem>>, vector<1x64x64xbf16>
    %59 = vector.shape_cast %58 : vector<1x64x64xbf16> to vector<64x64xbf16>
    %cst_40 = arith.constant dense<0.000000e+00> : vector<64x64xf32>
    %60 = tpu.matmul %57, %59, %cst_40 {dimension_numbers = #tpu.dot_dimension_numbers<[1], [0], [0], [1], [0, 0, 1, 1], [], []>} : vector<64x64xbf16>, vector<64x64xbf16>, vector<64x64xf32> -> vector<64x64xf32>
    %61 = arith.addf %53, %60 : vector<64x64xf32>
    %c2_i32_41 = arith.constant 2 : i32
    %62 = arith.addi %4, %c2_i32_41 : i32
    %63 = arith.index_cast %62 : i32 to index
    %c1_42 = arith.constant 1 : index
    %c0_43 = arith.constant 0 : index
    %64 = vector.load %arg7[%63, %c1_42, %c0_43] : memref<10x10x64xbf16, #tpu.memory_space<vmem>>, vector<8x8x64xbf16>
    %65 = vector.shape_cast %64 : vector<8x8x64xbf16> to vector<64x64xbf16>
    %c7 = arith.constant 7 : index
    %c0_44 = arith.constant 0 : index
    %c0_45 = arith.constant 0 : index
    %66 = vector.load %arg4[%c7, %c0_44, %c0_45] : memref<9x64x64xbf16, #tpu.memory_space<vmem>>, vector<1x64x64xbf16>
    %67 = vector.shape_cast %66 : vector<1x64x64xbf16> to vector<64x64xbf16>
    %cst_46 = arith.constant dense<0.000000e+00> : vector<64x64xf32>
    %68 = tpu.matmul %65, %67, %cst_46 {dimension_numbers = #tpu.dot_dimension_numbers<[1], [0], [0], [1], [0, 0, 1, 1], [], []>} : vector<64x64xbf16>, vector<64x64xbf16>, vector<64x64xf32> -> vector<64x64xf32>
    %69 = arith.addf %61, %68 : vector<64x64xf32>
    %c2_i32_47 = arith.constant 2 : i32
    %70 = arith.addi %4, %c2_i32_47 : i32
    %71 = arith.index_cast %70 : i32 to index
    %c2_48 = arith.constant 2 : index
    %c0_49 = arith.constant 0 : index
    %72 = vector.load %arg7[%71, %c2_48, %c0_49] : memref<10x10x64xbf16, #tpu.memory_space<vmem>>, vector<8x8x64xbf16>
    %73 = vector.shape_cast %72 : vector<8x8x64xbf16> to vector<64x64xbf16>
    %c8 = arith.constant 8 : index
    %c0_50 = arith.constant 0 : index
    %c0_51 = arith.constant 0 : index
    %74 = vector.load %arg4[%c8, %c0_50, %c0_51] : memref<9x64x64xbf16, #tpu.memory_space<vmem>>, vector<1x64x64xbf16>
    %75 = vector.shape_cast %74 : vector<1x64x64xbf16> to vector<64x64xbf16>
    %cst_52 = arith.constant dense<0.000000e+00> : vector<64x64xf32>
    %76 = tpu.matmul %73, %75, %cst_52 {dimension_numbers = #tpu.dot_dimension_numbers<[1], [0], [0], [1], [0, 0, 1, 1], [], []>} : vector<64x64xbf16>, vector<64x64xbf16>, vector<64x64xf32> -> vector<64x64xf32>
    %77 = arith.addf %69, %76 : vector<64x64xf32>
    %c0_53 = arith.constant 0 : index
    %c0_54 = arith.constant 0 : index
    %78 = vector.load %arg5[%c0_53, %c0_54] : memref<1x64xf32, #tpu.memory_space<vmem>>, vector<1x64xf32>
    %79 = vector.broadcast %78 : vector<1x64xf32> to vector<64x64xf32>
    %80 = arith.addf %77, %79 : vector<64x64xf32>
    %cst_55 = arith.constant 0.000000e+00 : f32
    %81 = vector.broadcast %cst_55 : f32 to vector<64x64xf32>
    %82 = arith.maximumf %80, %81 : vector<64x64xf32>
    %c0_56 = arith.constant 0 : index
    %c0_57 = arith.constant 0 : index
    %c0_58 = arith.constant 0 : index
    %c0_59 = arith.constant 0 : index
    %83 = vector.load %arg3[%c0_56, %c0_57, %c0_58, %c0_59] : memref<1x8x8x4xf32, #tpu.memory_space<vmem>>, vector<1x8x8x4xf32>
    %84 = vector.shape_cast %83 : vector<1x8x8x4xf32> to vector<8x8x4xf32>
    %85 = vector.shape_cast %84 : vector<8x8x4xf32> to vector<64x4xf32>
    %86 = tpu.transpose %85, [1, 0] : vector<64x4xf32> -> vector<4x64xf32>
    %87 = tpu.transpose %82, [1, 0] : vector<64x64xf32> -> vector<64x64xf32>
    %88 = vector.extract_strided_slice %87 {offsets = [0, 0], sizes = [58, 64], strides = [1, 1]} : vector<64x64xf32> to vector<58x64xf32>
    %89 = tpu.concatenate %88, %86 in 0 : vector<58x64xf32>, vector<4x64xf32> -> vector<62x64xf32>
    %c0_60 = arith.constant 0 : index
    %c0_61 = arith.constant 0 : index
    %c0_62 = arith.constant 0 : index
    %90 = vector.load %arg6[%c0_60, %c0_61, %c0_62] : memref<1x62x64xf32, #tpu.memory_space<vmem>>, vector<1x62x64xf32>
    %91 = vector.shape_cast %90 : vector<1x62x64xf32> to vector<62x64xf32>
    %92 = vector.shape_cast %89 : vector<62x64xf32> to vector<1x62x64xf32>
    tpu.vector_store %arg6[%c0_60, %c0_61, %c0_62], %92 {strides = array<i32>} : memref<1x62x64xf32, #tpu.memory_space<vmem>>, vector<1x62x64xf32>,
    return
  }
  func.func @transform_0(%arg0: i32, %arg1: i32) -> (i32, i32, i32, i32) {
    %c0_i32 = arith.constant 0 : i32
    %c0_i32_0 = arith.constant 0 : i32
    %c0_i32_1 = arith.constant 0 : i32
    %c0_i32_2 = arith.constant 0 : i32
    return %arg0, %c0_i32, %c0_i32_0, %c0_i32_1 : i32, i32, i32, i32
  }
  func.func @transform_1(%arg0: i32, %arg1: i32) -> (i32, i32, i32, i32) {
    %c0_i32 = arith.constant 0 : i32
    %c0_i32_0 = arith.constant 0 : i32
    %c0_i32_1 = arith.constant 0 : i32
    return %arg0, %arg1, %c0_i32, %c0_i32_0 : i32, i32, i32, i32
  }
  func.func @transform_2(%arg0: i32, %arg1: i32) -> (i32, i32, i32) {
    %c0_i32 = arith.constant 0 : i32
    %c0_i32_0 = arith.constant 0 : i32
    %c0_i32_1 = arith.constant 0 : i32
    %c0_i32_2 = arith.constant 0 : i32
    return %c0_i32, %c0_i32_0, %c0_i32_1 : i32, i32, i32
  }
  func.func @transform_3(%arg0: i32, %arg1: i32) -> (i32, i32) {
    %c0_i32 = arith.constant 0 : i32
    %c0_i32_0 = arith.constant 0 : i32
    %c0_i32_1 = arith.constant 0 : i32
    return %c0_i32, %c0_i32_0 : i32, i32
  }
  func.func @transform_4(%arg0: i32, %arg1: i32) -> (i32, i32, i32) {
    %c0_i32 = arith.constant 0 : i32
    %c0_i32_0 = arith.constant 0 : i32
    return %arg0, %c0_i32, %arg1 : i32, i32, i32
  }
}

</mosaic_0001>

<llo_original>
// kernel: stem_forward.2
$region0: #{stem_forward.2}
  #allocation0 [shape = 'u32[]', space=smem, size = 0x4, offset = 0x4, fixed_abs, tag = 'smem constant byte address 0x4 - core index']
  #allocation1 [shape = 'u32[144,128]{1,0:T(1,128)}', space=vmem, size = 0x12000, scoped, tag = 'internal scratch']
  %s0 = inlined_call_operand.vmem [shape: f32[2,9,9,16], index: 0, kind: input, shape index: {}]
  %s1 = inlined_call_operand.vmem [shape: f32[4,16,64], index: 1, kind: input, shape index: {}]
  %s2 = inlined_call_operand.vmem [shape: f32[1,64], index: 2, kind: input, shape index: {}]
  %s3 = inlined_call_operand.vmem [shape: bf16[2,8,8,64], index: 3, kind: output, shape index: {0}]
  %s4 = inlined_call_operand.vmem [shape: f32[2,8,8,4], index: 4, kind: output, shape index: {1}]
  %5 = xla_tuple %s3, %s4
  %s6 = sld [smem:[#allocation0]]
  $region53: #{stem_forward.2} parent=0
    _
  %s8 = ssub.s32 1, %s6
  %s9 = scalar_select 0, %s8, %s6
  loop: start=0, step=1, limit=4
  $region2: #{stem_forward.2} parent=0 // loop_pre_header
    _
  $region3: #{stem_forward.2} parent=0 // loop_header
    %s11 = sphi 0, %s15
    %p12 = scmp.ge.s32.totalorder %s11, 4
    %s18 = sphi 0, %s30
    %s19 = sphi 0, %s26
    %s20 = sphi 0, %s18
    %s21 = sphi 0, %s19
    %s22 = sphi 0, %s20
    %s23 = sphi 0, %s21
    %s33 = sphi 0, %s35
    %s36 = sphi 0, %s33
    %s37 = sphi 0, %s36
    %s53 = sphi 0, %s37
    %s57 = sphi 0, %s57
    %s59 = sphi 0, %s57
    %s60 = sphi 0, %s59
    %s74 = sphi 0, %s60
    %s78 = sphi 0, %s78
    %s80 = sphi 0, %s78
    %s81 = sphi 0, %s80
    %s95 = sphi 0, %s81
    %s103 = sphi 0, %s105
    %s106 = sphi 0, %s103
    %s107 = sphi 0, %s106
    %s123 = sphi 0, %s107
    %s131 = sphi 0, %s133
    %s134 = sphi 0, %s131
    %s135 = sphi 0, %s134
    %s151 = sphi 0, %s135
  $region4: #{stem_forward.2} parent=0 // loop_header_branch
    %14 = sbr.rel (%p12) target = $region8
  $region5: #{stem_forward.2} parent=0 // loop_body
    %s16 = ssub.s32 %s11, 1
    %s17 = ssub.s32 %s11, 2
    %s24 = sadd.s32 1, %s19
    %p25 = scmp.ge.s32.totalorder %s24, 1
    %s26 = scalar_select %p25, 0, %s24
    %s27 = sadd.s32 1, %s18
    %s28 = scalar_select %p25, %s27, %s18
    %p29 = scmp.ge.s32.totalorder %s28, 2
    %s30 = scalar_select %p29, 0, %s28
    %s31 = ssub.s32 %s18, %s30
    %p32 = scmp.eq.s32.totalorder %s31, 0
    %s34 = sadd.s32 %s33, 1
    %s35 = scalar_select %p32, %s33, %s34
    %p38 = pneg %p32
    %p39 = scmp.eq.s32.totalorder %s11, 1
    %p40 = por %p38, %p39
    %p41 = scmp.ne.s32.totalorder %s33, %s36
    %p42 = scmp.eq.s32.totalorder %s11, 0
    %p43 = por %p41, %p42
    %p44 = scmp.ne.s32.totalorder %s33, %s36
    %p45 = scmp.eq.s32.totalorder %s16, 1
    %p46 = por %p44, %p45
    %p47 = scmp.ne.s32.totalorder %s36, %s37
    %p48 = scmp.eq.s32.totalorder %s16, 0
    %p49 = por %p47, %p48
    %p50 = scmp.ne.s32.totalorder %s36, %s37
    %p51 = scmp.eq.s32.totalorder %s17, 1
    %p52 = por %p50, %p51
    %p54 = scmp.ne.s32.totalorder %s37, %s53
    %p55 = scmp.eq.s32.totalorder %s17, 0
    %p56 = por %p54, %p55
    %s58 = sadd.s32 %s57, 1
    %p61 = scmp.eq.s32.totalorder %s11, 1
    %p62 = scmp.ne.s32.totalorder %s57, %s59
    %p63 = scmp.eq.s32.totalorder %s11, 0
    %p64 = por %p62, %p63
    %p65 = scmp.ne.s32.totalorder %s57, %s59
    %p66 = scmp.eq.s32.totalorder %s16, 1
    %p67 = por %p65, %p66
    %p68 = scmp.ne.s32.totalorder %s59, %s60
    %p69 = scmp.eq.s32.totalorder %s16, 0
    %p70 = por %p68, %p69
    %p71 = scmp.ne.s32.totalorder %s59, %s60
    %p72 = scmp.eq.s32.totalorder %s17, 1
    %p73 = por %p71, %p72
    %p75 = scmp.ne.s32.totalorder %s60, %s74
    %p76 = scmp.eq.s32.totalorder %s17, 0
    %p77 = por %p75, %p76
    %s79 = sadd.s32 %s78, 1
    %p82 = scmp.eq.s32.totalorder %s11, 1
    %p83 = scmp.ne.s32.totalorder %s78, %s80
    %p84 = scmp.eq.s32.totalorder %s11, 0
    %p85 = por %p83, %p84
    %p86 = scmp.ne.s32.totalorder %s78, %s80
    %p87 = scmp.eq.s32.totalorder %s16, 1
    %p88 = por %p86, %p87
    %p89 = scmp.ne.s32.totalorder %s80, %s81
    %p90 = scmp.eq.s32.totalorder %s16, 0
    %p91 = por %p89, %p90
    %p92 = scmp.ne.s32.totalorder %s80, %s81
    %p93 = scmp.eq.s32.totalorder %s17, 1
    %p94 = por %p92, %p93
    %p96 = scmp.ne.s32.totalorder %s81, %s95
    %p97 = scmp.eq.s32.totalorder %s17, 0
    %p98 = por %p96, %p97
    %s99 = ssub.s32 %s18, %s30
    %s100 = ssub.s32 %s19, %s26
    %s101 = sor.u32 %s99, %s100
    %p102 = scmp.eq.s32.totalorder %s101, 0
    %s104 = sadd.s32 %s103, 1
    %s105 = scalar_select %p102, %s103, %s104
    %p108 = pneg %p102
    %p109 = scmp.eq.s32.totalorder %s11, 1
    %p110 = por %p108, %p109
    %p111 = scmp.ne.s32.totalorder %s103, %s106
    %p112 = scmp.eq.s32.totalorder %s11, 0
    %p113 = por %p111, %p112
    %p114 = scmp.ne.s32.totalorder %s103, %s106
    %p115 = scmp.eq.s32.totalorder %s16, 1
    %p116 = por %p114, %p115
    %p117 = scmp.ne.s32.totalorder %s106, %s107
    %p118 = scmp.eq.s32.totalorder %s16, 0
    %p119 = por %p117, %p118
    %p120 = scmp.ne.s32.totalorder %s106, %s107
    %p121 = scmp.eq.s32.totalorder %s17, 1
    %p122 = por %p120, %p121
    %p124 = scmp.ne.s32.totalorder %s107, %s123
    %p125 = scmp.eq.s32.totalorder %s17, 0
    %p126 = por %p124, %p125
    %s127 = ssub.s32 %s18, %s30
    %s128 = ssub.s32 %s19, %s26
    %s129 = sor.u32 %s127, %s128
    %p130 = scmp.eq.s32.totalorder %s129, 0
    %s132 = sadd.s32 %s131, 1
    %s133 = scalar_select %p130, %s131, %s132
    %p136 = pneg %p130
    %p137 = scmp.eq.s32.totalorder %s11, 1
    %p138 = por %p136, %p137
    %p139 = scmp.ne.s32.totalorder %s131, %s134
    %p140 = scmp.eq.s32.totalorder %s11, 0
    %p141 = por %p139, %p140
    %p142 = scmp.ne.s32.totalorder %s131, %s134
    %p143 = scmp.eq.s32.totalorder %s16, 1
    %p144 = por %p142, %p143
    %p145 = scmp.ne.s32.totalorder %s134, %s135
    %p146 = scmp.eq.s32.totalorder %s16, 0
    %p147 = por %p145, %p146
    %p148 = scmp.ne.s32.totalorder %s134, %s135
    %p149 = scmp.eq.s32.totalorder %s17, 1
    %p150 = por %p148, %p149
    %p152 = scmp.ne.s32.totalorder %s135, %s151
    %p153 = scmp.eq.s32.totalorder %s17, 0
    %p154 = por %p152, %p153
    %p155 = scmp.le.s32.totalorder 1, %s11
    %p156 = scmp.lt.s32.totalorder %s11, 3
    %p157 = pnand %p155, %p156
    %p158 = pneg %p157
    // Predicated region
    $region9: #{stem_forward.2} parent=5 // pred_check
      _
    $region10: #{stem_forward.2} parent=5 // pred_check_branch
      %160 = sbr.rel (%p157) target = $region12
    $region11: #{stem_forward.2} parent=5 // pred_region
      %s161 = ssub.s32 %s11, 1
      // Predicated region
      $region13: #{stem_forward.2} parent=11 // pred_check
        %p162 = pneg %p70
      $region14: #{stem_forward.2} parent=11 // pred_check_branch
        %164 = sbr.rel (%p162) target = $region16
      $region15: #{stem_forward.2} parent=11 // pred_region
        _
      $region16: #{stem_forward.2} parent=11 // pred_fallthru
        _
      // Predicated region
      $region17: #{stem_forward.2} parent=11 // pred_check
        %p165 = pneg %p91
      $region18: #{stem_forward.2} parent=11 // pred_check_branch
        %167 = sbr.rel (%p165) target = $region20
      $region19: #{stem_forward.2} parent=11 // pred_region
        _
      $region20: #{stem_forward.2} parent=11 // pred_fallthru
        _
    $region12: #{stem_forward.2} parent=5 // pred_fallthru
      _
    %p168 = scmp.lt.s32.totalorder %s11, 2
    // Predicated region
    $region21: #{stem_forward.2} parent=5 // pred_check
      %p169 = pneg %p168
    $region22: #{stem_forward.2} parent=5 // pred_check_branch
      %171 = sbr.rel (%p169) target = $region24
    $region23: #{stem_forward.2} parent=5 // pred_region
      // Predicated region
      $region25: #{stem_forward.2} parent=23 // pred_check
        %p172 = pneg %p43
      $region26: #{stem_forward.2} parent=23 // pred_check_branch
        %174 = sbr.rel (%p172) target = $region28
      $region27: #{stem_forward.2} parent=23 // pred_region
        %p175 = scmp.lt.s32.totalorder %s18, 1
        %s176 = scalar_select %p175, %s18, 1
        %s177 = smul.addr %s176, 18
        %s178 = smul.addr %s177, 8
        %s179 = scalar_lea.vmem %s0, %s178
      $region28: #{stem_forward.2} parent=23 // pred_fallthru
        _
    $region24: #{stem_forward.2} parent=5 // pred_fallthru
      _
    %p180 = scmp.le.s32.totalorder 1, %s11
    %p181 = scmp.lt.s32.totalorder %s11, 3
    %p182 = pnand %p180, %p181
    %p183 = pneg %p182
    // Predicated region
    $region29: #{stem_forward.2} parent=5 // pred_check
      _
    $region30: #{stem_forward.2} parent=5 // pred_check_branch
      %185 = sbr.rel (%p182) target = $region32
    $region31: #{stem_forward.2} parent=5 // pred_region
      %s186 = ssub.s32 %s11, 1
      %p187 = scmp.lt.s32.totalorder %s20, 1
      %s188 = scalar_select %p187, %s20, 1
      %s189 = smul.addr %s188, 18
      %s190 = smul.addr %s189, 8
      %s191 = scalar_lea.vmem %s0, %s190
      %p192 = pneg %p49
      %p193 = pneg %p46
      %p194 = pneg %p70
      %p195 = pneg %p67
      %p196 = pneg %p91
      %p197 = pneg %p88
      %p198 = pneg %p119
      %p199 = pneg %p116
      %s200 = smul.u32 8, %s21
      %p201 = scmp.lt.s32.totalorder %s20, 1
      %s202 = scalar_select %p201, %s20, 1
      %p203 = scmp.lt.s32.totalorder %s200, 7
      %s204 = scalar_select %p203, %s200, 7
      %s205 = smul.addr %s202, 8
      %s206 = sadd.s32 %s204, %s205
      %s207 = smul.addr %s206, 4
      %s208 = scalar_lea.vmem %s3, %s207
      %p209 = pneg %p147
      %p210 = pneg %p144
      %s211 = smul.u32 8, %s21
      %p212 = scmp.lt.s32.totalorder %s20, 1
      %s213 = scalar_select %p212, %s20, 1
      %p214 = scmp.lt.s32.totalorder %s211, 7
      %s215 = scalar_select %p214, %s211, 7
      %s216 = smul.addr %s213, 8
      %s217 = sadd.s32 %s215, %s216
      %s218 = smul.addr %s217, 8
      %s219 = scalar_lea.vmem %s4, %s218
      %p220 = scmp.lt.s32.totalorder %s20, 1
      %s221 = scalar_select %p220, %s20, 1
      %s222 = smul.addr %s221, 18
      %s223 = smul.addr %s222, 8
      %s224 = scalar_lea.vmem %s0, %s223
      %s225 = smul.u32 8, %s21
      %p226 = scmp.lt.s32.totalorder %s20, 1
      %s227 = scalar_select %p226, %s20, 1
      %p228 = scmp.lt.s32.totalorder %s225, 7
      %s229 = scalar_select %p228, %s225, 7
      %s230 = smul.addr %s227, 8
      %s231 = sadd.s32 %s229, %s230
      %s232 = smul.addr %s231, 4
      %s233 = scalar_lea.vmem %s3, %s232
      %s234 = smul.u32 8, %s21
      %s235 = smul.u32 8, %s21
      %p236 = scmp.lt.s32.totalorder %s20, 1
      %s237 = scalar_select %p236, %s20, 1
      %p238 = scmp.lt.s32.totalorder %s235, 7
      %s239 = scalar_select %p238, %s235, 7
      %s240 = smul.addr %s237, 8
      %s241 = sadd.s32 %s239, %s240
      %s242 = smul.addr %s241, 8
      %s243 = scalar_lea.vmem %s4, %s242
      %s244 = smul.u32 8, %s21
      %s245 = smul.u32 %s21, 8
      %s246 = smul.u32 %s245, 16
      %s247 = scalar_lea.vmem %s224, %s246
      %v248 = vld [vmem:[%s247] sm:$0xff]
      %v249 = vld [vmem:[%s247 + $0x10] sm:$0xff]
      %v250 = vld [vmem:[%s247 + $0x20] sm:$0xff]
      %v251 = vld [vmem:[%s247 + $0x30] sm:$0xff]
      %v252 = vld [vmem:[%s247 + $0x40] sm:$0xff]
      %v253 = vld [vmem:[%s247 + $0x50] sm:$0xff]
      %v254 = vld [vmem:[%s247 + $0x60] sm:$0xff]
      %v255 = vld [vmem:[%s247 + $0x70] sm:$0xff]
      %v256 = vld [vmem:[%s1] sm:$0xff]
      %v257 = vld [vmem:[%s1 + $0x8] sm:$0xff]
      %v258 = vld [vmem:[%s247 + $0x1] sm:$0xff]
      %v259 = vld [vmem:[%s247 + $0x11] sm:$0xff]
      %v260 = vld [vmem:[%s247 + $0x21] sm:$0xff]
      %v261 = vld [vmem:[%s247 + $0x31] sm:$0xff]
      %v262 = vld [vmem:[%s247 + $0x41] sm:$0xff]
      %v263 = vld [vmem:[%s247 + $0x51] sm:$0xff]
      %v264 = vld [vmem:[%s247 + $0x61] sm:$0xff]
      %v265 = vld [vmem:[%s247 + $0x71] sm:$0xff]
      %s266 = scalar_lea.vmem %s1, 16
      %v267 = vld [vmem:[%s266] sm:$0xff]
      %v268 = vld [vmem:[%s266 + $0x8] sm:$0xff]
      %vm269 = vcmask 130048
      %v271 = vsel %vm269, %v258, 0
      %v274 = vsel %vm269, %v259, 0
      %v277 = vsel %vm269, %v260, 0
      %v280 = vsel %vm269, %v261, 0
      %v283 = vsel %vm269, %v262, 0
      %v286 = vsel %vm269, %v263, 0
      %v289 = vsel %vm269, %v264, 0
      %v292 = vsel %vm269, %v265, 0
      %294 = vmatprep.subr.mxu0 0.0
      %295 = vmatpush1.msra.mxu0 %v267
      %296 = vmatprep.subr.mxu0 0.0
      %297 = vmatpush1.msra.mxu0 %v268
      %298 = vmatprep.subr.mxu0 0.0
      %299 = vmatpush1.msra.mxu0 0.0
      %300 = vmatprep.subr.mxu0 0.0
      %301 = vmatpush1.msra.mxu0 0.0
      %302 = vmatprep.subr.mxu0 0.0
      %303 = vmatpush1.msra.mxu0 0.0
      %304 = vmatprep.subr.mxu0 0.0
      %305 = vmatpush1.msra.mxu0 0.0
      %306 = vmatprep.subr.mxu0 0.0
      %307 = vmatpush1.msra.mxu0 0.0
      %308 = vmatprep.subr.mxu0 0.0
      %309 = vmatpush1.msra.mxu0 0.0
      %310 = vmatprep.subr.mxu0 0.0
      %311 = vmatpush1.msra.mxu0 0.0
      %312 = vmatprep.subr.mxu0 0.0
      %313 = vmatpush1.msra.mxu0 0.0
      %314 = vmatprep.subr.mxu0 0.0
      %315 = vmatpush1.msra.mxu0 0.0
      %316 = vmatprep.subr.mxu0 0.0
      %317 = vmatpush1.msra.mxu0 0.0
      %318 = vmatprep.subr.mxu0 0.0
      %319 = vmatpush1.msra.mxu0 0.0
      %320 = vmatprep.subr.mxu0 0.0
      %321 = vmatpush1.msra.mxu0 0.0
      %322 = vmatprep.subr.mxu0 0.0
      %323 = vmatpush1.msra.mxu0 0.0
      %324 = vmatprep.subr.mxu0 0.0
      %325 = vmatpush1.msra.mxu0 0.0
      %326 = vmatprep.subr.mxu0 0.0
      %327 = vmatpush1.msra.mxu0 0.0
      %328 = vmatprep.subr.mxu0 0.0
      %329 = vmatpush1.msra.mxu0 0.0
      %330 = vmatprep.subr.mxu0 0.0
      %331 = vmatpush1.msra.mxu0 0.0
      %332 = vmatprep.subr.mxu0 0.0
      %333 = vmatpush1.msra.mxu0 0.0
      %334 = vmatprep.subr.mxu0 0.0
      %335 = vmatpush1.msra.mxu0 0.0
      %336 = vmatprep.subr.mxu0 0.0
      %337 = vmatpush1.msra.mxu0 0.0
      %338 = vmatprep.subr.mxu0 0.0
      %339 = vmatpush1.msra.mxu0 0.0
      %340 = vmatprep.subr.mxu0 0.0
      %341 = vmatpush1.msra.mxu0 0.0
      %342 = vmatprep.subr.mxu0 0.0
      %343 = vmatpush1.msra.mxu0 0.0
      %344 = vmatprep.subr.mxu0 0.0
      %345 = vmatpush1.msra.mxu0 0.0
      %346 = vmatprep.subr.mxu0 0.0
      %347 = vmatpush1.msra.mxu0 0.0
      %348 = vmatprep.subr.mxu0 0.0
      %349 = vmatpush1.msra.mxu0 0.0
      %350 = vmatprep.subr.mxu0 0.0
      %351 = vmatpush1.msra.mxu0 0.0
      %352 = vmatprep.subr.mxu0 0.0
      %353 = vmatpush1.msra.mxu0 0.0
      %354 = vmatprep.subr.mxu0 0.0
      %355 = vmatpush1.msra.mxu0 0.0
      %356 = vmatprep.subr.mxu0 0.0
      %357 = vmatpush1.msra.mxu0 0.0
      %358 = vmatprep.mubr.f32.mxu0 0.0
      %359 = vmatmul.mubr.f32.gmra.mrb[0].mxu0 %v271
      %v360 = vpop.f32.mrb[0].mxu0
      %v361 = vadd.f32 0.0, %v360
      %v362 = vpop.f32.mrb[0].mxu0
      %363 = vmatprep.mubr.f32.mxu0 0.0
      %364 = vmatmul.mubr.f32.gmra.mrb[0].mxu0 %v274
      %v365 = vpop.f32.mrb[0].mxu0
      %v366 = vadd.f32 0.0, %v365
      %v367 = vpop.f32.mrb[0].mxu0
      %368 = vmatprep.mubr.f32.mxu0 0.0
      %369 = vmatmul.mubr.f32.gmra.mrb[0].mxu0 %v277
      %v370 = vpop.f32.mrb[0].mxu0
      %v371 = vadd.f32 0.0, %v370
      %v372 = vpop.f32.mrb[0].mxu0
      %373 = vmatprep.mubr.f32.mxu0 0.0
      %374 = vmatmul.mubr.f32.gmra.mrb[0].mxu0 %v280
      %v375 = vpop.f32.mrb[0].mxu0
      %v376 = vadd.f32 0.0, %v375
      %v377 = vpop.f32.mrb[0].mxu0
      %378 = vmatprep.mubr.f32.mxu0 0.0
      %379 = vmatmul.mubr.f32.gmra.mrb[0].mxu0 %v283
      %v380 = vpop.f32.mrb[0].mxu0
      %v381 = vadd.f32 0.0, %v380
      %v382 = vpop.f32.mrb[0].mxu0
      %383 = vmatprep.mubr.f32.mxu0 0.0
      %384 = vmatmul.mubr.f32.gmra.mrb[0].mxu0 %v286
      %v385 = vpop.f32.mrb[0].mxu0
      %v386 = vadd.f32 0.0, %v385
      %v387 = vpop.f32.mrb[0].mxu0
      %388 = vmatprep.mubr.f32.mxu0 0.0
      %389 = vmatmul.mubr.f32.gmra.mrb[0].mxu0 %v289
      %v390 = vpop.f32.mrb[0].mxu0
      %v391 = vadd.f32 0.0, %v390
      %v392 = vpop.f32.mrb[0].mxu0
      %393 = vmatprep.mubr.f32.mxu0 0.0
      %394 = vmatmul.mubr.f32.gmra.mrb[0].mxu0 %v292
      %v395 = vpop.f32.mrb[0].mxu0
      %v396 = vadd.f32 0.0, %v395
      %v397 = vpop.f32.mrb[0].mxu0
      %398 = vdwg.mxu0
      %v400 = vsel %vm269, %v248, 0
      %v403 = vsel %vm269, %v249, 0
      %v406 = vsel %vm269, %v250, 0
      %v409 = vsel %vm269, %v251, 0
      %v412 = vsel %vm269, %v252, 0
      %v415 = vsel %vm269, %v253, 0
      %v418 = vsel %vm269, %v254, 0
      %v421 = vsel %vm269, %v255, 0
      %423 = vmatprep.subr.mxu0 0.0
      %424 = vmatpush1.msra.mxu0 %v256
      %425 = vmatprep.subr.mxu0 0.0
      %426 = vmatpush1.msra.mxu0 %v257
      %427 = vmatprep.subr.mxu0 0.0
      %428 = vmatpush1.msra.mxu0 0.0
      %429 = vmatprep.subr.mxu0 0.0
      %430 = vmatpush1.msra.mxu0 0.0
      %431 = vmatprep.subr.mxu0 0.0
      %432 = vmatpush1.msra.mxu0 0.0
      %433 = vmatprep.subr.mxu0 0.0
      %434 = vmatpush1.msra.mxu0 0.0
      %435 = vmatprep.subr.mxu0 0.0
      %436 = vmatpush1.msra.mxu0 0.0
      %437 = vmatprep.subr.mxu0 0.0
      %438 = vmatpush1.msra.mxu0 0.0
      %439 = vmatprep.subr.mxu0 0.0
      %440 = vmatpush1.msra.mxu0 0.0
      %441 = vmatprep.subr.mxu0 0.0
      %442 = vmatpush1.msra.mxu0 0.0
      %443 = vmatprep.subr.mxu0 0.0
      %444 = vmatpush1.msra.mxu0 0.0
      %445 = vmatprep.subr.mxu0 0.0
      %446 = vmatpush1.msra.mxu0 0.0
      %447 = vmatprep.subr.mxu0 0.0
      %448 = vmatpush1.msra.mxu0 0.0
      %449 = vmatprep.subr.mxu0 0.0
      %450 = vmatpush1.msra.mxu0 0.0
      %451 = vmatprep.subr.mxu0 0.0
      %452 = vmatpush1.msra.mxu0 0.0
      %453 = vmatprep.subr.mxu0 0.0
      %454 = vmatpush1.msra.mxu0 0.0
      %455 = vmatprep.subr.mxu0 0.0
      %456 = vmatpush1.msra.mxu0 0.0
      %457 = vmatprep.subr.mxu0 0.0
      %458 = vmatpush1.msra.mxu0 0.0
      %459 = vmatprep.subr.mxu0 0.0
      %460 = vmatpush1.msra.mxu0 0.0
      %461 = vmatprep.subr.mxu0 0.0
      %462 = vmatpush1.msra.mxu0 0.0
      %463 = vmatprep.subr.mxu0 0.0
      %464 = vmatpush1.msra.mxu0 0.0
      %465 = vmatprep.subr.mxu0 0.0
      %466 = vmatpush1.msra.mxu0 0.0
      %467 = vmatprep.subr.mxu0 0.0
      %468 = vmatpush1.msra.mxu0 0.0
      %469 = vmatprep.subr.mxu0 0.0
      %470 = vmatpush1.msra.mxu0 0.0
      %471 = vmatprep.subr.mxu0 0.0
      %472 = vmatpush1.msra.mxu0 0.0
      %473 = vmatprep.subr.mxu0 0.0
      %474 = vmatpush1.msra.mxu0 0.0
      %475 = vmatprep.subr.mxu0 0.0
      %476 = vmatpush1.msra.mxu0 0.0
      %477 = vmatprep.subr.mxu0 0.0
      %478 = vmatpush1.msra.mxu0 0.0
      %479 = vmatprep.subr.mxu0 0.0
      %480 = vmatpush1.msra.mxu0 0.0
      %481 = vmatprep.subr.mxu0 0.0
      %482 = vmatpush1.msra.mxu0 0.0
      %483 = vmatprep.subr.mxu0 0.0
      %484 = vmatpush1.msra.mxu0 0.0
      %485 = vmatprep.subr.mxu0 0.0
      %486 = vmatpush1.msra.mxu0 0.0
      %487 = vmatprep.mubr.f32.mxu0 0.0
      %488 = vmatmul.mubr.f32.gmra.mrb[0].mxu0 %v400
      %v489 = vpop.f32.mrb[0].mxu0
      %v490 = vadd.f32 %v361, %v489
      %v491 = vpop.f32.mrb[0].mxu0
      %492 = vmatprep.mubr.f32.mxu0 0.0
      %493 = vmatmul.mubr.f32.gmra.mrb[0].mxu0 %v403
      %v494 = vpop.f32.mrb[0].mxu0
      %v495 = vadd.f32 %v366, %v494
      %v496 = vpop.f32.mrb[0].mxu0
      %497 = vmatprep.mubr.f32.mxu0 0.0
      %498 = vmatmul.mubr.f32.gmra.mrb[0].mxu0 %v406
      %v499 = vpop.f32.mrb[0].mxu0
      %v500 = vadd.f32 %v371, %v499
      %v501 = vpop.f32.mrb[0].mxu0
      %502 = vmatprep.mubr.f32.mxu0 0.0
      %503 = vmatmul.mubr.f32.gmra.mrb[0].mxu0 %v409
      %v504 = vpop.f32.mrb[0].mxu0
      %v505 = vadd.f32 %v376, %v504
      %v506 = vpop.f32.mrb[0].mxu0
      %507 = vmatprep.mubr.f32.mxu0 0.0
      %508 = vmatmul.mubr.f32.gmra.mrb[0].mxu0 %v412
      %v509 = vpop.f32.mrb[0].mxu0
      %v510 = vadd.f32 %v381, %v509
      %v511 = vpop.f32.mrb[0].mxu0
      %512 = vmatprep.mubr.f32.mxu0 0.0
      %513 = vmatmul.mubr.f32.gmra.mrb[0].mxu0 %v415
      %v514 = vpop.f32.mrb[0].mxu0
      %v515 = vadd.f32 %v386, %v514
      %v516 = vpop.f32.mrb[0].mxu0
      %517 = vmatprep.mubr.f32.mxu0 0.0
      %518 = vmatmul.mubr.f32.gmra.mrb[0].mxu0 %v418
      %v519 = vpop.f32.mrb[0].mxu0
      %v520 = vadd.f32 %v391, %v519
      %v521 = vpop.f32.mrb[0].mxu0
      %522 = vmatprep.mubr.f32.mxu0 0.0
      %523 = vmatmul.mubr.f32.gmra.mrb[0].mxu0 %v421
      %v524 = vpop.f32.mrb[0].mxu0
      %v525 = vadd.f32 %v396, %v524
      %v526 = vpop.f32.mrb[0].mxu0
      %527 = vdwg.mxu0
      %s528 = sadd.s32 %s245, 1
      %s529 = smul.u32 %s528, 16
      %s530 = scalar_lea.vmem %s224, %s529
      %v531 = vld [vmem:[%s530] sm:$0xff]
      %v532 = vld [vmem:[%s530 + $0x10] sm:$0xff]
      %v533 = vld [vmem:[%s530 + $0x20] sm:$0xff]
      %v534 = vld [vmem:[%s530 + $0x30] sm:$0xff]
      %v535 = vld [vmem:[%s530 + $0x40] sm:$0xff]
      %v536 = vld [vmem:[%s530 + $0x50] sm:$0xff]
      %v537 = vld [vmem:[%s530 + $0x60] sm:$0xff]
      %v538 = vld [vmem:[%s530 + $0x70] sm:$0xff]
      %s539 = scalar_lea.vmem %s1, 32
      %v540 = vld [vmem:[%s539] sm:$0xff]
      %v541 = vld [vmem:[%s539 + $0x8] sm:$0xff]
      %v543 = vsel %vm269, %v531, 0
      %v546 = vsel %vm269, %v532, 0
      %v549 = vsel %vm269, %v533, 0
      %v552 = vsel %vm269, %v534, 0
      %v555 = vsel %vm269, %v535, 0
      %v558 = vsel %vm269, %v536, 0
      %v561 = vsel %vm269, %v537, 0
      %v564 = vsel %vm269, %v538, 0
      %566 = vmatprep.subr.mxu0 0.0
      %567 = vmatpush1.msra.mxu0 %v540
      %568 = vmatprep.subr.mxu0 0.0
      %569 = vmatpush1.msra.mxu0 %v541
      %570 = vmatprep.subr.mxu0 0.0
      %571 = vmatpush1.msra.mxu0 0.0
      %572 = vmatprep.subr.mxu0 0.0
      %573 = vmatpush1.msra.mxu0 0.0
      %574 = vmatprep.subr.mxu0 0.0
      %575 = vmatpush1.msra.mxu0 0.0
      %576 = vmatprep.subr.mxu0 0.0
      %577 = vmatpush1.msra.mxu0 0.0
      %578 = vmatprep.subr.mxu0 0.0
      %579 = vmatpush1.msra.mxu0 0.0
      %580 = vmatprep.subr.mxu0 0.0
      %581 = vmatpush1.msra.mxu0 0.0
      %582 = vmatprep.subr.mxu0 0.0
      %583 = vmatpush1.msra.mxu0 0.0
      %584 = vmatprep.subr.mxu0 0.0
      %585 = vmatpush1.msra.mxu0 0.0
      %586 = vmatprep.subr.mxu0 0.0
      %587 = vmatpush1.msra.mxu0 0.0
      %588 = vmatprep.subr.mxu0 0.0
      %589 = vmatpush1.msra.mxu0 0.0
      %590 = vmatprep.subr.mxu0 0.0
      %591 = vmatpush1.msra.mxu0 0.0
      %592 = vmatprep.subr.mxu0 0.0
      %593 = vmatpush1.msra.mxu0 0.0
      %594 = vmatprep.subr.mxu0 0.0
      %595 = vmatpush1.msra.mxu0 0.0
      %596 = vmatprep.subr.mxu0 0.0
      %597 = vmatpush1.msra.mxu0 0.0
      %598 = vmatprep.subr.mxu0 0.0
      %599 = vmatpush1.msra.mxu0 0.0
      %600 = vmatprep.subr.mxu0 0.0
      %601 = vmatpush1.msra.mxu0 0.0
      %602 = vmatprep.subr.mxu0 0.0
      %603 = vmatpush1.msra.mxu0 0.0
      %604 = vmatprep.subr.mxu0 0.0
      %605 = vmatpush1.msra.mxu0 0.0
      %606 = vmatprep.subr.mxu0 0.0
      %607 = vmatpush1.msra.mxu0 0.0
      %608 = vmatprep.subr.mxu0 0.0
      %609 = vmatpush1.msra.mxu0 0.0
      %610 = vmatprep.subr.mxu0 0.0
      %611 = vmatpush1.msra.mxu0 0.0
      %612 = vmatprep.subr.mxu0 0.0
      %613 = vmatpush1.msra.mxu0 0.0
      %614 = vmatprep.subr.mxu0 0.0
      %615 = vmatpush1.msra.mxu0 0.0
      %616 = vmatprep.subr.mxu0 0.0
      %617 = vmatpush1.msra.mxu0 0.0
      %618 = vmatprep.subr.mxu0 0.0
      %619 = vmatpush1.msra.mxu0 0.0
      %620 = vmatprep.subr.mxu0 0.0
      %621 = vmatpush1.msra.mxu0 0.0
      %622 = vmatprep.subr.mxu0 0.0
      %623 = vmatpush1.msra.mxu0 0.0
      %624 = vmatprep.subr.mxu0 0.0
      %625 = vmatpush1.msra.mxu0 0.0
      %626 = vmatprep.subr.mxu0 0.0
      %627 = vmatpush1.msra.mxu0 0.0
      %628 = vmatprep.subr.mxu0 0.0
      %629 = vmatpush1.msra.mxu0 0.0
      %630 = vmatprep.mubr.f32.mxu0 0.0
      %631 = vmatmul.mubr.f32.gmra.mrb[0].mxu0 %v543
      %v632 = vpop.f32.mrb[0].mxu0
      %v633 = vadd.f32 0.0, %v632
      %v634 = vpop.f32.mrb[0].mxu0
      %635 = vmatprep.mubr.f32.mxu0 0.0
      %636 = vmatmul.mubr.f32.gmra.mrb[0].mxu0 %v546
      %v637 = vpop.f32.mrb[0].mxu0
      %v638 = vadd.f32 0.0, %v637
      %v639 = vpop.f32.mrb[0].mxu0
      %640 = vmatprep.mubr.f32.mxu0 0.0
      %641 = vmatmul.mubr.f32.gmra.mrb[0].mxu0 %v549
      %v642 = vpop.f32.mrb[0].mxu0
      %v643 = vadd.f32 0.0, %v642
      %v644 = vpop.f32.mrb[0].mxu0
      %645 = vmatprep.mubr.f32.mxu0 0.0
      %646 = vmatmul.mubr.f32.gmra.mrb[0].mxu0 %v552
      %v647 = vpop.f32.mrb[0].mxu0
      %v648 = vadd.f32 0.0, %v647
      %v649 = vpop.f32.mrb[0].mxu0
      %650 = vmatprep.mubr.f32.mxu0 0.0
      %651 = vmatmul.mubr.f32.gmra.mrb[0].mxu0 %v555
      %v652 = vpop.f32.mrb[0].mxu0
      %v653 = vadd.f32 0.0, %v652
      %v654 = vpop.f32.mrb[0].mxu0
      %655 = vmatprep.mubr.f32.mxu0 0.0
      %656 = vmatmul.mubr.f32.gmra.mrb[0].mxu0 %v558
      %v657 = vpop.f32.mrb[0].mxu0
      %v658 = vadd.f32 0.0, %v657
      %v659 = vpop.f32.mrb[0].mxu0
      %660 = vmatprep.mubr.f32.mxu0 0.0
      %661 = vmatmul.mubr.f32.gmra.mrb[0].mxu0 %v561
      %v662 = vpop.f32.mrb[0].mxu0
      %v663 = vadd.f32 0.0, %v662
      %v664 = vpop.f32.mrb[0].mxu0
      %665 = vmatprep.mubr.f32.mxu0 0.0
      %666 = vmatmul.mubr.f32.gmra.mrb[0].mxu0 %v564
      %v667 = vpop.f32.mrb[0].mxu0
      %v668 = vadd.f32 0.0, %v667
      %v669 = vpop.f32.mrb[0].mxu0
      %670 = vdwg.mxu0
      %v671 = vadd.f32 %v490, %v633
      %v672 = vadd.f32 %v495, %v638
      %v673 = vadd.f32 %v500, %v643
      %v674 = vadd.f32 %v505, %v648
      %v675 = vadd.f32 %v510, %v653
      %v676 = vadd.f32 %v515, %v658
      %v677 = vadd.f32 %v520, %v663
      %v678 = vadd.f32 %v525, %v668
      %v679 = vld [vmem:[%s530 + $0x1] sm:$0xff]
      %v680 = vld [vmem:[%s530 + $0x11] sm:$0xff]
      %v681 = vld [vmem:[%s530 + $0x21] sm:$0xff]
      %v682 = vld [vmem:[%s530 + $0x31] sm:$0xff]
      %v683 = vld [vmem:[%s530 + $0x41] sm:$0xff]
      %v684 = vld [vmem:[%s530 + $0x51] sm:$0xff]
      %v685 = vld [vmem:[%s530 + $0x61] sm:$0xff]
      %v686 = vld [vmem:[%s530 + $0x71] sm:$0xff]
      %s687 = scalar_lea.vmem %s1, 48
      %v688 = vld [vmem:[%s687] sm:$0xff]
      %v689 = vld [vmem:[%s687 + $0x8] sm:$0xff]
      %v691 = vsel %vm269, %v679, 0
      %v694 = vsel %vm269, %v680, 0
      %v697 = vsel %vm269, %v681, 0
      %v700 = vsel %vm269, %v682, 0
      %v703 = vsel %vm269, %v683, 0
      %v706 = vsel %vm269, %v684, 0
      %v709 = vsel %vm269, %v685, 0
      %v712 = vsel %vm269, %v686, 0
      %714 = vmatprep.subr.mxu0 0.0
      %715 = vmatpush1.msra.mxu0 %v688
      %716 = vmatprep.subr.mxu0 0.0
      %717 = vmatpush1.msra.mxu0 %v689
      %718 = vmatprep.subr.mxu0 0.0
      %719 = vmatpush1.msra.mxu0 0.0
      %720 = vmatprep.subr.mxu0 0.0
      %721 = vmatpush1.msra.mxu0 0.0
      %722 = vmatprep.subr.mxu0 0.0
      %723 = vmatpush1.msra.mxu0 0.0
      %724 = vmatprep.subr.mxu0 0.0
      %725 = vmatpush1.msra.mxu0 0.0
      %726 = vmatprep.subr.mxu0 0.0
      %727 = vmatpush1.msra.mxu0 0.0
      %728 = vmatprep.subr.mxu0 0.0
      %729 = vmatpush1.msra.mxu0 0.0
      %730 = vmatprep.subr.mxu0 0.0
      %731 = vmatpush1.msra.mxu0 0.0
      %732 = vmatprep.subr.mxu0 0.0
      %733 = vmatpush1.msra.mxu0 0.0
      %734 = vmatprep.subr.mxu0 0.0
      %735 = vmatpush1.msra.mxu0 0.0
      %736 = vmatprep.subr.mxu0 0.0
      %737 = vmatpush1.msra.mxu0 0.0
      %738 = vmatprep.subr.mxu0 0.0
      %739 = vmatpush1.msra.mxu0 0.0
      %740 = vmatprep.subr.mxu0 0.0
      %741 = vmatpush1.msra.mxu0 0.0
      %742 = vmatprep.subr.mxu0 0.0
      %743 = vmatpush1.msra.mxu0 0.0
      %744 = vmatprep.subr.mxu0 0.0
      %745 = vmatpush1.msra.mxu0 0.0
      %746 = vmatprep.subr.mxu0 0.0
      %747 = vmatpush1.msra.mxu0 0.0
      %748 = vmatprep.subr.mxu0 0.0
      %749 = vmatpush1.msra.mxu0 0.0
      %750 = vmatprep.subr.mxu0 0.0
      %751 = vmatpush1.msra.mxu0 0.0
      %752 = vmatprep.subr.mxu0 0.0
      %753 = vmatpush1.msra.mxu0 0.0
      %754 = vmatprep.subr.mxu0 0.0
      %755 = vmatpush1.msra.mxu0 0.0
      %756 = vmatprep.subr.mxu0 0.0
      %757 = vmatpush1.msra.mxu0 0.0
      %758 = vmatprep.subr.mxu0 0.0
      %759 = vmatpush1.msra.mxu0 0.0
      %760 = vmatprep.subr.mxu0 0.0
      %761 = vmatpush1.msra.mxu0 0.0
      %762 = vmatprep.subr.mxu0 0.0
      %763 = vmatpush1.msra.mxu0 0.0
      %764 = vmatprep.subr.mxu0 0.0
      %765 = vmatpush1.msra.mxu0 0.0
      %766 = vmatprep.subr.mxu0 0.0
      %767 = vmatpush1.msra.mxu0 0.0
      %768 = vmatprep.subr.mxu0 0.0
      %769 = vmatpush1.msra.mxu0 0.0
      %770 = vmatprep.subr.mxu0 0.0
      %771 = vmatpush1.msra.mxu0 0.0
      %772 = vmatprep.subr.mxu0 0.0
      %773 = vmatpush1.msra.mxu0 0.0
      %774 = vmatprep.subr.mxu0 0.0
      %775 = vmatpush1.msra.mxu0 0.0
      %776 = vmatprep.subr.mxu0 0.0
      %777 = vmatpush1.msra.mxu0 0.0
      %778 = vmatprep.mubr.f32.mxu0 0.0
      %779 = vmatmul.mubr.f32.gmra.mrb[0].mxu0 %v691
      %v780 = vpop.f32.mrb[0].mxu0
      %v781 = vadd.f32 0.0, %v780
      %v782 = vpop.f32.mrb[0].mxu0
      %783 = vmatprep.mubr.f32.mxu0 0.0
      %784 = vmatmul.mubr.f32.gmra.mrb[0].mxu0 %v694
      %v785 = vpop.f32.mrb[0].mxu0
      %v786 = vadd.f32 0.0, %v785
      %v787 = vpop.f32.mrb[0].mxu0
      %788 = vmatprep.mubr.f32.mxu0 0.0
      %789 = vmatmul.mubr.f32.gmra.mrb[0].mxu0 %v697
      %v790 = vpop.f32.mrb[0].mxu0
      %v791 = vadd.f32 0.0, %v790
      %v792 = vpop.f32.mrb[0].mxu0
      %793 = vmatprep.mubr.f32.mxu0 0.0
      %794 = vmatmul.mubr.f32.gmra.mrb[0].mxu0 %v700
      %v795 = vpop.f32.mrb[0].mxu0
      %v796 = vadd.f32 0.0, %v795
      %v797 = vpop.f32.mrb[0].mxu0
      %798 = vmatprep.mubr.f32.mxu0 0.0
      %799 = vmatmul.mubr.f32.gmra.mrb[0].mxu0 %v703
      %v800 = vpop.f32.mrb[0].mxu0
      %v801 = vadd.f32 0.0, %v800
      %v802 = vpop.f32.mrb[0].mxu0
      %803 = vmatprep.mubr.f32.mxu0 0.0
      %804 = vmatmul.mubr.f32.gmra.mrb[0].mxu0 %v706
      %v805 = vpop.f32.mrb[0].mxu0
      %v806 = vadd.f32 0.0, %v805
      %v807 = vpop.f32.mrb[0].mxu0
      %808 = vmatprep.mubr.f32.mxu0 0.0
      %809 = vmatmul.mubr.f32.gmra.mrb[0].mxu0 %v709
      %v810 = vpop.f32.mrb[0].mxu0
      %v811 = vadd.f32 0.0, %v810
      %v812 = vpop.f32.mrb[0].mxu0
      %813 = vmatprep.mubr.f32.mxu0 0.0
      %814 = vmatmul.mubr.f32.gmra.mrb[0].mxu0 %v712
      %v815 = vpop.f32.mrb[0].mxu0
      %v816 = vadd.f32 0.0, %v815
      %v817 = vpop.f32.mrb[0].mxu0
      %818 = vdwg.mxu0
      %v819 = vadd.f32 %v671, %v781
      %v820 = vadd.f32 %v672, %v786
      %v821 = vadd.f32 %v673, %v791
      %v822 = vadd.f32 %v674, %v796
      %v823 = vadd.f32 %v675, %v801
      %v824 = vadd.f32 %v676, %v806
      %v825 = vadd.f32 %v677, %v811
      %v826 = vadd.f32 %v678, %v816
      %v827 = vld [vmem:[%s2] sm:$0x1]
      %v829 = vlaneseq
      %v830 = vshrl.u32 %v829, 7
      %v831 = vsub.s32 0, %v830
      %v832 = vrot.slane %v827, %v831
      %v834 = vadd.f32 %v819, %v832
      %v835 = vadd.f32 %v820, %v832
      %v836 = vadd.f32 %v821, %v832
      %v837 = vadd.f32 %v822, %v832
      %v838 = vadd.f32 %v823, %v832
      %v839 = vadd.f32 %v824, %v832
      %v840 = vadd.f32 %v825, %v832
      %v841 = vadd.f32 %v826, %v832
      %v842 = vmax.f32 %v834, 0.0
      %v843 = vmax.f32 %v835, 0.0
      %v844 = vmax.f32 %v836, 0.0
      %v845 = vmax.f32 %v837, 0.0
      %v846 = vmax.f32 %v838, 0.0
      %v847 = vmax.f32 %v839, 0.0
      %v848 = vmax.f32 %v840, 0.0
      %v849 = vmax.f32 %v841, 0.0
      %v850 = vpack.c.bf16 %v842, %v842
      %v851 = vpack.c.bf16 %v843, %v843
      %v852 = vpack.c.bf16 %v844, %v844
      %v853 = vpack.c.bf16 %v845, %v845
      %v854 = vpack.c.bf16 %v846, %v846
      %v855 = vpack.c.bf16 %v847, %v847
      %v856 = vpack.c.bf16 %v848, %v848
      %v857 = vpack.c.bf16 %v849, %v849
      %vm858 = vcmask 519168
      %859 = vst.msk [vmem:[%s233] sm:$0xf] %vm858, %v850
      %860 = vst.msk [vmem:[%s233 + $0x4] sm:$0xf] %vm858, %v851
      %861 = vst.msk [vmem:[%s233 + $0x8] sm:$0xf] %vm858, %v852
      %862 = vst.msk [vmem:[%s233 + $0xc] sm:$0xf] %vm858, %v853
      %863 = vst.msk [vmem:[%s233 + $0x10] sm:$0xf] %vm858, %v854
      %864 = vst.msk [vmem:[%s233 + $0x14] sm:$0xf] %vm858, %v855
      %865 = vst.msk [vmem:[%s233 + $0x18] sm:$0xf] %vm858, %v856
      %866 = vst.msk [vmem:[%s233 + $0x1c] sm:$0xf] %vm858, %v857
      %v867 = vld [vmem:[%s247] sm:$0xff]
      %v868 = vld [vmem:[%s247 + $0x10] sm:$0xff]
      %v869 = vld [vmem:[%s247 + $0x20] sm:$0xff]
      %v870 = vld [vmem:[%s247 + $0x30] sm:$0xff]
      %v871 = vld [vmem:[%s247 + $0x40] sm:$0xff]
      %v872 = vld [vmem:[%s247 + $0x50] sm:$0xff]
      %v873 = vld [vmem:[%s247 + $0x60] sm:$0xff]
      %v874 = vld [vmem:[%s247 + $0x70] sm:$0xff]
      %v875 = vld [vmem:[%s247 + $0x1] sm:$0xff]
      %v876 = vld [vmem:[%s247 + $0x11] sm:$0xff]
      %v877 = vld [vmem:[%s247 + $0x21] sm:$0xff]
      %v878 = vld [vmem:[%s247 + $0x31] sm:$0xff]
      %v879 = vld [vmem:[%s247 + $0x41] sm:$0xff]
      %v880 = vld [vmem:[%s247 + $0x51] sm:$0xff]
      %v881 = vld [vmem:[%s247 + $0x61] sm:$0xff]
      %v882 = vld [vmem:[%s247 + $0x71] sm:$0xff]
      %v883 = vld [vmem:[%s530] sm:$0xff]
      %v884 = vld [vmem:[%s530 + $0x10] sm:$0xff]
      %v885 = vld [vmem:[%s530 + $0x20] sm:$0xff]
      %v886 = vld [vmem:[%s530 + $0x30] sm:$0xff]
      %v887 = vld [vmem:[%s530 + $0x40] sm:$0xff]
      %v888 = vld [vmem:[%s530 + $0x50] sm:$0xff]
      %v889 = vld [vmem:[%s530 + $0x60] sm:$0xff]
      %v890 = vld [vmem:[%s530 + $0x70] sm:$0xff]
      %v891 = vld [vmem:[%s530 + $0x1] sm:$0xff]
      %v892 = vld [vmem:[%s530 + $0x11] sm:$0xff]
      %v893 = vld [vmem:[%s530 + $0x21] sm:$0xff]
      %v894 = vld [vmem:[%s530 + $0x31] sm:$0xff]
      %v895 = vld [vmem:[%s530 + $0x41] sm:$0xff]
      %v896 = vld [vmem:[%s530 + $0x51] sm:$0xff]
      %v897 = vld [vmem:[%s530 + $0x61] sm:$0xff]
      %v898 = vld [vmem:[%s530 + $0x71] sm:$0xff]
      %907 = vrot.lane.b32.xlu0 %v875, 4
      %v908 = vpop.permute.xlu0 %907
      %909 = vrot.lane.b32.xlu0 %v876, 4
      %v910 = vpop.permute.xlu0 %909
      %911 = vrot.lane.b32.xlu0 %v877, 4
      %v912 = vpop.permute.xlu0 %911
      %913 = vrot.lane.b32.xlu0 %v878, 4
      %v914 = vpop.permute.xlu0 %913
      %915 = vrot.lane.b32.xlu0 %v879, 4
      %v916 = vpop.permute.xlu0 %915
      %917 = vrot.lane.b32.xlu0 %v880, 4
      %v918 = vpop.permute.xlu0 %917
      %919 = vrot.lane.b32.xlu0 %v881, 4
      %v920 = vpop.permute.xlu0 %919
      %921 = vrot.lane.b32.xlu0 %v882, 4
      %v922 = vpop.permute.xlu0 %921
      %v931 = vmax.f32 %v867, %v908
      %v932 = vmax.f32 %v868, %v910
      %v933 = vmax.f32 %v869, %v912
      %v934 = vmax.f32 %v870, %v914
      %v935 = vmax.f32 %v871, %v916
      %v936 = vmax.f32 %v872, %v918
      %v937 = vmax.f32 %v873, %v920
      %v938 = vmax.f32 %v874, %v922
      %947 = vrot.lane.b32.xlu0 %v891, 4
      %v948 = vpop.permute.xlu0 %947
      %949 = vrot.lane.b32.xlu0 %v892, 4
      %v950 = vpop.permute.xlu0 %949
      %951 = vrot.lane.b32.xlu0 %v893, 4
      %v952 = vpop.permute.xlu0 %951
      %953 = vrot.lane.b32.xlu0 %v894, 4
      %v954 = vpop.permute.xlu0 %953
      %955 = vrot.lane.b32.xlu0 %v895, 4
      %v956 = vpop.permute.xlu0 %955
      %957 = vrot.lane.b32.xlu0 %v896, 4
      %v958 = vpop.permute.xlu0 %957
      %959 = vrot.lane.b32.xlu0 %v897, 4
      %v960 = vpop.permute.xlu0 %959
      %961 = vrot.lane.b32.xlu0 %v898, 4
      %v962 = vpop.permute.xlu0 %961
      %v971 = vmax.f32 %v883, %v948
      %v972 = vmax.f32 %v884, %v950
      %v973 = vmax.f32 %v885, %v952
      %v974 = vmax.f32 %v886, %v954
      %v975 = vmax.f32 %v887, %v956
      %v976 = vmax.f32 %v888, %v958
      %v977 = vmax.f32 %v889, %v960
      %v978 = vmax.f32 %v890, %v962
      %987 = vrot.lane.b32.xlu0 %v971, 8
      %v988 = vpop.permute.xlu0 %987
      %989 = vrot.lane.b32.xlu0 %v972, 8
      %v990 = vpop.permute.xlu0 %989
      %991 = vrot.lane.b32.xlu0 %v973, 8
      %v992 = vpop.permute.xlu0 %991
      %993 = vrot.lane.b32.xlu0 %v974, 8
      %v994 = vpop.permute.xlu0 %993
      %995 = vrot.lane.b32.xlu0 %v975, 8
      %v996 = vpop.permute.xlu0 %995
      %997 = vrot.lane.b32.xlu0 %v976, 8
      %v998 = vpop.permute.xlu0 %997
      %999 = vrot.lane.b32.xlu0 %v977, 8
      %v1000 = vpop.permute.xlu0 %999
      %1001 = vrot.lane.b32.xlu0 %v978, 8
      %v1002 = vpop.permute.xlu0 %1001
      %v1011 = vmax.f32 %v931, %v988
      %v1012 = vmax.f32 %v932, %v990
      %v1013 = vmax.f32 %v933, %v992
      %v1014 = vmax.f32 %v934, %v994
      %v1015 = vmax.f32 %v935, %v996
      %v1016 = vmax.f32 %v936, %v998
      %v1017 = vmax.f32 %v937, %v1000
      %v1018 = vmax.f32 %v938, %v1002
      %1027 = vrot.lane.b32.xlu0 %v1011, 116
      %v1028 = vpop.permute.xlu0 %1027
      %1029 = vrot.lane.b32.xlu0 %v1012, 116
      %v1030 = vpop.permute.xlu0 %1029
      %1031 = vrot.lane.b32.xlu0 %v1013, 116
      %v1032 = vpop.permute.xlu0 %1031
      %1033 = vrot.lane.b32.xlu0 %v1014, 116
      %v1034 = vpop.permute.xlu0 %1033
      %1035 = vrot.lane.b32.xlu0 %v1015, 116
      %v1036 = vpop.permute.xlu0 %1035
      %1037 = vrot.lane.b32.xlu0 %v1016, 116
      %v1038 = vpop.permute.xlu0 %1037
      %1039 = vrot.lane.b32.xlu0 %v1017, 116
      %v1040 = vpop.permute.xlu0 %1039
      %1041 = vrot.lane.b32.xlu0 %v1018, 116
      %v1042 = vpop.permute.xlu0 %1041
      %vm1051 = vcmask 31744
      %1052 = vst.msk [vmem:[%s243] sm:$0xff] %vm1051, %v1028
      %1053 = vst.msk [vmem:[%s243 + $0x8] sm:$0xff] %vm1051, %v1030
      %1054 = vst.msk [vmem:[%s243 + $0x10] sm:$0xff] %vm1051, %v1032
      %1055 = vst.msk [vmem:[%s243 + $0x18] sm:$0xff] %vm1051, %v1034
      %1056 = vst.msk [vmem:[%s243 + $0x20] sm:$0xff] %vm1051, %v1036
      %1057 = vst.msk [vmem:[%s243 + $0x28] sm:$0xff] %vm1051, %v1038
      %1058 = vst.msk [vmem:[%s243 + $0x30] sm:$0xff] %vm1051, %v1040
      %1059 = vst.msk [vmem:[%s243 + $0x38] sm:$0xff] %vm1051, %v1042
      %s1060 = smul.u32 8, %s21
      %p1061 = scmp.lt.s32.totalorder %s20, 1
      %s1062 = scalar_select %p1061, %s20, 1
      %p1063 = scmp.lt.s32.totalorder %s1060, 7
      %s1064 = scalar_select %p1063, %s1060, 7
      %s1065 = smul.addr %s1062, 8
      %s1066 = sadd.s32 %s1064, %s1065
      %s1067 = smul.addr %s1066, 4
      %s1068 = scalar_lea.vmem %s3, %s1067
      %s1069 = smul.u32 8, %s21
      %p1070 = scmp.lt.s32.totalorder %s20, 1
      %s1071 = scalar_select %p1070, %s20, 1
      %p1072 = scmp.lt.s32.totalorder %s1069, 7
      %s1073 = scalar_select %p1072, %s1069, 7
      %s1074 = smul.addr %s1071, 8
      %s1075 = sadd.s32 %s1073, %s1074
      %s1076 = smul.addr %s1075, 8
      %s1077 = scalar_lea.vmem %s4, %s1076
      // Predicated region
      $region33: #{stem_forward.2} parent=31 // pred_check
        %p1078 = pneg %p116
      $region34: #{stem_forward.2} parent=31 // pred_check_branch
        %1080 = sbr.rel (%p1078) target = $region36
      $region35: #{stem_forward.2} parent=31 // pred_region
        %s1081 = smul.u32 8, %s21
      $region36: #{stem_forward.2} parent=31 // pred_fallthru
        _
      // Predicated region
      $region37: #{stem_forward.2} parent=31 // pred_check
        %p1082 = pneg %p144
      $region38: #{stem_forward.2} parent=31 // pred_check_branch
        %1084 = sbr.rel (%p1082) target = $region40
      $region39: #{stem_forward.2} parent=31 // pred_region
        %s1085 = smul.u32 8, %s21
      $region40: #{stem_forward.2} parent=31 // pred_fallthru
        _
    $region32: #{stem_forward.2} parent=5 // pred_fallthru
      _
    %p1086 = scmp.le.s32.totalorder 2, %s11
    // Predicated region
    $region41: #{stem_forward.2} parent=5 // pred_check
      %p1087 = pneg %p1086
    $region42: #{stem_forward.2} parent=5 // pred_check_branch
      %1089 = sbr.rel (%p1087) target = $region44
    $region43: #{stem_forward.2} parent=5 // pred_region
      %s1090 = ssub.s32 %s11, 2
      // Predicated region
      $region45: #{stem_forward.2} parent=43 // pred_check
        %p1091 = pneg %p122
      $region46: #{stem_forward.2} parent=43 // pred_check_branch
        %1093 = sbr.rel (%p1091) target = $region48
      $region47: #{stem_forward.2} parent=43 // pred_region
        %s1094 = smul.u32 8, %s23
        %p1095 = scmp.lt.s32.totalorder %s22, 1
        %s1096 = scalar_select %p1095, %s22, 1
        %p1097 = scmp.lt.s32.totalorder %s1094, 7
        %s1098 = scalar_select %p1097, %s1094, 7
        %s1099 = smul.addr %s1096, 8
        %s1100 = sadd.s32 %s1098, %s1099
        %s1101 = smul.addr %s1100, 4
        %s1102 = scalar_lea.vmem %s3, %s1101
      $region48: #{stem_forward.2} parent=43 // pred_fallthru
        _
      // Predicated region
      $region49: #{stem_forward.2} parent=43 // pred_check
        %p1103 = pneg %p150
      $region50: #{stem_forward.2} parent=43 // pred_check_branch
        %1105 = sbr.rel (%p1103) target = $region52
      $region51: #{stem_forward.2} parent=43 // pred_region
        %s1106 = smul.u32 8, %s23
        %p1107 = scmp.lt.s32.totalorder %s22, 1
        %s1108 = scalar_select %p1107, %s22, 1
        %p1109 = scmp.lt.s32.totalorder %s1106, 7
        %s1110 = scalar_select %p1109, %s1106, 7
        %s1111 = smul.addr %s1108, 8
        %s1112 = sadd.s32 %s1110, %s1111
        %s1113 = smul.addr %s1112, 8
        %s1114 = scalar_lea.vmem %s4, %s1113
      $region52: #{stem_forward.2} parent=43 // pred_fallthru
        _
    $region44: #{stem_forward.2} parent=5 // pred_fallthru
      _
  $region6: #{stem_forward.2} parent=0 // loop_footer
    %s15 = sadd.s32 1, %s11
  $region7: #{stem_forward.2} parent=0 // loop_footer_branch
    %10 = sbr.rel target = $region3
  $region8: #{stem_forward.2} parent=0 // loop_exit
    _

// kernel: stem_forward.3
$region0: #{stem_forward.3}
  #allocation0 [shape = 'u32[]', space=smem, size = 0x4, offset = 0x4, fixed_abs, tag = 'smem constant byte address 0x4 - core index']
  #allocation1 [shape = 'u32[144,128]{1,0:T(1,128)}', space=vmem, size = 0x12000, scoped, tag = 'internal scratch']
  #allocation2 [shape = 'bf16[10,10,64]{2,1,0:T(8,128)(2,1)}', space=vmem, size = 0xa000, scoped, tag = 'scratch operand']
  %s0 = inlined_call_operand.vmem [shape: bf16[2,8,8,64], index: 0, kind: input, shape index: {}]
  %s1 = inlined_call_operand.vmem [shape: f32[2,8,8,4], index: 1, kind: input, shape index: {}]
  %s2 = inlined_call_operand.vmem [shape: bf16[9,64,64], index: 2, kind: input, shape index: {}]
  %s3 = inlined_call_operand.vmem [shape: f32[1,64], index: 3, kind: input, shape index: {}]
  %s4 = inlined_call_operand.vmem [shape: f32[2,62,64], index: 4, kind: output, shape index: {}]
  %s5 = sld [smem:[#allocation0]]
  $region53: #{stem_forward.3} parent=0
    _
  %s7 = ssub.s32 1, %s5
  %s8 = scalar_select 0, %s7, %s5
  loop: start=0, step=1, limit=4
  $region2: #{stem_forward.3} parent=0 // loop_pre_header
    _
  $region3: #{stem_forward.3} parent=0 // loop_header
    %s10 = sphi 0, %s14
    %p11 = scmp.ge.s32.totalorder %s10, 4
    %s17 = sphi 0, %s29
    %s18 = sphi 0, %s25
    %s19 = sphi 0, %s17
    %s20 = sphi 0, %s18
    %s21 = sphi 0, %s19
    %s22 = sphi 0, %s20
    %s32 = sphi 0, %s34
    %s35 = sphi 0, %s32
    %s36 = sphi 0, %s35
    %s52 = sphi 0, %s36
    %s60 = sphi 0, %s62
    %s63 = sphi 0, %s60
    %s64 = sphi 0, %s63
    %s80 = sphi 0, %s64
    %s84 = sphi 0, %s84
    %s86 = sphi 0, %s84
    %s87 = sphi 0, %s86
    %s101 = sphi 0, %s87
    %s105 = sphi 0, %s105
    %s107 = sphi 0, %s105
    %s108 = sphi 0, %s107
    %s122 = sphi 0, %s108
    %s130 = sphi 0, %s132
    %s133 = sphi 0, %s130
    %s134 = sphi 0, %s133
    %s150 = sphi 0, %s134
  $region4: #{stem_forward.3} parent=0 // loop_header_branch
    %13 = sbr.rel (%p11) target = $region8
  $region5: #{stem_forward.3} parent=0 // loop_body
    %s15 = ssub.s32 %s10, 1
    %s16 = ssub.s32 %s10, 2
    %s23 = sadd.s32 1, %s18
    %p24 = scmp.ge.s32.totalorder %s23, 1
    %s25 = scalar_select %p24, 0, %s23
    %s26 = sadd.s32 1, %s17
    %s27 = scalar_select %p24, %s26, %s17
    %p28 = scmp.ge.s32.totalorder %s27, 2
    %s29 = scalar_select %p28, 0, %s27
    %s30 = ssub.s32 %s17, %s29
    %p31 = scmp.eq.s32.totalorder %s30, 0
    %s33 = sadd.s32 %s32, 1
    %s34 = scalar_select %p31, %s32, %s33
    %p37 = pneg %p31
    %p38 = scmp.eq.s32.totalorder %s10, 1
    %p39 = por %p37, %p38
    %p40 = scmp.ne.s32.totalorder %s32, %s35
    %p41 = scmp.eq.s32.totalorder %s10, 0
    %p42 = por %p40, %p41
    %p43 = scmp.ne.s32.totalorder %s32, %s35
    %p44 = scmp.eq.s32.totalorder %s15, 1
    %p45 = por %p43, %p44
    %p46 = scmp.ne.s32.totalorder %s35, %s36
    %p47 = scmp.eq.s32.totalorder %s15, 0
    %p48 = por %p46, %p47
    %p49 = scmp.ne.s32.totalorder %s35, %s36
    %p50 = scmp.eq.s32.totalorder %s16, 1
    %p51 = por %p49, %p50
    %p53 = scmp.ne.s32.totalorder %s36, %s52
    %p54 = scmp.eq.s32.totalorder %s16, 0
    %p55 = por %p53, %p54
    %s56 = ssub.s32 %s17, %s29
    %s57 = ssub.s32 %s18, %s25
    %s58 = sor.u32 %s56, %s57
    %p59 = scmp.eq.s32.totalorder %s58, 0
    %s61 = sadd.s32 %s60, 1
    %s62 = scalar_select %p59, %s60, %s61
    %p65 = pneg %p59
    %p66 = scmp.eq.s32.totalorder %s10, 1
    %p67 = por %p65, %p66
    %p68 = scmp.ne.s32.totalorder %s60, %s63
    %p69 = scmp.eq.s32.totalorder %s10, 0
    %p70 = por %p68, %p69
    %p71 = scmp.ne.s32.totalorder %s60, %s63
    %p72 = scmp.eq.s32.totalorder %s15, 1
    %p73 = por %p71, %p72
    %p74 = scmp.ne.s32.totalorder %s63, %s64
    %p75 = scmp.eq.s32.totalorder %s15, 0
    %p76 = por %p74, %p75
    %p77 = scmp.ne.s32.totalorder %s63, %s64
    %p78 = scmp.eq.s32.totalorder %s16, 1
    %p79 = por %p77, %p78
    %p81 = scmp.ne.s32.totalorder %s64, %s80
    %p82 = scmp.eq.s32.totalorder %s16, 0
    %p83 = por %p81, %p82
    %s85 = sadd.s32 %s84, 1
    %p88 = scmp.eq.s32.totalorder %s10, 1
    %p89 = scmp.ne.s32.totalorder %s84, %s86
    %p90 = scmp.eq.s32.totalorder %s10, 0
    %p91 = por %p89, %p90
    %p92 = scmp.ne.s32.totalorder %s84, %s86
    %p93 = scmp.eq.s32.totalorder %s15, 1
    %p94 = por %p92, %p93
    %p95 = scmp.ne.s32.totalorder %s86, %s87
    %p96 = scmp.eq.s32.totalorder %s15, 0
    %p97 = por %p95, %p96
    %p98 = scmp.ne.s32.totalorder %s86, %s87
    %p99 = scmp.eq.s32.totalorder %s16, 1
    %p100 = por %p98, %p99
    %p102 = scmp.ne.s32.totalorder %s87, %s101
    %p103 = scmp.eq.s32.totalorder %s16, 0
    %p104 = por %p102, %p103
    %s106 = sadd.s32 %s105, 1
    %p109 = scmp.eq.s32.totalorder %s10, 1
    %p110 = scmp.ne.s32.totalorder %s105, %s107
    %p111 = scmp.eq.s32.totalorder %s10, 0
    %p112 = por %p110, %p111
    %p113 = scmp.ne.s32.totalorder %s105, %s107
    %p114 = scmp.eq.s32.totalorder %s15, 1
    %p115 = por %p113, %p114
    %p116 = scmp.ne.s32.totalorder %s107, %s108
    %p117 = scmp.eq.s32.totalorder %s15, 0
    %p118 = por %p116, %p117
    %p119 = scmp.ne.s32.totalorder %s107, %s108
    %p120 = scmp.eq.s32.totalorder %s16, 1
    %p121 = por %p119, %p120
    %p123 = scmp.ne.s32.totalorder %s108, %s122
    %p124 = scmp.eq.s32.totalorder %s16, 0
    %p125 = por %p123, %p124
    %s126 = ssub.s32 %s17, %s29
    %s127 = ssub.s32 %s18, %s25
    %s128 = sor.u32 %s126, %s127
    %p129 = scmp.eq.s32.totalorder %s128, 0
    %s131 = sadd.s32 %s130, 1
    %s132 = scalar_select %p129, %s130, %s131
    %p135 = pneg %p129
    %p136 = scmp.eq.s32.totalorder %s10, 1
    %p137 = por %p135, %p136
    %p138 = scmp.ne.s32.totalorder %s130, %s133
    %p139 = scmp.eq.s32.totalorder %s10, 0
    %p140 = por %p138, %p139
    %p141 = scmp.ne.s32.totalorder %s130, %s133
    %p142 = scmp.eq.s32.totalorder %s15, 1
    %p143 = por %p141, %p142
    %p144 = scmp.ne.s32.totalorder %s133, %s134
    %p145 = scmp.eq.s32.totalorder %s15, 0
    %p146 = por %p144, %p145
    %p147 = scmp.ne.s32.totalorder %s133, %s134
    %p148 = scmp.eq.s32.totalorder %s16, 1
    %p149 = por %p147, %p148
    %p151 = scmp.ne.s32.totalorder %s134, %s150
    %p152 = scmp.eq.s32.totalorder %s16, 0
    %p153 = por %p151, %p152
    %p154 = scmp.le.s32.totalorder 1, %s10
    %p155 = scmp.lt.s32.totalorder %s10, 3
    %p156 = pnand %p154, %p155
    %p157 = pneg %p156
    // Predicated region
    $region9: #{stem_forward.3} parent=5 // pred_check
      _
    $region10: #{stem_forward.3} parent=5 // pred_check_branch
      %159 = sbr.rel (%p156) target = $region12
    $region11: #{stem_forward.3} parent=5 // pred_region
      %s160 = ssub.s32 %s10, 1
      // Predicated region
      $region13: #{stem_forward.3} parent=11 // pred_check
        %p161 = pneg %p97
      $region14: #{stem_forward.3} parent=11 // pred_check_branch
        %163 = sbr.rel (%p161) target = $region16
      $region15: #{stem_forward.3} parent=11 // pred_region
        _
      $region16: #{stem_forward.3} parent=11 // pred_fallthru
        _
      // Predicated region
      $region17: #{stem_forward.3} parent=11 // pred_check
        %p164 = pneg %p118
      $region18: #{stem_forward.3} parent=11 // pred_check_branch
        %166 = sbr.rel (%p164) target = $region20
      $region19: #{stem_forward.3} parent=11 // pred_region
        _
      $region20: #{stem_forward.3} parent=11 // pred_fallthru
        _
    $region12: #{stem_forward.3} parent=5 // pred_fallthru
      _
    %p167 = scmp.lt.s32.totalorder %s10, 2
    // Predicated region
    $region21: #{stem_forward.3} parent=5 // pred_check
      %p168 = pneg %p167
    $region22: #{stem_forward.3} parent=5 // pred_check_branch
      %170 = sbr.rel (%p168) target = $region24
    $region23: #{stem_forward.3} parent=5 // pred_region
      // Predicated region
      $region25: #{stem_forward.3} parent=23 // pred_check
        %p171 = pneg %p42
      $region26: #{stem_forward.3} parent=23 // pred_check_branch
        %173 = sbr.rel (%p171) target = $region28
      $region27: #{stem_forward.3} parent=23 // pred_region
        %p174 = scmp.lt.s32.totalorder %s17, 1
        %s175 = scalar_select %p174, %s17, 1
        %s176 = smul.addr %s175, 8
        %s177 = smul.addr %s176, 4
        %s178 = scalar_lea.vmem %s0, %s177
      $region28: #{stem_forward.3} parent=23 // pred_fallthru
        _
      // Predicated region
      $region29: #{stem_forward.3} parent=23 // pred_check
        %p179 = pneg %p70
      $region30: #{stem_forward.3} parent=23 // pred_check_branch
        %181 = sbr.rel (%p179) target = $region32
      $region31: #{stem_forward.3} parent=23 // pred_region
        %s182 = smul.u32 8, %s18
        %p183 = scmp.lt.s32.totalorder %s17, 1
        %s184 = scalar_select %p183, %s17, 1
        %p185 = scmp.lt.s32.totalorder %s182, 7
        %s186 = scalar_select %p185, %s182, 7
        %s187 = smul.addr %s184, 8
        %s188 = sadd.s32 %s186, %s187
        %s189 = smul.addr %s188, 8
        %s190 = scalar_lea.vmem %s1, %s189
        %s191 = smul.u32 8, %s18
      $region32: #{stem_forward.3} parent=23 // pred_fallthru
        _
    $region24: #{stem_forward.3} parent=5 // pred_fallthru
      _
    %p192 = scmp.le.s32.totalorder 1, %s10
    %p193 = scmp.lt.s32.totalorder %s10, 3
    %p194 = pnand %p192, %p193
    %p195 = pneg %p194
    // Predicated region
    $region33: #{stem_forward.3} parent=5 // pred_check
      _
    $region34: #{stem_forward.3} parent=5 // pred_check_branch
      %197 = sbr.rel (%p194) target = $region36
    $region35: #{stem_forward.3} parent=5 // pred_region
      %s198 = ssub.s32 %s10, 1
      %p199 = scmp.lt.s32.totalorder %s19, 1
      %s200 = scalar_select %p199, %s19, 1
      %s201 = smul.addr %s200, 8
      %s202 = smul.addr %s201, 4
      %s203 = scalar_lea.vmem %s0, %s202
      %p204 = pneg %p48
      %p205 = pneg %p45
      %s206 = smul.u32 8, %s20
      %p207 = scmp.lt.s32.totalorder %s19, 1
      %s208 = scalar_select %p207, %s19, 1
      %p209 = scmp.lt.s32.totalorder %s206, 7
      %s210 = scalar_select %p209, %s206, 7
      %s211 = smul.addr %s208, 8
      %s212 = sadd.s32 %s210, %s211
      %s213 = smul.addr %s212, 8
      %s214 = scalar_lea.vmem %s1, %s213
      %p215 = pneg %p76
      %p216 = pneg %p73
      %p217 = pneg %p97
      %p218 = pneg %p94
      %p219 = pneg %p118
      %p220 = pneg %p115
      %p221 = pneg %p146
      %p222 = pneg %p143
      %p223 = scmp.lt.s32.totalorder %s19, 1
      %s224 = scalar_select %p223, %s19, 1
      %p225 = scmp.lt.s32.totalorder %s20, 0
      %s226 = scalar_select %p225, %s20, 0
      %s227 = smul.addr %s224, 8
      %s228 = sadd.s32 %s226, %s227
      %s229 = smul.addr %s228, 8
      %s230 = scalar_lea.vmem %s4, %s229
      %p231 = scmp.lt.s32.totalorder %s19, 1
      %s232 = scalar_select %p231, %s19, 1
      %s233 = smul.addr %s232, 8
      %s234 = smul.addr %s233, 4
      %s235 = scalar_lea.vmem %s0, %s234
      %s236 = smul.u32 8, %s20
      %p237 = scmp.lt.s32.totalorder %s19, 1
      %s238 = scalar_select %p237, %s19, 1
      %p239 = scmp.lt.s32.totalorder %s236, 7
      %s240 = scalar_select %p239, %s236, 7
      %s241 = smul.addr %s238, 8
      %s242 = sadd.s32 %s240, %s241
      %s243 = smul.addr %s242, 8
      %s244 = scalar_lea.vmem %s1, %s243
      %s245 = smul.u32 8, %s20
      %p246 = scmp.lt.s32.totalorder %s19, 1
      %s247 = scalar_select %p246, %s19, 1
      %p248 = scmp.lt.s32.totalorder %s20, 0
      %s249 = scalar_select %p248, %s20, 0
      %s250 = smul.addr %s247, 8
      %s251 = sadd.s32 %s249, %s250
      %s252 = smul.addr %s251, 8
      %s253 = scalar_lea.vmem %s4, %s252
      %p255 = scmp.eq.s32.totalorder %s20, 0
      // Predicated region
      $region37: #{stem_forward.3} parent=35 // pred_check
        %p256 = pneg %p255
      $region38: #{stem_forward.3} parent=35 // pred_check_branch
        %258 = sbr.rel (%p256) target = $region40
      $region39: #{stem_forward.3} parent=35 // pred_region
        %vm259 = vcmask 519168
        %260 = vst.msk [vmem:[#allocation2] sm:$0xf] %vm259, 0
        %vm261 = vcmask 516096
        %262 = vst.msk [vmem:[#allocation2 + $0x4] sm:$0x1] %vm261, 0
        %263 = vst.msk [vmem:[#allocation2 + $0x8] sm:$0xf] %vm259, 0
        %264 = vst.msk [vmem:[#allocation2 + $0xc] sm:$0x1] %vm261, 0
        %265 = vst.msk [vmem:[#allocation2 + $0x10] sm:$0xf] %vm259, 0
        %266 = vst.msk [vmem:[#allocation2 + $0x14] sm:$0x1] %vm261, 0
        %267 = vst.msk [vmem:[#allocation2 + $0x18] sm:$0xf] %vm259, 0
        %268 = vst.msk [vmem:[#allocation2 + $0x1c] sm:$0x1] %vm261, 0
        %269 = vst.msk [vmem:[#allocation2 + $0x20] sm:$0xf] %vm259, 0
        %270 = vst.msk [vmem:[#allocation2 + $0x24] sm:$0x1] %vm261, 0
        %271 = vst.msk [vmem:[#allocation2 + $0x28] sm:$0xf] %vm259, 0
        %272 = vst.msk [vmem:[#allocation2 + $0x2c] sm:$0x1] %vm261, 0
        %273 = vst.msk [vmem:[#allocation2 + $0x30] sm:$0xf] %vm259, 0
        %274 = vst.msk [vmem:[#allocation2 + $0x34] sm:$0x1] %vm261, 0
        %275 = vst.msk [vmem:[#allocation2 + $0x38] sm:$0xf] %vm259, 0
        %276 = vst.msk [vmem:[#allocation2 + $0x3c] sm:$0x1] %vm261, 0
        %277 = vst.msk [vmem:[#allocation2 + $0x40] sm:$0xf] %vm259, 0
        %278 = vst.msk [vmem:[#allocation2 + $0x44] sm:$0x1] %vm261, 0
        %279 = vst.msk [vmem:[#allocation2 + $0x48] sm:$0xf] %vm259, 0
        %280 = vst.msk [vmem:[#allocation2 + $0x4c] sm:$0x1] %vm261, 0
        %v281 = vld [vmem:[%s235] sm:$0xf]
        %v282 = vld [vmem:[%s235 + $0x4] sm:$0xf]
        %v283 = vld [vmem:[%s235 + $0x8] sm:$0xf]
        %v284 = vld [vmem:[%s235 + $0xc] sm:$0xf]
        %v285 = vld [vmem:[%s235 + $0x10] sm:$0xf]
        %v286 = vld [vmem:[%s235 + $0x14] sm:$0xf]
        %v287 = vld [vmem:[%s235 + $0x18] sm:$0xf]
        %v288 = vld [vmem:[%s235 + $0x1c] sm:$0xf]
        %v290 = vshrl.u32 %v281, 16
        %v292 = vrot.slane %v290, 7
        %v293 = vshll.u32 %v281, 16
        %v295 = vor.u32 %v292, %v293
        %v296 = vrot.slane %v292, 4
        %v298 = vshrl.u32 %v282, 16
        %v300 = vrot.slane %v298, 7
        %v301 = vshll.u32 %v282, 16
        %v303 = vor.u32 %v300, %v301
        %v304 = vrot.slane %v300, 4
        %v306 = vshrl.u32 %v283, 16
        %v308 = vrot.slane %v306, 7
        %v309 = vshll.u32 %v283, 16
        %v311 = vor.u32 %v308, %v309
        %v312 = vrot.slane %v308, 4
        %v314 = vshrl.u32 %v284, 16
        %v316 = vrot.slane %v314, 7
        %v317 = vshll.u32 %v284, 16
        %v319 = vor.u32 %v316, %v317
        %v320 = vrot.slane %v316, 4
        %v322 = vshrl.u32 %v285, 16
        %v324 = vrot.slane %v322, 7
        %v325 = vshll.u32 %v285, 16
        %v327 = vor.u32 %v324, %v325
        %v328 = vrot.slane %v324, 4
        %v330 = vshrl.u32 %v286, 16
        %v332 = vrot.slane %v330, 7
        %v333 = vshll.u32 %v286, 16
        %v335 = vor.u32 %v332, %v333
        %v336 = vrot.slane %v332, 4
        %v338 = vshrl.u32 %v287, 16
        %v340 = vrot.slane %v338, 7
        %v341 = vshll.u32 %v287, 16
        %v343 = vor.u32 %v340, %v341
        %v344 = vrot.slane %v340, 4
        %v346 = vshrl.u32 %v288, 16
        %v348 = vrot.slane %v346, 7
        %v349 = vshll.u32 %v288, 16
        %v351 = vor.u32 %v348, %v349
        %v352 = vrot.slane %v348, 4
        %s369 = scalar_lea.vmem [#allocation2], 8
        %vm370 = vcmask 519168
        %vm371 = vsmask.f32 7938
        %vm372 = vmand %vm370, %vm371
        %v373 = vld [vmem:[%s369] sm:$0xf]
        %v374 = vsel %vm372, %v295, %v373
        %375 = vst [vmem:[%s369] sm:$0xf] %v374
        %vm376 = vcmask 516096
        %vm377 = vsmask.f32 256
        %vm378 = vmand %vm376, %vm377
        %v379 = vld [vmem:[%s369 + $0x4] sm:$0x1]
        %v380 = vsel %vm378, %v296, %v379
        %381 = vst [vmem:[%s369 + $0x4] sm:$0x1] %v380
        %v382 = vld [vmem:[%s369 + $0x8] sm:$0xf]
        %v383 = vsel %vm372, %v303, %v382
        %384 = vst [vmem:[%s369 + $0x8] sm:$0xf] %v383
        %v385 = vld [vmem:[%s369 + $0xc] sm:$0x1]
        %v386 = vsel %vm378, %v304, %v385
        %387 = vst [vmem:[%s369 + $0xc] sm:$0x1] %v386
        %v388 = vld [vmem:[%s369 + $0x10] sm:$0xf]
        %v389 = vsel %vm372, %v311, %v388
        %390 = vst [vmem:[%s369 + $0x10] sm:$0xf] %v389
        %v391 = vld [vmem:[%s369 + $0x14] sm:$0x1]
        %v392 = vsel %vm378, %v312, %v391
        %393 = vst [vmem:[%s369 + $0x14] sm:$0x1] %v392
        %v394 = vld [vmem:[%s369 + $0x18] sm:$0xf]
        %v395 = vsel %vm372, %v319, %v394
        %396 = vst [vmem:[%s369 + $0x18] sm:$0xf] %v395
        %v397 = vld [vmem:[%s369 + $0x1c] sm:$0x1]
        %v398 = vsel %vm378, %v320, %v397
        %399 = vst [vmem:[%s369 + $0x1c] sm:$0x1] %v398
        %v400 = vld [vmem:[%s369 + $0x20] sm:$0xf]
        %v401 = vsel %vm372, %v327, %v400
        %402 = vst [vmem:[%s369 + $0x20] sm:$0xf] %v401
        %v403 = vld [vmem:[%s369 + $0x24] sm:$0x1]
        %v404 = vsel %vm378, %v328, %v403
        %405 = vst [vmem:[%s369 + $0x24] sm:$0x1] %v404
        %v406 = vld [vmem:[%s369 + $0x28] sm:$0xf]
        %v407 = vsel %vm372, %v335, %v406
        %408 = vst [vmem:[%s369 + $0x28] sm:$0xf] %v407
        %v409 = vld [vmem:[%s369 + $0x2c] sm:$0x1]
        %v410 = vsel %vm378, %v336, %v409
        %411 = vst [vmem:[%s369 + $0x2c] sm:$0x1] %v410
        %v412 = vld [vmem:[%s369 + $0x30] sm:$0xf]
        %v413 = vsel %vm372, %v343, %v412
        %414 = vst [vmem:[%s369 + $0x30] sm:$0xf] %v413
        %v415 = vld [vmem:[%s369 + $0x34] sm:$0x1]
        %v416 = vsel %vm378, %v344, %v415
        %417 = vst [vmem:[%s369 + $0x34] sm:$0x1] %v416
        %v418 = vld [vmem:[%s369 + $0x38] sm:$0xf]
        %v419 = vsel %vm372, %v351, %v418
        %420 = vst [vmem:[%s369 + $0x38] sm:$0xf] %v419
        %v421 = vld [vmem:[%s369 + $0x3c] sm:$0x1]
        %v422 = vsel %vm378, %v352, %v421
        %423 = vst [vmem:[%s369 + $0x3c] sm:$0x1] %v422
      $region40: #{stem_forward.3} parent=35 // pred_fallthru
        _
      %s424 = smul.u32 %s20, 8
      %s425 = smul.u32 %s424, 2
      %s426 = smul.addr %s425, 4
      %s427 = scalar_lea.vmem [#allocation2], %s426
      %v428 = vld [vmem:[%s427] sm:$0xf]
      %v429 = vld [vmem:[%s427 + $0x8] sm:$0xf]
      %v430 = vld [vmem:[%s427 + $0x10] sm:$0xf]
      %v431 = vld [vmem:[%s427 + $0x18] sm:$0xf]
      %v432 = vld [vmem:[%s427 + $0x20] sm:$0xf]
      %v433 = vld [vmem:[%s427 + $0x28] sm:$0xf]
      %v434 = vld [vmem:[%s427 + $0x30] sm:$0xf]
      %v435 = vld [vmem:[%s427 + $0x38] sm:$0xf]
      %v436 = vld [vmem:[%s2] sm:$0xf]
      %v437 = vld [vmem:[%s2 + $0x4] sm:$0xf]
      %v438 = vld [vmem:[%s2 + $0x8] sm:$0xf]
      %v439 = vld [vmem:[%s2 + $0xc] sm:$0xf]
      %v440 = vld [vmem:[%s2 + $0x10] sm:$0xf]
      %v441 = vld [vmem:[%s2 + $0x14] sm:$0xf]
      %v442 = vld [vmem:[%s2 + $0x18] sm:$0xf]
      %v443 = vld [vmem:[%s2 + $0x1c] sm:$0xf]
      %v444 = vld [vmem:[%s427 + $0x4] sm:$0x1]
      %v445 = vld [vmem:[%s427 + $0xc] sm:$0x1]
      %v446 = vld [vmem:[%s427 + $0x14] sm:$0x1]
      %v447 = vld [vmem:[%s427 + $0x1c] sm:$0x1]
      %v448 = vld [vmem:[%s427 + $0x24] sm:$0x1]
      %v449 = vld [vmem:[%s427 + $0x2c] sm:$0x1]
      %v450 = vld [vmem:[%s427 + $0x34] sm:$0x1]
      %v451 = vld [vmem:[%s427 + $0x3c] sm:$0x1]
      %vm452 = vsmask.f32 3328
      %vm453 = vsmask.f32 7440
      %vm454 = vmor %vm452, %vm453
      %v456 = vshrl.u32 %v428, 16
      %v458 = vrot.slane %v456, 4
      %v459 = vshll.u32 %v428, 16
      %v461 = vrot.slane %v459, 5
      %v462 = vor.u32 %v458, %v461
      %v463 = vrot.slane %v462, 4
      %v465 = vshll.u32 %v444, 16
      %v467 = vrot.slane %v465, 5
      %v468 = vsel %vm454, %v463, %v467
      %v470 = vshrl.u32 %v429, 16
      %v472 = vrot.slane %v470, 4
      %v473 = vshll.u32 %v429, 16
      %v475 = vrot.slane %v473, 5
      %v476 = vor.u32 %v472, %v475
      %v477 = vrot.slane %v476, 4
      %v479 = vshll.u32 %v445, 16
      %v481 = vrot.slane %v479, 5
      %v482 = vsel %vm454, %v477, %v481
      %v484 = vshrl.u32 %v430, 16
      %v486 = vrot.slane %v484, 4
      %v487 = vshll.u32 %v430, 16
      %v489 = vrot.slane %v487, 5
      %v490 = vor.u32 %v486, %v489
      %v491 = vrot.slane %v490, 4
      %v493 = vshll.u32 %v446, 16
      %v495 = vrot.slane %v493, 5
      %v496 = vsel %vm454, %v491, %v495
      %v498 = vshrl.u32 %v431, 16
      %v500 = vrot.slane %v498, 4
      %v501 = vshll.u32 %v431, 16
      %v503 = vrot.slane %v501, 5
      %v504 = vor.u32 %v500, %v503
      %v505 = vrot.slane %v504, 4
      %v507 = vshll.u32 %v447, 16
      %v509 = vrot.slane %v507, 5
      %v510 = vsel %vm454, %v505, %v509
      %v512 = vshrl.u32 %v432, 16
      %v514 = vrot.slane %v512, 4
      %v515 = vshll.u32 %v432, 16
      %v517 = vrot.slane %v515, 5
      %v518 = vor.u32 %v514, %v517
      %v519 = vrot.slane %v518, 4
      %v521 = vshll.u32 %v448, 16
      %v523 = vrot.slane %v521, 5
      %v524 = vsel %vm454, %v519, %v523
      %v526 = vshrl.u32 %v433, 16
      %v528 = vrot.slane %v526, 4
      %v529 = vshll.u32 %v433, 16
      %v531 = vrot.slane %v529, 5
      %v532 = vor.u32 %v528, %v531
      %v533 = vrot.slane %v532, 4
      %v535 = vshll.u32 %v449, 16
      %v537 = vrot.slane %v535, 5
      %v538 = vsel %vm454, %v533, %v537
      %v540 = vshrl.u32 %v434, 16
      %v542 = vrot.slane %v540, 4
      %v543 = vshll.u32 %v434, 16
      %v545 = vrot.slane %v543, 5
      %v546 = vor.u32 %v542, %v545
      %v547 = vrot.slane %v546, 4
      %v549 = vshll.u32 %v450, 16
      %v551 = vrot.slane %v549, 5
      %v552 = vsel %vm454, %v547, %v551
      %v554 = vshrl.u32 %v435, 16
      %v556 = vrot.slane %v554, 4
      %v557 = vshll.u32 %v435, 16
      %v559 = vrot.slane %v557, 5
      %v560 = vor.u32 %v556, %v559
      %v561 = vrot.slane %v560, 4
      %v563 = vshll.u32 %v451, 16
      %v565 = vrot.slane %v563, 5
      %v566 = vsel %vm454, %v561, %v565
      %s567 = scalar_lea.vmem %s2, 32
      %v568 = vld [vmem:[%s567] sm:$0xf]
      %v569 = vld [vmem:[%s567 + $0x4] sm:$0xf]
      %v570 = vld [vmem:[%s567 + $0x8] sm:$0xf]
      %v571 = vld [vmem:[%s567 + $0xc] sm:$0xf]
      %v572 = vld [vmem:[%s567 + $0x10] sm:$0xf]
      %v573 = vld [vmem:[%s567 + $0x14] sm:$0xf]
      %v574 = vld [vmem:[%s567 + $0x18] sm:$0xf]
      %v575 = vld [vmem:[%s567 + $0x1c] sm:$0xf]
      %v576 = vunpack.c.l.b16 %v468
      %v577 = vunpack.c.l.b16 %v482
      %v578 = vunpack.c.l.b16 %v496
      %v579 = vunpack.c.l.b16 %v510
      %v580 = vunpack.c.l.b16 %v524
      %v581 = vunpack.c.l.b16 %v538
      %v582 = vunpack.c.l.b16 %v552
      %v583 = vunpack.c.l.b16 %v566
      %v584 = vpack.c.b16 %v577, %v576
      %v585 = vpack.c.b16 %v579, %v578
      %v586 = vpack.c.b16 %v581, %v580
      %v587 = vpack.c.b16 %v583, %v582
      %v596 = vunpack.c.l.b16 %v568
      %v597 = vunpack.c.l.b16 %v569
      %v598 = vunpack.c.l.b16 %v570
      %v599 = vunpack.c.l.b16 %v571
      %v600 = vunpack.c.l.b16 %v572
      %v601 = vunpack.c.l.b16 %v573
      %v602 = vunpack.c.l.b16 %v574
      %v603 = vunpack.c.l.b16 %v575
      %v604 = vpack.c.b16 %v597, %v596
      %v605 = vpack.c.b16 %v599, %v598
      %v606 = vpack.c.b16 %v601, %v600
      %v607 = vpack.c.b16 %v603, %v602
      %vm612 = vcmask 523264
      %v614 = vsel %vm612, %v584, 0
      %v617 = vsel %vm612, %v585, 0
      %v620 = vsel %vm612, %v586, 0
      %v623 = vsel %vm612, %v587, 0
      %625 = vmatprep.subr.bf16.mxu0 0
      %626 = vmatpush1.bf16.msra.mxu0 %v604
      %627 = vmatprep.subr.bf16.mxu0 0
      %628 = vmatpush1.bf16.msra.mxu0 %v605
      %629 = vmatprep.subr.bf16.mxu0 0
      %630 = vmatpush1.bf16.msra.mxu0 %v606
      %631 = vmatprep.subr.bf16.mxu0 0
      %632 = vmatpush1.bf16.msra.mxu0 %v607
      %633 = vmatprep.subr.bf16.mxu0 0
      %634 = vmatpush1.bf16.msra.mxu0 0
      %635 = vmatprep.subr.bf16.mxu0 0
      %636 = vmatpush1.bf16.msra.mxu0 0
      %637 = vmatprep.subr.bf16.mxu0 0
      %638 = vmatpush1.bf16.msra.mxu0 0
      %639 = vmatprep.subr.bf16.mxu0 0
      %640 = vmatpush1.bf16.msra.mxu0 0
      %641 = vmatprep.subr.bf16.mxu0 0
      %642 = vmatpush1.bf16.msra.mxu0 0
      %643 = vmatprep.subr.bf16.mxu0 0
      %644 = vmatpush1.bf16.msra.mxu0 0
      %645 = vmatprep.subr.bf16.mxu0 0
      %646 = vmatpush1.bf16.msra.mxu0 0
      %647 = vmatprep.subr.bf16.mxu0 0
      %648 = vmatpush1.bf16.msra.mxu0 0
      %649 = vmatprep.subr.bf16.mxu0 0
      %650 = vmatpush1.bf16.msra.mxu0 0
      %651 = vmatprep.subr.bf16.mxu0 0
      %652 = vmatpush1.bf16.msra.mxu0 0
      %653 = vmatprep.subr.bf16.mxu0 0
      %654 = vmatpush1.bf16.msra.mxu0 0
      %655 = vmatprep.subr.bf16.mxu0 0
      %656 = vmatpush1.bf16.msra.mxu0 0
      %657 = vmatprep.mubr.bf16.mxu0 0
      %658 = vmatmul.mubr.bf16.gmra.mrb[0].mxu0 %v614
      %v659 = vpop.f32.mrb[0].mxu0
      %v660 = vadd.f32 0.0, %v659
      %v661 = vpop.f32.mrb[0].mxu0
      %v662 = vpop.f32.mrb[0].mxu0
      %v663 = vadd.f32 0.0, %v662
      %v664 = vpop.f32.mrb[0].mxu0
      %665 = vmatprep.mubr.bf16.mxu0 0
      %666 = vmatmul.mubr.bf16.gmra.mrb[0].mxu0 %v617
      %v667 = vpop.f32.mrb[0].mxu0
      %v668 = vadd.f32 0.0, %v667
      %v669 = vpop.f32.mrb[0].mxu0
      %v670 = vpop.f32.mrb[0].mxu0
      %v671 = vadd.f32 0.0, %v670
      %v672 = vpop.f32.mrb[0].mxu0
      %673 = vmatprep.mubr.bf16.mxu0 0
      %674 = vmatmul.mubr.bf16.gmra.mrb[0].mxu0 %v620
      %v675 = vpop.f32.mrb[0].mxu0
      %v676 = vadd.f32 0.0, %v675
      %v677 = vpop.f32.mrb[0].mxu0
      %v678 = vpop.f32.mrb[0].mxu0
      %v679 = vadd.f32 0.0, %v678
      %v680 = vpop.f32.mrb[0].mxu0
      %681 = vmatprep.mubr.bf16.mxu0 0
      %682 = vmatmul.mubr.bf16.gmra.mrb[0].mxu0 %v623
      %v683 = vpop.f32.mrb[0].mxu0
      %v684 = vadd.f32 0.0, %v683
      %v685 = vpop.f32.mrb[0].mxu0
      %v686 = vpop.f32.mrb[0].mxu0
      %v687 = vadd.f32 0.0, %v686
      %v688 = vpop.f32.mrb[0].mxu0
      %689 = vdwg.mxu0
      %v698 = vunpack.c.l.b16 %v428
      %v699 = vunpack.c.l.b16 %v429
      %v700 = vunpack.c.l.b16 %v430
      %v701 = vunpack.c.l.b16 %v431
      %v702 = vunpack.c.l.b16 %v432
      %v703 = vunpack.c.l.b16 %v433
      %v704 = vunpack.c.l.b16 %v434
      %v705 = vunpack.c.l.b16 %v435
      %v706 = vpack.c.b16 %v699, %v698
      %v707 = vpack.c.b16 %v701, %v700
      %v708 = vpack.c.b16 %v703, %v702
      %v709 = vpack.c.b16 %v705, %v704
      %v718 = vunpack.c.l.b16 %v436
      %v719 = vunpack.c.l.b16 %v437
      %v720 = vunpack.c.l.b16 %v438
      %v721 = vunpack.c.l.b16 %v439
      %v722 = vunpack.c.l.b16 %v440
      %v723 = vunpack.c.l.b16 %v441
      %v724 = vunpack.c.l.b16 %v442
      %v725 = vunpack.c.l.b16 %v443
      %v726 = vpack.c.b16 %v719, %v718
      %v727 = vpack.c.b16 %v721, %v720
      %v728 = vpack.c.b16 %v723, %v722
      %v729 = vpack.c.b16 %v725, %v724
      %v735 = vsel %vm612, %v706, 0
      %v738 = vsel %vm612, %v707, 0
      %v741 = vsel %vm612, %v708, 0
      %v744 = vsel %vm612, %v709, 0
      %746 = vmatprep.subr.bf16.mxu0 0
      %747 = vmatpush1.bf16.msra.mxu0 %v726
      %748 = vmatprep.subr.bf16.mxu0 0
      %749 = vmatpush1.bf16.msra.mxu0 %v727
      %750 = vmatprep.subr.bf16.mxu0 0
      %751 = vmatpush1.bf16.msra.mxu0 %v728
      %752 = vmatprep.subr.bf16.mxu0 0
      %753 = vmatpush1.bf16.msra.mxu0 %v729
      %754 = vmatprep.subr.bf16.mxu0 0
      %755 = vmatpush1.bf16.msra.mxu0 0
      %756 = vmatprep.subr.bf16.mxu0 0
      %757 = vmatpush1.bf16.msra.mxu0 0
      %758 = vmatprep.subr.bf16.mxu0 0
      %759 = vmatpush1.bf16.msra.mxu0 0
      %760 = vmatprep.subr.bf16.mxu0 0
      %761 = vmatpush1.bf16.msra.mxu0 0
      %762 = vmatprep.subr.bf16.mxu0 0
      %763 = vmatpush1.bf16.msra.mxu0 0
      %764 = vmatprep.subr.bf16.mxu0 0
      %765 = vmatpush1.bf16.msra.mxu0 0
      %766 = vmatprep.subr.bf16.mxu0 0
      %767 = vmatpush1.bf16.msra.mxu0 0
      %768 = vmatprep.subr.bf16.mxu0 0
      %769 = vmatpush1.bf16.msra.mxu0 0
      %770 = vmatprep.subr.bf16.mxu0 0
      %771 = vmatpush1.bf16.msra.mxu0 0
      %772 = vmatprep.subr.bf16.mxu0 0
      %773 = vmatpush1.bf16.msra.mxu0 0
      %774 = vmatprep.subr.bf16.mxu0 0
      %775 = vmatpush1.bf16.msra.mxu0 0
      %776 = vmatprep.subr.bf16.mxu0 0
      %777 = vmatpush1.bf16.msra.mxu0 0
      %778 = vmatprep.mubr.bf16.mxu0 0
      %779 = vmatmul.mubr.bf16.gmra.mrb[0].mxu0 %v735
      %v780 = vpop.f32.mrb[0].mxu0
      %v781 = vadd.f32 %v660, %v780
      %v782 = vpop.f32.mrb[0].mxu0
      %v783 = vpop.f32.mrb[0].mxu0
      %v784 = vadd.f32 %v663, %v783
      %v785 = vpop.f32.mrb[0].mxu0
      %786 = vmatprep.mubr.bf16.mxu0 0
      %787 = vmatmul.mubr.bf16.gmra.mrb[0].mxu0 %v738
      %v788 = vpop.f32.mrb[0].mxu0
      %v789 = vadd.f32 %v668, %v788
      %v790 = vpop.f32.mrb[0].mxu0
      %v791 = vpop.f32.mrb[0].mxu0
      %v792 = vadd.f32 %v671, %v791
      %v793 = vpop.f32.mrb[0].mxu0
      %794 = vmatprep.mubr.bf16.mxu0 0
      %795 = vmatmul.mubr.bf16.gmra.mrb[0].mxu0 %v741
      %v796 = vpop.f32.mrb[0].mxu0
      %v797 = vadd.f32 %v676, %v796
      %v798 = vpop.f32.mrb[0].mxu0
      %v799 = vpop.f32.mrb[0].mxu0
      %v800 = vadd.f32 %v679, %v799
      %v801 = vpop.f32.mrb[0].mxu0
      %802 = vmatprep.mubr.bf16.mxu0 0
      %803 = vmatmul.mubr.bf16.gmra.mrb[0].mxu0 %v744
      %v804 = vpop.f32.mrb[0].mxu0
      %v805 = vadd.f32 %v684, %v804
      %v806 = vpop.f32.mrb[0].mxu0
      %v807 = vpop.f32.mrb[0].mxu0
      %v808 = vadd.f32 %v687, %v807
      %v809 = vpop.f32.mrb[0].mxu0
      %810 = vdwg.mxu0
      %v811 = vld [vmem:[%s427] sm:$0xe]
      %v812 = vld [vmem:[%s427 + $0x8] sm:$0xe]
      %v813 = vld [vmem:[%s427 + $0x10] sm:$0xe]
      %v814 = vld [vmem:[%s427 + $0x18] sm:$0xe]
      %v815 = vld [vmem:[%s427 + $0x20] sm:$0xe]
      %v816 = vld [vmem:[%s427 + $0x28] sm:$0xe]
      %v817 = vld [vmem:[%s427 + $0x30] sm:$0xe]
      %v818 = vld [vmem:[%s427 + $0x38] sm:$0xe]
      %vm835 = vcmask 1042432
      %vm836 = vcmask 1046532
      %vm837 = vmor %vm835, %vm836
      %v838 = vrot.slane %v811, 5
      %v839 = vrot.slane %v838, 4
      %v840 = vrot.slane %v444, 5
      %v841 = vsel %vm837, %v839, %v840
      %v842 = vrot.slane %v812, 5
      %v843 = vrot.slane %v842, 4
      %v844 = vrot.slane %v445, 5
      %v845 = vsel %vm837, %v843, %v844
      %v846 = vrot.slane %v813, 5
      %v847 = vrot.slane %v846, 4
      %v848 = vrot.slane %v446, 5
      %v849 = vsel %vm837, %v847, %v848
      %v850 = vrot.slane %v814, 5
      %v851 = vrot.slane %v850, 4
      %v852 = vrot.slane %v447, 5
      %v853 = vsel %vm837, %v851, %v852
      %v854 = vrot.slane %v815, 5
      %v855 = vrot.slane %v854, 4
      %v856 = vrot.slane %v448, 5
      %v857 = vsel %vm837, %v855, %v856
      %v858 = vrot.slane %v816, 5
      %v859 = vrot.slane %v858, 4
      %v860 = vrot.slane %v449, 5
      %v861 = vsel %vm837, %v859, %v860
      %v862 = vrot.slane %v817, 5
      %v863 = vrot.slane %v862, 4
      %v864 = vrot.slane %v450, 5
      %v865 = vsel %vm837, %v863, %v864
      %v866 = vrot.slane %v818, 5
      %v867 = vrot.slane %v866, 4
      %v868 = vrot.slane %v451, 5
      %v869 = vsel %vm837, %v867, %v868
      %s870 = scalar_lea.vmem %s2, 64
      %v871 = vld [vmem:[%s870] sm:$0xf]
      %v872 = vld [vmem:[%s870 + $0x4] sm:$0xf]
      %v873 = vld [vmem:[%s870 + $0x8] sm:$0xf]
      %v874 = vld [vmem:[%s870 + $0xc] sm:$0xf]
      %v875 = vld [vmem:[%s870 + $0x10] sm:$0xf]
      %v876 = vld [vmem:[%s870 + $0x14] sm:$0xf]
      %v877 = vld [vmem:[%s870 + $0x18] sm:$0xf]
      %v878 = vld [vmem:[%s870 + $0x1c] sm:$0xf]
      %v879 = vunpack.c.l.b16 %v841
      %v880 = vunpack.c.l.b16 %v845
      %v881 = vunpack.c.l.b16 %v849
      %v882 = vunpack.c.l.b16 %v853
      %v883 = vunpack.c.l.b16 %v857
      %v884 = vunpack.c.l.b16 %v861
      %v885 = vunpack.c.l.b16 %v865
      %v886 = vunpack.c.l.b16 %v869
      %v887 = vpack.c.b16 %v880, %v879
      %v888 = vpack.c.b16 %v882, %v881
      %v889 = vpack.c.b16 %v884, %v883
      %v890 = vpack.c.b16 %v886, %v885
      %v899 = vunpack.c.l.b16 %v871
      %v900 = vunpack.c.l.b16 %v872
      %v901 = vunpack.c.l.b16 %v873
      %v902 = vunpack.c.l.b16 %v874
      %v903 = vunpack.c.l.b16 %v875
      %v904 = vunpack.c.l.b16 %v876
      %v905 = vunpack.c.l.b16 %v877
      %v906 = vunpack.c.l.b16 %v878
      %v907 = vpack.c.b16 %v900, %v899
      %v908 = vpack.c.b16 %v902, %v901
      %v909 = vpack.c.b16 %v904, %v903
      %v910 = vpack.c.b16 %v906, %v905
      %v916 = vsel %vm612, %v887, 0
      %v919 = vsel %vm612, %v888, 0
      %v922 = vsel %vm612, %v889, 0
      %v925 = vsel %vm612, %v890, 0
      %927 = vmatprep.subr.bf16.mxu0 0
      %928 = vmatpush1.bf16.msra.mxu0 %v907
      %929 = vmatprep.subr.bf16.mxu0 0
      %930 = vmatpush1.bf16.msra.mxu0 %v908
      %931 = vmatprep.subr.bf16.mxu0 0
      %932 = vmatpush1.bf16.msra.mxu0 %v909
      %933 = vmatprep.subr.bf16.mxu0 0
      %934 = vmatpush1.bf16.msra.mxu0 %v910
      %935 = vmatprep.subr.bf16.mxu0 0
      %936 = vmatpush1.bf16.msra.mxu0 0
      %937 = vmatprep.subr.bf16.mxu0 0
      %938 = vmatpush1.bf16.msra.mxu0 0
      %939 = vmatprep.subr.bf16.mxu0 0
      %940 = vmatpush1.bf16.msra.mxu0 0
      %941 = vmatprep.subr.bf16.mxu0 0
      %942 = vmatpush1.bf16.msra.mxu0 0
      %943 = vmatprep.subr.bf16.mxu0 0
      %944 = vmatpush1.bf16.msra.mxu0 0
      %945 = vmatprep.subr.bf16.mxu0 0
      %946 = vmatpush1.bf16.msra.mxu0 0
      %947 = vmatprep.subr.bf16.mxu0 0
      %948 = vmatpush1.bf16.msra.mxu0 0
      %949 = vmatprep.subr.bf16.mxu0 0
      %950 = vmatpush1.bf16.msra.mxu0 0
      %951 = vmatprep.subr.bf16.mxu0 0
      %952 = vmatpush1.bf16.msra.mxu0 0
      %953 = vmatprep.subr.bf16.mxu0 0
      %954 = vmatpush1.bf16.msra.mxu0 0
      %955 = vmatprep.subr.bf16.mxu0 0
      %956 = vmatpush1.bf16.msra.mxu0 0
      %957 = vmatprep.subr.bf16.mxu0 0
      %958 = vmatpush1.bf16.msra.mxu0 0
      %959 = vmatprep.mubr.bf16.mxu0 0
      %960 = vmatmul.mubr.bf16.gmra.mrb[0].mxu0 %v916
      %v961 = vpop.f32.mrb[0].mxu0
      %v962 = vadd.f32 0.0, %v961
      %v963 = vpop.f32.mrb[0].mxu0
      %v964 = vpop.f32.mrb[0].mxu0
      %v965 = vadd.f32 0.0, %v964
      %v966 = vpop.f32.mrb[0].mxu0
      %967 = vmatprep.mubr.bf16.mxu0 0
      %968 = vmatmul.mubr.bf16.gmra.mrb[0].mxu0 %v919
      %v969 = vpop.f32.mrb[0].mxu0
      %v970 = vadd.f32 0.0, %v969
      %v971 = vpop.f32.mrb[0].mxu0
      %v972 = vpop.f32.mrb[0].mxu0
      %v973 = vadd.f32 0.0, %v972
      %v974 = vpop.f32.mrb[0].mxu0
      %975 = vmatprep.mubr.bf16.mxu0 0
      %976 = vmatmul.mubr.bf16.gmra.mrb[0].mxu0 %v922
      %v977 = vpop.f32.mrb[0].mxu0
      %v978 = vadd.f32 0.0, %v977
      %v979 = vpop.f32.mrb[0].mxu0
      %v980 = vpop.f32.mrb[0].mxu0
      %v981 = vadd.f32 0.0, %v980
      %v982 = vpop.f32.mrb[0].mxu0
      %983 = vmatprep.mubr.bf16.mxu0 0
      %984 = vmatmul.mubr.bf16.gmra.mrb[0].mxu0 %v925
      %v985 = vpop.f32.mrb[0].mxu0
      %v986 = vadd.f32 0.0, %v985
      %v987 = vpop.f32.mrb[0].mxu0
      %v988 = vpop.f32.mrb[0].mxu0
      %v989 = vadd.f32 0.0, %v988
      %v990 = vpop.f32.mrb[0].mxu0
      %991 = vdwg.mxu0
      %v992 = vadd.f32 %v781, %v962
      %v993 = vadd.f32 %v784, %v965
      %v994 = vadd.f32 %v789, %v970
      %v995 = vadd.f32 %v792, %v973
      %v996 = vadd.f32 %v797, %v978
      %v997 = vadd.f32 %v800, %v981
      %v998 = vadd.f32 %v805, %v986
      %v999 = vadd.f32 %v808, %v989
      %s1000 = sadd.s32 %s424, 1
      %s1001 = smul.u32 %s1000, 2
      %s1002 = smul.addr %s1001, 4
      %s1003 = scalar_lea.vmem [#allocation2], %s1002
      %v1004 = vld [vmem:[%s1003] sm:$0xf]
      %v1005 = vld [vmem:[%s1003 + $0x8] sm:$0xf]
      %v1006 = vld [vmem:[%s1003 + $0x10] sm:$0xf]
      %v1007 = vld [vmem:[%s1003 + $0x18] sm:$0xf]
      %v1008 = vld [vmem:[%s1003 + $0x20] sm:$0xf]
      %v1009 = vld [vmem:[%s1003 + $0x28] sm:$0xf]
      %v1010 = vld [vmem:[%s1003 + $0x30] sm:$0xf]
      %v1011 = vld [vmem:[%s1003 + $0x38] sm:$0xf]
      %s1012 = scalar_lea.vmem %s2, 96
      %v1013 = vld [vmem:[%s1012] sm:$0xf]
      %v1014 = vld [vmem:[%s1012 + $0x4] sm:$0xf]
      %v1015 = vld [vmem:[%s1012 + $0x8] sm:$0xf]
      %v1016 = vld [vmem:[%s1012 + $0xc] sm:$0xf]
      %v1017 = vld [vmem:[%s1012 + $0x10] sm:$0xf]
      %v1018 = vld [vmem:[%s1012 + $0x14] sm:$0xf]
      %v1019 = vld [vmem:[%s1012 + $0x18] sm:$0xf]
      %v1020 = vld [vmem:[%s1012 + $0x1c] sm:$0xf]
      %v1029 = vunpack.c.l.b16 %v1004
      %v1030 = vunpack.c.l.b16 %v1005
      %v1031 = vunpack.c.l.b16 %v1006
      %v1032 = vunpack.c.l.b16 %v1007
      %v1033 = vunpack.c.l.b16 %v1008
      %v1034 = vunpack.c.l.b16 %v1009
      %v1035 = vunpack.c.l.b16 %v1010
      %v1036 = vunpack.c.l.b16 %v1011
      %v1037 = vpack.c.b16 %v1030, %v1029
      %v1038 = vpack.c.b16 %v1032, %v1031
      %v1039 = vpack.c.b16 %v1034, %v1033
      %v1040 = vpack.c.b16 %v1036, %v1035
      %v1049 = vunpack.c.l.b16 %v1013
      %v1050 = vunpack.c.l.b16 %v1014
      %v1051 = vunpack.c.l.b16 %v1015
      %v1052 = vunpack.c.l.b16 %v1016
      %v1053 = vunpack.c.l.b16 %v1017
      %v1054 = vunpack.c.l.b16 %v1018
      %v1055 = vunpack.c.l.b16 %v1019
      %v1056 = vunpack.c.l.b16 %v1020
      %v1057 = vpack.c.b16 %v1050, %v1049
      %v1058 = vpack.c.b16 %v1052, %v1051
      %v1059 = vpack.c.b16 %v1054, %v1053
      %v1060 = vpack.c.b16 %v1056, %v1055
      %v1066 = vsel %vm612, %v1037, 0
      %v1069 = vsel %vm612, %v1038, 0
      %v1072 = vsel %vm612, %v1039, 0
      %v1075 = vsel %vm612, %v1040, 0
      %1077 = vmatprep.subr.bf16.mxu0 0
      %1078 = vmatpush1.bf16.msra.mxu0 %v1057
      %1079 = vmatprep.subr.bf16.mxu0 0
      %1080 = vmatpush1.bf16.msra.mxu0 %v1058
      %1081 = vmatprep.subr.bf16.mxu0 0
      %1082 = vmatpush1.bf16.msra.mxu0 %v1059
      %1083 = vmatprep.subr.bf16.mxu0 0
      %1084 = vmatpush1.bf16.msra.mxu0 %v1060
      %1085 = vmatprep.subr.bf16.mxu0 0
      %1086 = vmatpush1.bf16.msra.mxu0 0
      %1087 = vmatprep.subr.bf16.mxu0 0
      %1088 = vmatpush1.bf16.msra.mxu0 0
      %1089 = vmatprep.subr.bf16.mxu0 0
      %1090 = vmatpush1.bf16.msra.mxu0 0
      %1091 = vmatprep.subr.bf16.mxu0 0
      %1092 = vmatpush1.bf16.msra.mxu0 0
      %1093 = vmatprep.subr.bf16.mxu0 0
      %1094 = vmatpush1.bf16.msra.mxu0 0
      %1095 = vmatprep.subr.bf16.mxu0 0
      %1096 = vmatpush1.bf16.msra.mxu0 0
      %1097 = vmatprep.subr.bf16.mxu0 0
      %1098 = vmatpush1.bf16.msra.mxu0 0
      %1099 = vmatprep.subr.bf16.mxu0 0
      %1100 = vmatpush1.bf16.msra.mxu0 0
      %1101 = vmatprep.subr.bf16.mxu0 0
      %1102 = vmatpush1.bf16.msra.mxu0 0
      %1103 = vmatprep.subr.bf16.mxu0 0
      %1104 = vmatpush1.bf16.msra.mxu0 0
      %1105 = vmatprep.subr.bf16.mxu0 0
      %1106 = vmatpush1.bf16.msra.mxu0 0
      %1107 = vmatprep.subr.bf16.mxu0 0
      %1108 = vmatpush1.bf16.msra.mxu0 0
      %1109 = vmatprep.mubr.bf16.mxu0 0
      %1110 = vmatmul.mubr.bf16.gmra.mrb[0].mxu0 %v1066
      %v1111 = vpop.f32.mrb[0].mxu0
      %v1112 = vadd.f32 0.0, %v1111
      %v1113 = vpop.f32.mrb[0].mxu0
      %v1114 = vpop.f32.mrb[0].mxu0
      %v1115 = vadd.f32 0.0, %v1114
      %v1116 = vpop.f32.mrb[0].mxu0
      %1117 = vmatprep.mubr.bf16.mxu0 0
      %1118 = vmatmul.mubr.bf16.gmra.mrb[0].mxu0 %v1069
      %v1119 = vpop.f32.mrb[0].mxu0
      %v1120 = vadd.f32 0.0, %v1119
      %v1121 = vpop.f32.mrb[0].mxu0
      %v1122 = vpop.f32.mrb[0].mxu0
      %v1123 = vadd.f32 0.0, %v1122
      %v1124 = vpop.f32.mrb[0].mxu0
      %1125 = vmatprep.mubr.bf16.mxu0 0
      %1126 = vmatmul.mubr.bf16.gmra.mrb[0].mxu0 %v1072
      %v1127 = vpop.f32.mrb[0].mxu0
      %v1128 = vadd.f32 0.0, %v1127
      %v1129 = vpop.f32.mrb[0].mxu0
      %v1130 = vpop.f32.mrb[0].mxu0
      %v1131 = vadd.f32 0.0, %v1130
      %v1132 = vpop.f32.mrb[0].mxu0
      %1133 = vmatprep.mubr.bf16.mxu0 0
      %1134 = vmatmul.mubr.bf16.gmra.mrb[0].mxu0 %v1075
      %v1135 = vpop.f32.mrb[0].mxu0
      %v1136 = vadd.f32 0.0, %v1135
      %v1137 = vpop.f32.mrb[0].mxu0
      %v1138 = vpop.f32.mrb[0].mxu0
      %v1139 = vadd.f32 0.0, %v1138
      %v1140 = vpop.f32.mrb[0].mxu0
      %1141 = vdwg.mxu0
      %v1142 = vadd.f32 %v992, %v1112
      %v1143 = vadd.f32 %v993, %v1115
      %v1144 = vadd.f32 %v994, %v1120
      %v1145 = vadd.f32 %v995, %v1123
      %v1146 = vadd.f32 %v996, %v1128
      %v1147 = vadd.f32 %v997, %v1131
      %v1148 = vadd.f32 %v998, %v1136
      %v1149 = vadd.f32 %v999, %v1139
      %v1150 = vld [vmem:[%s1003] sm:$0xf]
      %v1151 = vld [vmem:[%s1003 + $0x4] sm:$0x1]
      %v1152 = vld [vmem:[%s1003 + $0x8] sm:$0xf]
      %v1153 = vld [vmem:[%s1003 + $0xc] sm:$0x1]
      %v1154 = vld [vmem:[%s1003 + $0x10] sm:$0xf]
      %v1155 = vld [vmem:[%s1003 + $0x14] sm:$0x1]
      %v1156 = vld [vmem:[%s1003 + $0x18] sm:$0xf]
      %v1157 = vld [vmem:[%s1003 + $0x1c] sm:$0x1]
      %v1158 = vld [vmem:[%s1003 + $0x20] sm:$0xf]
      %v1159 = vld [vmem:[%s1003 + $0x24] sm:$0x1]
      %v1160 = vld [vmem:[%s1003 + $0x28] sm:$0xf]
      %v1161 = vld [vmem:[%s1003 + $0x2c] sm:$0x1]
      %v1162 = vld [vmem:[%s1003 + $0x30] sm:$0xf]
      %v1163 = vld [vmem:[%s1003 + $0x34] sm:$0x1]
      %v1164 = vld [vmem:[%s1003 + $0x38] sm:$0xf]
      %v1165 = vld [vmem:[%s1003 + $0x3c] sm:$0x1]
      %v1167 = vshrl.u32 %v1150, 16
      %v1169 = vrot.slane %v1167, 4
      %v1170 = vshll.u32 %v1150, 16
      %v1172 = vrot.slane %v1170, 5
      %v1173 = vor.u32 %v1169, %v1172
      %v1174 = vrot.slane %v1173, 4
      %v1176 = vshll.u32 %v1151, 16
      %v1178 = vrot.slane %v1176, 5
      %v1179 = vsel %vm454, %v1174, %v1178
      %v1181 = vshrl.u32 %v1152, 16
      %v1183 = vrot.slane %v1181, 4
      %v1184 = vshll.u32 %v1152, 16
      %v1186 = vrot.slane %v1184, 5
      %v1187 = vor.u32 %v1183, %v1186
      %v1188 = vrot.slane %v1187, 4
      %v1190 = vshll.u32 %v1153, 16
      %v1192 = vrot.slane %v1190, 5
      %v1193 = vsel %vm454, %v1188, %v1192
      %v1195 = vshrl.u32 %v1154, 16
      %v1197 = vrot.slane %v1195, 4
      %v1198 = vshll.u32 %v1154, 16
      %v1200 = vrot.slane %v1198, 5
      %v1201 = vor.u32 %v1197, %v1200
      %v1202 = vrot.slane %v1201, 4
      %v1204 = vshll.u32 %v1155, 16
      %v1206 = vrot.slane %v1204, 5
      %v1207 = vsel %vm454, %v1202, %v1206
      %v1209 = vshrl.u32 %v1156, 16
      %v1211 = vrot.slane %v1209, 4
      %v1212 = vshll.u32 %v1156, 16
      %v1214 = vrot.slane %v1212, 5
      %v1215 = vor.u32 %v1211, %v1214
      %v1216 = vrot.slane %v1215, 4
      %v1218 = vshll.u32 %v1157, 16
      %v1220 = vrot.slane %v1218, 5
      %v1221 = vsel %vm454, %v1216, %v1220
      %v1223 = vshrl.u32 %v1158, 16
      %v1225 = vrot.slane %v1223, 4
      %v1226 = vshll.u32 %v1158, 16
      %v1228 = vrot.slane %v1226, 5
      %v1229 = vor.u32 %v1225, %v1228
      %v1230 = vrot.slane %v1229, 4
      %v1232 = vshll.u32 %v1159, 16
      %v1234 = vrot.slane %v1232, 5
      %v1235 = vsel %vm454, %v1230, %v1234
      %v1237 = vshrl.u32 %v1160, 16
      %v1239 = vrot.slane %v1237, 4
      %v1240 = vshll.u32 %v1160, 16
      %v1242 = vrot.slane %v1240, 5
      %v1243 = vor.u32 %v1239, %v1242
      %v1244 = vrot.slane %v1243, 4
      %v1246 = vshll.u32 %v1161, 16
      %v1248 = vrot.slane %v1246, 5
      %v1249 = vsel %vm454, %v1244, %v1248
      %v1251 = vshrl.u32 %v1162, 16
      %v1253 = vrot.slane %v1251, 4
      %v1254 = vshll.u32 %v1162, 16
      %v1256 = vrot.slane %v1254, 5
      %v1257 = vor.u32 %v1253, %v1256
      %v1258 = vrot.slane %v1257, 4
      %v1260 = vshll.u32 %v1163, 16
      %v1262 = vrot.slane %v1260, 5
      %v1263 = vsel %vm454, %v1258, %v1262
      %v1265 = vshrl.u32 %v1164, 16
      %v1267 = vrot.slane %v1265, 4
      %v1268 = vshll.u32 %v1164, 16
      %v1270 = vrot.slane %v1268, 5
      %v1271 = vor.u32 %v1267, %v1270
      %v1272 = vrot.slane %v1271, 4
      %v1274 = vshll.u32 %v1165, 16
      %v1276 = vrot.slane %v1274, 5
      %v1277 = vsel %vm454, %v1272, %v1276
      %s1278 = scalar_lea.vmem %s2, 128
      %v1279 = vld [vmem:[%s1278] sm:$0xf]
      %v1280 = vld [vmem:[%s1278 + $0x4] sm:$0xf]
      %v1281 = vld [vmem:[%s1278 + $0x8] sm:$0xf]
      %v1282 = vld [vmem:[%s1278 + $0xc] sm:$0xf]
      %v1283 = vld [vmem:[%s1278 + $0x10] sm:$0xf]
      %v1284 = vld [vmem:[%s1278 + $0x14] sm:$0xf]
      %v1285 = vld [vmem:[%s1278 + $0x18] sm:$0xf]
      %v1286 = vld [vmem:[%s1278 + $0x1c] sm:$0xf]
      %v1287 = vunpack.c.l.b16 %v1179
      %v1288 = vunpack.c.l.b16 %v1193
      %v1289 = vunpack.c.l.b16 %v1207
      %v1290 = vunpack.c.l.b16 %v1221
      %v1291 = vunpack.c.l.b16 %v1235
      %v1292 = vunpack.c.l.b16 %v1249
      %v1293 = vunpack.c.l.b16 %v1263
      %v1294 = vunpack.c.l.b16 %v1277
      %v1295 = vpack.c.b16 %v1288, %v1287
      %v1296 = vpack.c.b16 %v1290, %v1289
      %v1297 = vpack.c.b16 %v1292, %v1291
      %v1298 = vpack.c.b16 %v1294, %v1293
      %v1307 = vunpack.c.l.b16 %v1279
      %v1308 = vunpack.c.l.b16 %v1280
      %v1309 = vunpack.c.l.b16 %v1281
      %v1310 = vunpack.c.l.b16 %v1282
      %v1311 = vunpack.c.l.b16 %v1283
      %v1312 = vunpack.c.l.b16 %v1284
      %v1313 = vunpack.c.l.b16 %v1285
      %v1314 = vunpack.c.l.b16 %v1286
      %v1315 = vpack.c.b16 %v1308, %v1307
      %v1316 = vpack.c.b16 %v1310, %v1309
      %v1317 = vpack.c.b16 %v1312, %v1311
      %v1318 = vpack.c.b16 %v1314, %v1313
      %v1324 = vsel %vm612, %v1295, 0
      %v1327 = vsel %vm612, %v1296, 0
      %v1330 = vsel %vm612, %v1297, 0
      %v1333 = vsel %vm612, %v1298, 0
      %1335 = vmatprep.subr.bf16.mxu0 0
      %1336 = vmatpush1.bf16.msra.mxu0 %v1315
      %1337 = vmatprep.subr.bf16.mxu0 0
      %1338 = vmatpush1.bf16.msra.mxu0 %v1316
      %1339 = vmatprep.subr.bf16.mxu0 0
      %1340 = vmatpush1.bf16.msra.mxu0 %v1317
      %1341 = vmatprep.subr.bf16.mxu0 0
      %1342 = vmatpush1.bf16.msra.mxu0 %v1318
      %1343 = vmatprep.subr.bf16.mxu0 0
      %1344 = vmatpush1.bf16.msra.mxu0 0
      %1345 = vmatprep.subr.bf16.mxu0 0
      %1346 = vmatpush1.bf16.msra.mxu0 0
      %1347 = vmatprep.subr.bf16.mxu0 0
      %1348 = vmatpush1.bf16.msra.mxu0 0
      %1349 = vmatprep.subr.bf16.mxu0 0
      %1350 = vmatpush1.bf16.msra.mxu0 0
      %1351 = vmatprep.subr.bf16.mxu0 0
      %1352 = vmatpush1.bf16.msra.mxu0 0
      %1353 = vmatprep.subr.bf16.mxu0 0
      %1354 = vmatpush1.bf16.msra.mxu0 0
      %1355 = vmatprep.subr.bf16.mxu0 0
      %1356 = vmatpush1.bf16.msra.mxu0 0
      %1357 = vmatprep.subr.bf16.mxu0 0
      %1358 = vmatpush1.bf16.msra.mxu0 0
      %1359 = vmatprep.subr.bf16.mxu0 0
      %1360 = vmatpush1.bf16.msra.mxu0 0
      %1361 = vmatprep.subr.bf16.mxu0 0
      %1362 = vmatpush1.bf16.msra.mxu0 0
      %1363 = vmatprep.subr.bf16.mxu0 0
      %1364 = vmatpush1.bf16.msra.mxu0 0
      %1365 = vmatprep.subr.bf16.mxu0 0
      %1366 = vmatpush1.bf16.msra.mxu0 0
      %1367 = vmatprep.mubr.bf16.mxu0 0
      %1368 = vmatmul.mubr.bf16.gmra.mrb[0].mxu0 %v1324
      %v1369 = vpop.f32.mrb[0].mxu0
      %v1370 = vadd.f32 0.0, %v1369
      %v1371 = vpop.f32.mrb[0].mxu0
      %v1372 = vpop.f32.mrb[0].mxu0
      %v1373 = vadd.f32 0.0, %v1372
      %v1374 = vpop.f32.mrb[0].mxu0
      %1375 = vmatprep.mubr.bf16.mxu0 0
      %1376 = vmatmul.mubr.bf16.gmra.mrb[0].mxu0 %v1327
      %v1377 = vpop.f32.mrb[0].mxu0
      %v1378 = vadd.f32 0.0, %v1377
      %v1379 = vpop.f32.mrb[0].mxu0
      %v1380 = vpop.f32.mrb[0].mxu0
      %v1381 = vadd.f32 0.0, %v1380
      %v1382 = vpop.f32.mrb[0].mxu0
      %1383 = vmatprep.mubr.bf16.mxu0 0
      %1384 = vmatmul.mubr.bf16.gmra.mrb[0].mxu0 %v1330
      %v1385 = vpop.f32.mrb[0].mxu0
      %v1386 = vadd.f32 0.0, %v1385
      %v1387 = vpop.f32.mrb[0].mxu0
      %v1388 = vpop.f32.mrb[0].mxu0
      %v1389 = vadd.f32 0.0, %v1388
      %v1390 = vpop.f32.mrb[0].mxu0
      %1391 = vmatprep.mubr.bf16.mxu0 0
      %1392 = vmatmul.mubr.bf16.gmra.mrb[0].mxu0 %v1333
      %v1393 = vpop.f32.mrb[0].mxu0
      %v1394 = vadd.f32 0.0, %v1393
      %v1395 = vpop.f32.mrb[0].mxu0
      %v1396 = vpop.f32.mrb[0].mxu0
      %v1397 = vadd.f32 0.0, %v1396
      %v1398 = vpop.f32.mrb[0].mxu0
      %1399 = vdwg.mxu0
      %v1400 = vadd.f32 %v1142, %v1370
      %v1401 = vadd.f32 %v1143, %v1373
      %v1402 = vadd.f32 %v1144, %v1378
      %v1403 = vadd.f32 %v1145, %v1381
      %v1404 = vadd.f32 %v1146, %v1386
      %v1405 = vadd.f32 %v1147, %v1389
      %v1406 = vadd.f32 %v1148, %v1394
      %v1407 = vadd.f32 %v1149, %v1397
      %v1408 = vld [vmem:[%s1003] sm:$0xe]
      %v1409 = vld [vmem:[%s1003 + $0x8] sm:$0xe]
      %v1410 = vld [vmem:[%s1003 + $0x10] sm:$0xe]
      %v1411 = vld [vmem:[%s1003 + $0x18] sm:$0xe]
      %v1412 = vld [vmem:[%s1003 + $0x20] sm:$0xe]
      %v1413 = vld [vmem:[%s1003 + $0x28] sm:$0xe]
      %v1414 = vld [vmem:[%s1003 + $0x30] sm:$0xe]
      %v1415 = vld [vmem:[%s1003 + $0x38] sm:$0xe]
      %v1432 = vrot.slane %v1408, 5
      %v1433 = vrot.slane %v1432, 4
      %v1434 = vrot.slane %v1151, 5
      %v1435 = vsel %vm837, %v1433, %v1434
      %v1436 = vrot.slane %v1409, 5
      %v1437 = vrot.slane %v1436, 4
      %v1438 = vrot.slane %v1153, 5
      %v1439 = vsel %vm837, %v1437, %v1438
      %v1440 = vrot.slane %v1410, 5
      %v1441 = vrot.slane %v1440, 4
      %v1442 = vrot.slane %v1155, 5
      %v1443 = vsel %vm837, %v1441, %v1442
      %v1444 = vrot.slane %v1411, 5
      %v1445 = vrot.slane %v1444, 4
      %v1446 = vrot.slane %v1157, 5
      %v1447 = vsel %vm837, %v1445, %v1446
      %v1448 = vrot.slane %v1412, 5
      %v1449 = vrot.slane %v1448, 4
      %v1450 = vrot.slane %v1159, 5
      %v1451 = vsel %vm837, %v1449, %v1450
      %v1452 = vrot.slane %v1413, 5
      %v1453 = vrot.slane %v1452, 4
      %v1454 = vrot.slane %v1161, 5
      %v1455 = vsel %vm837, %v1453, %v1454
      %v1456 = vrot.slane %v1414, 5
      %v1457 = vrot.slane %v1456, 4
      %v1458 = vrot.slane %v1163, 5
      %v1459 = vsel %vm837, %v1457, %v1458
      %v1460 = vrot.slane %v1415, 5
      %v1461 = vrot.slane %v1460, 4
      %v1462 = vrot.slane %v1165, 5
      %v1463 = vsel %vm837, %v1461, %v1462
      %s1464 = scalar_lea.vmem %s2, 160
      %v1465 = vld [vmem:[%s1464] sm:$0xf]
      %v1466 = vld [vmem:[%s1464 + $0x4] sm:$0xf]
      %v1467 = vld [vmem:[%s1464 + $0x8] sm:$0xf]
      %v1468 = vld [vmem:[%s1464 + $0xc] sm:$0xf]
      %v1469 = vld [vmem:[%s1464 + $0x10] sm:$0xf]
      %v1470 = vld [vmem:[%s1464 + $0x14] sm:$0xf]
      %v1471 = vld [vmem:[%s1464 + $0x18] sm:$0xf]
      %v1472 = vld [vmem:[%s1464 + $0x1c] sm:$0xf]
      %v1473 = vunpack.c.l.b16 %v1435
      %v1474 = vunpack.c.l.b16 %v1439
      %v1475 = vunpack.c.l.b16 %v1443
      %v1476 = vunpack.c.l.b16 %v1447
      %v1477 = vunpack.c.l.b16 %v1451
      %v1478 = vunpack.c.l.b16 %v1455
      %v1479 = vunpack.c.l.b16 %v1459
      %v1480 = vunpack.c.l.b16 %v1463
      %v1481 = vpack.c.b16 %v1474, %v1473
      %v1482 = vpack.c.b16 %v1476, %v1475
      %v1483 = vpack.c.b16 %v1478, %v1477
      %v1484 = vpack.c.b16 %v1480, %v1479
      %v1493 = vunpack.c.l.b16 %v1465
      %v1494 = vunpack.c.l.b16 %v1466
      %v1495 = vunpack.c.l.b16 %v1467
      %v1496 = vunpack.c.l.b16 %v1468
      %v1497 = vunpack.c.l.b16 %v1469
      %v1498 = vunpack.c.l.b16 %v1470
      %v1499 = vunpack.c.l.b16 %v1471
      %v1500 = vunpack.c.l.b16 %v1472
      %v1501 = vpack.c.b16 %v1494, %v1493
      %v1502 = vpack.c.b16 %v1496, %v1495
      %v1503 = vpack.c.b16 %v1498, %v1497
      %v1504 = vpack.c.b16 %v1500, %v1499
      %v1510 = vsel %vm612, %v1481, 0
      %v1513 = vsel %vm612, %v1482, 0
      %v1516 = vsel %vm612, %v1483, 0
      %v1519 = vsel %vm612, %v1484, 0
      %1521 = vmatprep.subr.bf16.mxu0 0
      %1522 = vmatpush1.bf16.msra.mxu0 %v1501
      %1523 = vmatprep.subr.bf16.mxu0 0
      %1524 = vmatpush1.bf16.msra.mxu0 %v1502
      %1525 = vmatprep.subr.bf16.mxu0 0
      %1526 = vmatpush1.bf16.msra.mxu0 %v1503
      %1527 = vmatprep.subr.bf16.mxu0 0
      %1528 = vmatpush1.bf16.msra.mxu0 %v1504
      %1529 = vmatprep.subr.bf16.mxu0 0
      %1530 = vmatpush1.bf16.msra.mxu0 0
      %1531 = vmatprep.subr.bf16.mxu0 0
      %1532 = vmatpush1.bf16.msra.mxu0 0
      %1533 = vmatprep.subr.bf16.mxu0 0
      %1534 = vmatpush1.bf16.msra.mxu0 0
      %1535 = vmatprep.subr.bf16.mxu0 0
      %1536 = vmatpush1.bf16.msra.mxu0 0
      %1537 = vmatprep.subr.bf16.mxu0 0
      %1538 = vmatpush1.bf16.msra.mxu0 0
      %1539 = vmatprep.subr.bf16.mxu0 0
      %1540 = vmatpush1.bf16.msra.mxu0 0
      %1541 = vmatprep.subr.bf16.mxu0 0
      %1542 = vmatpush1.bf16.msra.mxu0 0
      %1543 = vmatprep.subr.bf16.mxu0 0
      %1544 = vmatpush1.bf16.msra.mxu0 0
      %1545 = vmatprep.subr.bf16.mxu0 0
      %1546 = vmatpush1.bf16.msra.mxu0 0
      %1547 = vmatprep.subr.bf16.mxu0 0
      %1548 = vmatpush1.bf16.msra.mxu0 0
      %1549 = vmatprep.subr.bf16.mxu0 0
      %1550 = vmatpush1.bf16.msra.mxu0 0
      %1551 = vmatprep.subr.bf16.mxu0 0
      %1552 = vmatpush1.bf16.msra.mxu0 0
      %1553 = vmatprep.mubr.bf16.mxu0 0
      %1554 = vmatmul.mubr.bf16.gmra.mrb[0].mxu0 %v1510
      %v1555 = vpop.f32.mrb[0].mxu0
      %v1556 = vadd.f32 0.0, %v1555
      %v1557 = vpop.f32.mrb[0].mxu0
      %v1558 = vpop.f32.mrb[0].mxu0
      %v1559 = vadd.f32 0.0, %v1558
      %v1560 = vpop.f32.mrb[0].mxu0
      %1561 = vmatprep.mubr.bf16.mxu0 0
      %1562 = vmatmul.mubr.bf16.gmra.mrb[0].mxu0 %v1513
      %v1563 = vpop.f32.mrb[0].mxu0
      %v1564 = vadd.f32 0.0, %v1563
      %v1565 = vpop.f32.mrb[0].mxu0
      %v1566 = vpop.f32.mrb[0].mxu0
      %v1567 = vadd.f32 0.0, %v1566
      %v1568 = vpop.f32.mrb[0].mxu0
      %1569 = vmatprep.mubr.bf16.mxu0 0
      %1570 = vmatmul.mubr.bf16.gmra.mrb[0].mxu0 %v1516
      %v1571 = vpop.f32.mrb[0].mxu0
      %v1572 = vadd.f32 0.0, %v1571
      %v1573 = vpop.f32.mrb[0].mxu0
      %v1574 = vpop.f32.mrb[0].mxu0
      %v1575 = vadd.f32 0.0, %v1574
      %v1576 = vpop.f32.mrb[0].mxu0
      %1577 = vmatprep.mubr.bf16.mxu0 0
      %1578 = vmatmul.mubr.bf16.gmra.mrb[0].mxu0 %v1519
      %v1579 = vpop.f32.mrb[0].mxu0
      %v1580 = vadd.f32 0.0, %v1579
      %v1581 = vpop.f32.mrb[0].mxu0
      %v1582 = vpop.f32.mrb[0].mxu0
      %v1583 = vadd.f32 0.0, %v1582
      %v1584 = vpop.f32.mrb[0].mxu0
      %1585 = vdwg.mxu0
      %v1586 = vadd.f32 %v1400, %v1556
      %v1587 = vadd.f32 %v1401, %v1559
      %v1588 = vadd.f32 %v1402, %v1564
      %v1589 = vadd.f32 %v1403, %v1567
      %v1590 = vadd.f32 %v1404, %v1572
      %v1591 = vadd.f32 %v1405, %v1575
      %v1592 = vadd.f32 %v1406, %v1580
      %v1593 = vadd.f32 %v1407, %v1583
      %s1594 = sadd.s32 %s424, 2
      %s1595 = smul.u32 %s1594, 2
      %s1596 = smul.addr %s1595, 4
      %s1597 = scalar_lea.vmem [#allocation2], %s1596
      %v1598 = vld [vmem:[%s1597] sm:$0xf]
      %v1599 = vld [vmem:[%s1597 + $0x8] sm:$0xf]
      %v1600 = vld [vmem:[%s1597 + $0x10] sm:$0xf]
      %v1601 = vld [vmem:[%s1597 + $0x18] sm:$0xf]
      %v1602 = vld [vmem:[%s1597 + $0x20] sm:$0xf]
      %v1603 = vld [vmem:[%s1597 + $0x28] sm:$0xf]
      %v1604 = vld [vmem:[%s1597 + $0x30] sm:$0xf]
      %v1605 = vld [vmem:[%s1597 + $0x38] sm:$0xf]
      %s1606 = scalar_lea.vmem %s2, 192
      %v1607 = vld [vmem:[%s1606] sm:$0xf]
      %v1608 = vld [vmem:[%s1606 + $0x4] sm:$0xf]
      %v1609 = vld [vmem:[%s1606 + $0x8] sm:$0xf]
      %v1610 = vld [vmem:[%s1606 + $0xc] sm:$0xf]
      %v1611 = vld [vmem:[%s1606 + $0x10] sm:$0xf]
      %v1612 = vld [vmem:[%s1606 + $0x14] sm:$0xf]
      %v1613 = vld [vmem:[%s1606 + $0x18] sm:$0xf]
      %v1614 = vld [vmem:[%s1606 + $0x1c] sm:$0xf]
      %v1623 = vunpack.c.l.b16 %v1598
      %v1624 = vunpack.c.l.b16 %v1599
      %v1625 = vunpack.c.l.b16 %v1600
      %v1626 = vunpack.c.l.b16 %v1601
      %v1627 = vunpack.c.l.b16 %v1602
      %v1628 = vunpack.c.l.b16 %v1603
      %v1629 = vunpack.c.l.b16 %v1604
      %v1630 = vunpack.c.l.b16 %v1605
      %v1631 = vpack.c.b16 %v1624, %v1623
      %v1632 = vpack.c.b16 %v1626, %v1625
      %v1633 = vpack.c.b16 %v1628, %v1627
      %v1634 = vpack.c.b16 %v1630, %v1629
      %v1643 = vunpack.c.l.b16 %v1607
      %v1644 = vunpack.c.l.b16 %v1608
      %v1645 = vunpack.c.l.b16 %v1609
      %v1646 = vunpack.c.l.b16 %v1610
      %v1647 = vunpack.c.l.b16 %v1611
      %v1648 = vunpack.c.l.b16 %v1612
      %v1649 = vunpack.c.l.b16 %v1613
      %v1650 = vunpack.c.l.b16 %v1614
      %v1651 = vpack.c.b16 %v1644, %v1643
      %v1652 = vpack.c.b16 %v1646, %v1645
      %v1653 = vpack.c.b16 %v1648, %v1647
      %v1654 = vpack.c.b16 %v1650, %v1649
      %v1660 = vsel %vm612, %v1631, 0
      %v1663 = vsel %vm612, %v1632, 0
      %v1666 = vsel %vm612, %v1633, 0
      %v1669 = vsel %vm612, %v1634, 0
      %1671 = vmatprep.subr.bf16.mxu0 0
      %1672 = vmatpush1.bf16.msra.mxu0 %v1651
      %1673 = vmatprep.subr.bf16.mxu0 0
      %1674 = vmatpush1.bf16.msra.mxu0 %v1652
      %1675 = vmatprep.subr.bf16.mxu0 0
      %1676 = vmatpush1.bf16.msra.mxu0 %v1653
      %1677 = vmatprep.subr.bf16.mxu0 0
      %1678 = vmatpush1.bf16.msra.mxu0 %v1654
      %1679 = vmatprep.subr.bf16.mxu0 0
      %1680 = vmatpush1.bf16.msra.mxu0 0
      %1681 = vmatprep.subr.bf16.mxu0 0
      %1682 = vmatpush1.bf16.msra.mxu0 0
      %1683 = vmatprep.subr.bf16.mxu0 0
      %1684 = vmatpush1.bf16.msra.mxu0 0
      %1685 = vmatprep.subr.bf16.mxu0 0
      %1686 = vmatpush1.bf16.msra.mxu0 0
      %1687 = vmatprep.subr.bf16.mxu0 0
      %1688 = vmatpush1.bf16.msra.mxu0 0
      %1689 = vmatprep.subr.bf16.mxu0 0
      %1690 = vmatpush1.bf16.msra.mxu0 0
      %1691 = vmatprep.subr.bf16.mxu0 0
      %1692 = vmatpush1.bf16.msra.mxu0 0
      %1693 = vmatprep.subr.bf16.mxu0 0
      %1694 = vmatpush1.bf16.msra.mxu0 0
      %1695 = vmatprep.subr.bf16.mxu0 0
      %1696 = vmatpush1.bf16.msra.mxu0 0
      %1697 = vmatprep.subr.bf16.mxu0 0
      %1698 = vmatpush1.bf16.msra.mxu0 0
      %1699 = vmatprep.subr.bf16.mxu0 0
      %1700 = vmatpush1.bf16.msra.mxu0 0
      %1701 = vmatprep.subr.bf16.mxu0 0
      %1702 = vmatpush1.bf16.msra.mxu0 0
      %1703 = vmatprep.mubr.bf16.mxu0 0
      %1704 = vmatmul.mubr.bf16.gmra.mrb[0].mxu0 %v1660
      %v1705 = vpop.f32.mrb[0].mxu0
      %v1706 = vadd.f32 0.0, %v1705
      %v1707 = vpop.f32.mrb[0].mxu0
      %v1708 = vpop.f32.mrb[0].mxu0
      %v1709 = vadd.f32 0.0, %v1708
      %v1710 = vpop.f32.mrb[0].mxu0
      %1711 = vmatprep.mubr.bf16.mxu0 0
      %1712 = vmatmul.mubr.bf16.gmra.mrb[0].mxu0 %v1663
      %v1713 = vpop.f32.mrb[0].mxu0
      %v1714 = vadd.f32 0.0, %v1713
      %v1715 = vpop.f32.mrb[0].mxu0
      %v1716 = vpop.f32.mrb[0].mxu0
      %v1717 = vadd.f32 0.0, %v1716
      %v1718 = vpop.f32.mrb[0].mxu0
      %1719 = vmatprep.mubr.bf16.mxu0 0
      %1720 = vmatmul.mubr.bf16.gmra.mrb[0].mxu0 %v1666
      %v1721 = vpop.f32.mrb[0].mxu0
      %v1722 = vadd.f32 0.0, %v1721
      %v1723 = vpop.f32.mrb[0].mxu0
      %v1724 = vpop.f32.mrb[0].mxu0
      %v1725 = vadd.f32 0.0, %v1724
      %v1726 = vpop.f32.mrb[0].mxu0
      %1727 = vmatprep.mubr.bf16.mxu0 0
      %1728 = vmatmul.mubr.bf16.gmra.mrb[0].mxu0 %v1669
      %v1729 = vpop.f32.mrb[0].mxu0
      %v1730 = vadd.f32 0.0, %v1729
      %v1731 = vpop.f32.mrb[0].mxu0
      %v1732 = vpop.f32.mrb[0].mxu0
      %v1733 = vadd.f32 0.0, %v1732
      %v1734 = vpop.f32.mrb[0].mxu0
      %1735 = vdwg.mxu0
      %v1736 = vadd.f32 %v1586, %v1706
      %v1737 = vadd.f32 %v1587, %v1709
      %v1738 = vadd.f32 %v1588, %v1714
      %v1739 = vadd.f32 %v1589, %v1717
      %v1740 = vadd.f32 %v1590, %v1722
      %v1741 = vadd.f32 %v1591, %v1725
      %v1742 = vadd.f32 %v1592, %v1730
      %v1743 = vadd.f32 %v1593, %v1733
      %v1744 = vld [vmem:[%s1597] sm:$0xf]
      %v1745 = vld [vmem:[%s1597 + $0x4] sm:$0x1]
      %v1746 = vld [vmem:[%s1597 + $0x8] sm:$0xf]
      %v1747 = vld [vmem:[%s1597 + $0xc] sm:$0x1]
      %v1748 = vld [vmem:[%s1597 + $0x10] sm:$0xf]
      %v1749 = vld [vmem:[%s1597 + $0x14] sm:$0x1]
      %v1750 = vld [vmem:[%s1597 + $0x18] sm:$0xf]
      %v1751 = vld [vmem:[%s1597 + $0x1c] sm:$0x1]
      %v1752 = vld [vmem:[%s1597 + $0x20] sm:$0xf]
      %v1753 = vld [vmem:[%s1597 + $0x24] sm:$0x1]
      %v1754 = vld [vmem:[%s1597 + $0x28] sm:$0xf]
      %v1755 = vld [vmem:[%s1597 + $0x2c] sm:$0x1]
      %v1756 = vld [vmem:[%s1597 + $0x30] sm:$0xf]
      %v1757 = vld [vmem:[%s1597 + $0x34] sm:$0x1]
      %v1758 = vld [vmem:[%s1597 + $0x38] sm:$0xf]
      %v1759 = vld [vmem:[%s1597 + $0x3c] sm:$0x1]
      %v1761 = vshrl.u32 %v1744, 16
      %v1763 = vrot.slane %v1761, 4
      %v1764 = vshll.u32 %v1744, 16
      %v1766 = vrot.slane %v1764, 5
      %v1767 = vor.u32 %v1763, %v1766
      %v1768 = vrot.slane %v1767, 4
      %v1770 = vshll.u32 %v1745, 16
      %v1772 = vrot.slane %v1770, 5
      %v1773 = vsel %vm454, %v1768, %v1772
      %v1775 = vshrl.u32 %v1746, 16
      %v1777 = vrot.slane %v1775, 4
      %v1778 = vshll.u32 %v1746, 16
      %v1780 = vrot.slane %v1778, 5
      %v1781 = vor.u32 %v1777, %v1780
      %v1782 = vrot.slane %v1781, 4
      %v1784 = vshll.u32 %v1747, 16
      %v1786 = vrot.slane %v1784, 5
      %v1787 = vsel %vm454, %v1782, %v1786
      %v1789 = vshrl.u32 %v1748, 16
      %v1791 = vrot.slane %v1789, 4
      %v1792 = vshll.u32 %v1748, 16
      %v1794 = vrot.slane %v1792, 5
      %v1795 = vor.u32 %v1791, %v1794
      %v1796 = vrot.slane %v1795, 4
      %v1798 = vshll.u32 %v1749, 16
      %v1800 = vrot.slane %v1798, 5
      %v1801 = vsel %vm454, %v1796, %v1800
      %v1803 = vshrl.u32 %v1750, 16
      %v1805 = vrot.slane %v1803, 4
      %v1806 = vshll.u32 %v1750, 16
      %v1808 = vrot.slane %v1806, 5
      %v1809 = vor.u32 %v1805, %v1808
      %v1810 = vrot.slane %v1809, 4
      %v1812 = vshll.u32 %v1751, 16
      %v1814 = vrot.slane %v1812, 5
      %v1815 = vsel %vm454, %v1810, %v1814
      %v1817 = vshrl.u32 %v1752, 16
      %v1819 = vrot.slane %v1817, 4
      %v1820 = vshll.u32 %v1752, 16
      %v1822 = vrot.slane %v1820, 5
      %v1823 = vor.u32 %v1819, %v1822
      %v1824 = vrot.slane %v1823, 4
      %v1826 = vshll.u32 %v1753, 16
      %v1828 = vrot.slane %v1826, 5
      %v1829 = vsel %vm454, %v1824, %v1828
      %v1831 = vshrl.u32 %v1754, 16
      %v1833 = vrot.slane %v1831, 4
      %v1834 = vshll.u32 %v1754, 16
      %v1836 = vrot.slane %v1834, 5
      %v1837 = vor.u32 %v1833, %v1836
      %v1838 = vrot.slane %v1837, 4
      %v1840 = vshll.u32 %v1755, 16
      %v1842 = vrot.slane %v1840, 5
      %v1843 = vsel %vm454, %v1838, %v1842
      %v1845 = vshrl.u32 %v1756, 16
      %v1847 = vrot.slane %v1845, 4
      %v1848 = vshll.u32 %v1756, 16
      %v1850 = vrot.slane %v1848, 5
      %v1851 = vor.u32 %v1847, %v1850
      %v1852 = vrot.slane %v1851, 4
      %v1854 = vshll.u32 %v1757, 16
      %v1856 = vrot.slane %v1854, 5
      %v1857 = vsel %vm454, %v1852, %v1856
      %v1859 = vshrl.u32 %v1758, 16
      %v1861 = vrot.slane %v1859, 4
      %v1862 = vshll.u32 %v1758, 16
      %v1864 = vrot.slane %v1862, 5
      %v1865 = vor.u32 %v1861, %v1864
      %v1866 = vrot.slane %v1865, 4
      %v1868 = vshll.u32 %v1759, 16
      %v1870 = vrot.slane %v1868, 5
      %v1871 = vsel %vm454, %v1866, %v1870
      %s1872 = scalar_lea.vmem %s2, 224
      %v1873 = vld [vmem:[%s1872] sm:$0xf]
      %v1874 = vld [vmem:[%s1872 + $0x4] sm:$0xf]
      %v1875 = vld [vmem:[%s1872 + $0x8] sm:$0xf]
      %v1876 = vld [vmem:[%s1872 + $0xc] sm:$0xf]
      %v1877 = vld [vmem:[%s1872 + $0x10] sm:$0xf]
      %v1878 = vld [vmem:[%s1872 + $0x14] sm:$0xf]
      %v1879 = vld [vmem:[%s1872 + $0x18] sm:$0xf]
      %v1880 = vld [vmem:[%s1872 + $0x1c] sm:$0xf]
      %v1881 = vunpack.c.l.b16 %v1773
      %v1882 = vunpack.c.l.b16 %v1787
      %v1883 = vunpack.c.l.b16 %v1801
      %v1884 = vunpack.c.l.b16 %v1815
      %v1885 = vunpack.c.l.b16 %v1829
      %v1886 = vunpack.c.l.b16 %v1843
      %v1887 = vunpack.c.l.b16 %v1857
      %v1888 = vunpack.c.l.b16 %v1871
      %v1889 = vpack.c.b16 %v1882, %v1881
      %v1890 = vpack.c.b16 %v1884, %v1883
      %v1891 = vpack.c.b16 %v1886, %v1885
      %v1892 = vpack.c.b16 %v1888, %v1887
      %v1901 = vunpack.c.l.b16 %v1873
      %v1902 = vunpack.c.l.b16 %v1874
      %v1903 = vunpack.c.l.b16 %v1875
      %v1904 = vunpack.c.l.b16 %v1876
      %v1905 = vunpack.c.l.b16 %v1877
      %v1906 = vunpack.c.l.b16 %v1878
      %v1907 = vunpack.c.l.b16 %v1879
      %v1908 = vunpack.c.l.b16 %v1880
      %v1909 = vpack.c.b16 %v1902, %v1901
      %v1910 = vpack.c.b16 %v1904, %v1903
      %v1911 = vpack.c.b16 %v1906, %v1905
      %v1912 = vpack.c.b16 %v1908, %v1907
      %v1918 = vsel %vm612, %v1889, 0
      %v1921 = vsel %vm612, %v1890, 0
      %v1924 = vsel %vm612, %v1891, 0
      %v1927 = vsel %vm612, %v1892, 0
      %1929 = vmatprep.subr.bf16.mxu0 0
      %1930 = vmatpush1.bf16.msra.mxu0 %v1909
      %1931 = vmatprep.subr.bf16.mxu0 0
      %1932 = vmatpush1.bf16.msra.mxu0 %v1910
      %1933 = vmatprep.subr.bf16.mxu0 0
      %1934 = vmatpush1.bf16.msra.mxu0 %v1911
      %1935 = vmatprep.subr.bf16.mxu0 0
      %1936 = vmatpush1.bf16.msra.mxu0 %v1912
      %1937 = vmatprep.subr.bf16.mxu0 0
      %1938 = vmatpush1.bf16.msra.mxu0 0
      %1939 = vmatprep.subr.bf16.mxu0 0
      %1940 = vmatpush1.bf16.msra.mxu0 0
      %1941 = vmatprep.subr.bf16.mxu0 0
      %1942 = vmatpush1.bf16.msra.mxu0 0
      %1943 = vmatprep.subr.bf16.mxu0 0
      %1944 = vmatpush1.bf16.msra.mxu0 0
      %1945 = vmatprep.subr.bf16.mxu0 0
      %1946 = vmatpush1.bf16.msra.mxu0 0
      %1947 = vmatprep.subr.bf16.mxu0 0
      %1948 = vmatpush1.bf16.msra.mxu0 0
      %1949 = vmatprep.subr.bf16.mxu0 0
      %1950 = vmatpush1.bf16.msra.mxu0 0
      %1951 = vmatprep.subr.bf16.mxu0 0
      %1952 = vmatpush1.bf16.msra.mxu0 0
      %1953 = vmatprep.subr.bf16.mxu0 0
      %1954 = vmatpush1.bf16.msra.mxu0 0
      %1955 = vmatprep.subr.bf16.mxu0 0
      %1956 = vmatpush1.bf16.msra.mxu0 0
      %1957 = vmatprep.subr.bf16.mxu0 0
      %1958 = vmatpush1.bf16.msra.mxu0 0
      %1959 = vmatprep.subr.bf16.mxu0 0
      %1960 = vmatpush1.bf16.msra.mxu0 0
      %1961 = vmatprep.mubr.bf16.mxu0 0
      %1962 = vmatmul.mubr.bf16.gmra.mrb[0].mxu0 %v1918
      %v1963 = vpop.f32.mrb[0].mxu0
      %v1964 = vadd.f32 0.0, %v1963
      %v1965 = vpop.f32.mrb[0].mxu0
      %v1966 = vpop.f32.mrb[0].mxu0
      %v1967 = vadd.f32 0.0, %v1966
      %v1968 = vpop.f32.mrb[0].mxu0
      %1969 = vmatprep.mubr.bf16.mxu0 0
      %1970 = vmatmul.mubr.bf16.gmra.mrb[0].mxu0 %v1921
      %v1971 = vpop.f32.mrb[0].mxu0
      %v1972 = vadd.f32 0.0, %v1971
      %v1973 = vpop.f32.mrb[0].mxu0
      %v1974 = vpop.f32.mrb[0].mxu0
      %v1975 = vadd.f32 0.0, %v1974
      %v1976 = vpop.f32.mrb[0].mxu0
      %1977 = vmatprep.mubr.bf16.mxu0 0
      %1978 = vmatmul.mubr.bf16.gmra.mrb[0].mxu0 %v1924
      %v1979 = vpop.f32.mrb[0].mxu0
      %v1980 = vadd.f32 0.0, %v1979
      %v1981 = vpop.f32.mrb[0].mxu0
      %v1982 = vpop.f32.mrb[0].mxu0
      %v1983 = vadd.f32 0.0, %v1982
      %v1984 = vpop.f32.mrb[0].mxu0
      %1985 = vmatprep.mubr.bf16.mxu0 0
      %1986 = vmatmul.mubr.bf16.gmra.mrb[0].mxu0 %v1927
      %v1987 = vpop.f32.mrb[0].mxu0
      %v1988 = vadd.f32 0.0, %v1987
      %v1989 = vpop.f32.mrb[0].mxu0
      %v1990 = vpop.f32.mrb[0].mxu0
      %v1991 = vadd.f32 0.0, %v1990
      %v1992 = vpop.f32.mrb[0].mxu0
      %1993 = vdwg.mxu0
      %v1994 = vadd.f32 %v1736, %v1964
      %v1995 = vadd.f32 %v1737, %v1967
      %v1996 = vadd.f32 %v1738, %v1972
      %v1997 = vadd.f32 %v1739, %v1975
      %v1998 = vadd.f32 %v1740, %v1980
      %v1999 = vadd.f32 %v1741, %v1983
      %v2000 = vadd.f32 %v1742, %v1988
      %v2001 = vadd.f32 %v1743, %v1991
      %v2002 = vld [vmem:[%s1597] sm:$0xe]
      %v2003 = vld [vmem:[%s1597 + $0x8] sm:$0xe]
      %v2004 = vld [vmem:[%s1597 + $0x10] sm:$0xe]
      %v2005 = vld [vmem:[%s1597 + $0x18] sm:$0xe]
      %v2006 = vld [vmem:[%s1597 + $0x20] sm:$0xe]
      %v2007 = vld [vmem:[%s1597 + $0x28] sm:$0xe]
      %v2008 = vld [vmem:[%s1597 + $0x30] sm:$0xe]
      %v2009 = vld [vmem:[%s1597 + $0x38] sm:$0xe]
      %v2026 = vrot.slane %v2002, 5
      %v2027 = vrot.slane %v2026, 4
      %v2028 = vrot.slane %v1745, 5
      %v2029 = vsel %vm837, %v2027, %v2028
      %v2030 = vrot.slane %v2003, 5
      %v2031 = vrot.slane %v2030, 4
      %v2032 = vrot.slane %v1747, 5
      %v2033 = vsel %vm837, %v2031, %v2032
      %v2034 = vrot.slane %v2004, 5
      %v2035 = vrot.slane %v2034, 4
      %v2036 = vrot.slane %v1749, 5
      %v2037 = vsel %vm837, %v2035, %v2036
      %v2038 = vrot.slane %v2005, 5
      %v2039 = vrot.slane %v2038, 4
      %v2040 = vrot.slane %v1751, 5
      %v2041 = vsel %vm837, %v2039, %v2040
      %v2042 = vrot.slane %v2006, 5
      %v2043 = vrot.slane %v2042, 4
      %v2044 = vrot.slane %v1753, 5
      %v2045 = vsel %vm837, %v2043, %v2044
      %v2046 = vrot.slane %v2007, 5
      %v2047 = vrot.slane %v2046, 4
      %v2048 = vrot.slane %v1755, 5
      %v2049 = vsel %vm837, %v2047, %v2048
      %v2050 = vrot.slane %v2008, 5
      %v2051 = vrot.slane %v2050, 4
      %v2052 = vrot.slane %v1757, 5
      %v2053 = vsel %vm837, %v2051, %v2052
      %v2054 = vrot.slane %v2009, 5
      %v2055 = vrot.slane %v2054, 4
      %v2056 = vrot.slane %v1759, 5
      %v2057 = vsel %vm837, %v2055, %v2056
      %s2058 = scalar_lea.vmem %s2, 256
      %v2059 = vld [vmem:[%s2058] sm:$0xf]
      %v2060 = vld [vmem:[%s2058 + $0x4] sm:$0xf]
      %v2061 = vld [vmem:[%s2058 + $0x8] sm:$0xf]
      %v2062 = vld [vmem:[%s2058 + $0xc] sm:$0xf]
      %v2063 = vld [vmem:[%s2058 + $0x10] sm:$0xf]
      %v2064 = vld [vmem:[%s2058 + $0x14] sm:$0xf]
      %v2065 = vld [vmem:[%s2058 + $0x18] sm:$0xf]
      %v2066 = vld [vmem:[%s2058 + $0x1c] sm:$0xf]
      %v2067 = vunpack.c.l.b16 %v2029
      %v2068 = vunpack.c.l.b16 %v2033
      %v2069 = vunpack.c.l.b16 %v2037
      %v2070 = vunpack.c.l.b16 %v2041
      %v2071 = vunpack.c.l.b16 %v2045
      %v2072 = vunpack.c.l.b16 %v2049
      %v2073 = vunpack.c.l.b16 %v2053
      %v2074 = vunpack.c.l.b16 %v2057
      %v2075 = vpack.c.b16 %v2068, %v2067
      %v2076 = vpack.c.b16 %v2070, %v2069
      %v2077 = vpack.c.b16 %v2072, %v2071
      %v2078 = vpack.c.b16 %v2074, %v2073
      %v2087 = vunpack.c.l.b16 %v2059
      %v2088 = vunpack.c.l.b16 %v2060
      %v2089 = vunpack.c.l.b16 %v2061
      %v2090 = vunpack.c.l.b16 %v2062
      %v2091 = vunpack.c.l.b16 %v2063
      %v2092 = vunpack.c.l.b16 %v2064
      %v2093 = vunpack.c.l.b16 %v2065
      %v2094 = vunpack.c.l.b16 %v2066
      %v2095 = vpack.c.b16 %v2088, %v2087
      %v2096 = vpack.c.b16 %v2090, %v2089
      %v2097 = vpack.c.b16 %v2092, %v2091
      %v2098 = vpack.c.b16 %v2094, %v2093
      %v2104 = vsel %vm612, %v2075, 0
      %v2107 = vsel %vm612, %v2076, 0
      %v2110 = vsel %vm612, %v2077, 0
      %v2113 = vsel %vm612, %v2078, 0
      %2115 = vmatprep.subr.bf16.mxu0 0
      %2116 = vmatpush1.bf16.msra.mxu0 %v2095
      %2117 = vmatprep.subr.bf16.mxu0 0
      %2118 = vmatpush1.bf16.msra.mxu0 %v2096
      %2119 = vmatprep.subr.bf16.mxu0 0
      %2120 = vmatpush1.bf16.msra.mxu0 %v2097
      %2121 = vmatprep.subr.bf16.mxu0 0
      %2122 = vmatpush1.bf16.msra.mxu0 %v2098
      %2123 = vmatprep.subr.bf16.mxu0 0
      %2124 = vmatpush1.bf16.msra.mxu0 0
      %2125 = vmatprep.subr.bf16.mxu0 0
      %2126 = vmatpush1.bf16.msra.mxu0 0
      %2127 = vmatprep.subr.bf16.mxu0 0
      %2128 = vmatpush1.bf16.msra.mxu0 0
      %2129 = vmatprep.subr.bf16.mxu0 0
      %2130 = vmatpush1.bf16.msra.mxu0 0
      %2131 = vmatprep.subr.bf16.mxu0 0
      %2132 = vmatpush1.bf16.msra.mxu0 0
      %2133 = vmatprep.subr.bf16.mxu0 0
      %2134 = vmatpush1.bf16.msra.mxu0 0
      %2135 = vmatprep.subr.bf16.mxu0 0
      %2136 = vmatpush1.bf16.msra.mxu0 0
      %2137 = vmatprep.subr.bf16.mxu0 0
      %2138 = vmatpush1.bf16.msra.mxu0 0
      %2139 = vmatprep.subr.bf16.mxu0 0
      %2140 = vmatpush1.bf16.msra.mxu0 0
      %2141 = vmatprep.subr.bf16.mxu0 0
      %2142 = vmatpush1.bf16.msra.mxu0 0
      %2143 = vmatprep.subr.bf16.mxu0 0
      %2144 = vmatpush1.bf16.msra.mxu0 0
      %2145 = vmatprep.subr.bf16.mxu0 0
      %2146 = vmatpush1.bf16.msra.mxu0 0
      %2147 = vmatprep.mubr.bf16.mxu0 0
      %2148 = vmatmul.mubr.bf16.gmra.mrb[0].mxu0 %v2104
      %v2149 = vpop.f32.mrb[0].mxu0
      %v2150 = vadd.f32 0.0, %v2149
      %v2151 = vpop.f32.mrb[0].mxu0
      %v2152 = vpop.f32.mrb[0].mxu0
      %v2153 = vadd.f32 0.0, %v2152
      %v2154 = vpop.f32.mrb[0].mxu0
      %2155 = vmatprep.mubr.bf16.mxu0 0
      %2156 = vmatmul.mubr.bf16.gmra.mrb[0].mxu0 %v2107
      %v2157 = vpop.f32.mrb[0].mxu0
      %v2158 = vadd.f32 0.0, %v2157
      %v2159 = vpop.f32.mrb[0].mxu0
      %v2160 = vpop.f32.mrb[0].mxu0
      %v2161 = vadd.f32 0.0, %v2160
      %v2162 = vpop.f32.mrb[0].mxu0
      %2163 = vmatprep.mubr.bf16.mxu0 0
      %2164 = vmatmul.mubr.bf16.gmra.mrb[0].mxu0 %v2110
      %v2165 = vpop.f32.mrb[0].mxu0
      %v2166 = vadd.f32 0.0, %v2165
      %v2167 = vpop.f32.mrb[0].mxu0
      %v2168 = vpop.f32.mrb[0].mxu0
      %v2169 = vadd.f32 0.0, %v2168
      %v2170 = vpop.f32.mrb[0].mxu0
      %2171 = vmatprep.mubr.bf16.mxu0 0
      %2172 = vmatmul.mubr.bf16.gmra.mrb[0].mxu0 %v2113
      %v2173 = vpop.f32.mrb[0].mxu0
      %v2174 = vadd.f32 0.0, %v2173
      %v2175 = vpop.f32.mrb[0].mxu0
      %v2176 = vpop.f32.mrb[0].mxu0
      %v2177 = vadd.f32 0.0, %v2176
      %v2178 = vpop.f32.mrb[0].mxu0
      %2179 = vdwg.mxu0
      %v2180 = vadd.f32 %v1994, %v2150
      %v2181 = vadd.f32 %v1995, %v2153
      %v2182 = vadd.f32 %v1996, %v2158
      %v2183 = vadd.f32 %v1997, %v2161
      %v2184 = vadd.f32 %v1998, %v2166
      %v2185 = vadd.f32 %v1999, %v2169
      %v2186 = vadd.f32 %v2000, %v2174
      %v2187 = vadd.f32 %v2001, %v2177
      %v2188 = vld [vmem:[%s3] sm:$0x1]
      %v2190 = vlaneseq
      %v2191 = vshrl.u32 %v2190, 7
      %v2192 = vsub.s32 0, %v2191
      %v2193 = vrot.slane %v2188, %v2192
      %v2195 = vadd.f32 %v2180, %v2193
      %v2196 = vadd.f32 %v2181, %v2193
      %v2197 = vadd.f32 %v2182, %v2193
      %v2198 = vadd.f32 %v2183, %v2193
      %v2199 = vadd.f32 %v2184, %v2193
      %v2200 = vadd.f32 %v2185, %v2193
      %v2201 = vadd.f32 %v2186, %v2193
      %v2202 = vadd.f32 %v2187, %v2193
      %v2203 = vmax.f32 %v2195, 0.0
      %v2204 = vmax.f32 %v2196, 0.0
      %v2205 = vmax.f32 %v2197, 0.0
      %v2206 = vmax.f32 %v2198, 0.0
      %v2207 = vmax.f32 %v2199, 0.0
      %v2208 = vmax.f32 %v2200, 0.0
      %v2209 = vmax.f32 %v2201, 0.0
      %v2210 = vmax.f32 %v2202, 0.0
      %v2211 = vld [vmem:[%s244] sm:$0xff]
      %v2212 = vld [vmem:[%s244 + $0x8] sm:$0xff]
      %v2213 = vld [vmem:[%s244 + $0x10] sm:$0xff]
      %v2214 = vld [vmem:[%s244 + $0x18] sm:$0xff]
      %v2215 = vld [vmem:[%s244 + $0x20] sm:$0xff]
      %v2216 = vld [vmem:[%s244 + $0x28] sm:$0xff]
      %v2217 = vld [vmem:[%s244 + $0x30] sm:$0xff]
      %v2218 = vld [vmem:[%s244 + $0x38] sm:$0xff]
      %2219 = vxpose.xlu0.b32.start [1/16] %v2211, 128
      %2220 = vxpose.xlu0.b32.cont [2/16] %v2212, 128
      %2221 = vxpose.xlu0.b32.cont [3/16] %v2213, 128
      %2222 = vxpose.xlu0.b32.cont [4/16] %v2214, 128
      %2223 = vxpose.xlu0.b32.cont [5/16] %v2215, 128
      %2224 = vxpose.xlu0.b32.cont [6/16] %v2216, 128
      %2225 = vxpose.xlu0.b32.cont [7/16] %v2217, 128
      %2226 = vxpose.xlu0.b32.cont [8/16] %v2218, 128
      %2227 = vxpose.xlu0.b32.cont [9/16] 0.0, 128
      %2228 = vxpose.xlu0.b32.cont [10/16] 0.0, 128
      %2229 = vxpose.xlu0.b32.cont [11/16] 0.0, 128
      %2230 = vxpose.xlu0.b32.cont [12/16] 0.0, 128
      %2231 = vxpose.xlu0.b32.cont [13/16] 0.0, 128
      %2232 = vxpose.xlu0.b32.cont [14/16] 0.0, 128
      %2233 = vxpose.xlu0.b32.cont [15/16] 0.0, 128
      %2234 = vxpose.xlu0.b32.end [16/16] 0.0, 128
      %v2235 = vpop.trf.xlu0
      %v2236 = vpop.trf.xlu0
      %v2237 = vpop.trf.xlu0
      %v2238 = vpop.trf.xlu0
      %v2239 = vpop.trf.xlu0
      %v2240 = vpop.trf.xlu0
      %v2241 = vpop.trf.xlu0
      %v2242 = vpop.trf.xlu0
      %v2243 = vpop.trf.xlu0
      %v2244 = vpop.trf.xlu0
      %v2245 = vpop.trf.xlu0
      %v2246 = vpop.trf.xlu0
      %v2247 = vpop.trf.xlu0
      %v2248 = vpop.trf.xlu0
      %v2249 = vpop.trf.xlu0
      %v2250 = vpop.trf.xlu0
      %2251 = vxpose.xlu0.b32.start [1/16] %v2203, 128
      %2252 = vxpose.xlu0.b32.cont [2/16] %v2204, 128
      %2253 = vxpose.xlu0.b32.cont [3/16] %v2205, 128
      %2254 = vxpose.xlu0.b32.cont [4/16] %v2206, 128
      %2255 = vxpose.xlu0.b32.cont [5/16] %v2207, 128
      %2256 = vxpose.xlu0.b32.cont [6/16] %v2208, 128
      %2257 = vxpose.xlu0.b32.cont [7/16] %v2209, 128
      %2258 = vxpose.xlu0.b32.cont [8/16] %v2210, 128
      %2259 = vxpose.xlu0.b32.cont [9/16] 0.0, 128
      %2260 = vxpose.xlu0.b32.cont [10/16] 0.0, 128
      %2261 = vxpose.xlu0.b32.cont [11/16] 0.0, 128
      %2262 = vxpose.xlu0.b32.cont [12/16] 0.0, 128
      %2263 = vxpose.xlu0.b32.cont [13/16] 0.0, 128
      %2264 = vxpose.xlu0.b32.cont [14/16] 0.0, 128
      %2265 = vxpose.xlu0.b32.cont [15/16] 0.0, 128
      %2266 = vxpose.xlu0.b32.end [16/16] 0.0, 128
      %v2267 = vpop.trf.xlu0
      %v2268 = vpop.trf.xlu0
      %v2269 = vpop.trf.xlu0
      %v2270 = vpop.trf.xlu0
      %v2271 = vpop.trf.xlu0
      %v2272 = vpop.trf.xlu0
      %v2273 = vpop.trf.xlu0
      %v2274 = vpop.trf.xlu0
      %v2275 = vpop.trf.xlu0
      %v2276 = vpop.trf.xlu0
      %v2277 = vpop.trf.xlu0
      %v2278 = vpop.trf.xlu0
      %v2279 = vpop.trf.xlu0
      %v2280 = vpop.trf.xlu0
      %v2281 = vpop.trf.xlu0
      %v2282 = vpop.trf.xlu0
      %v2284 = vrot.slane %v2235, 6
      %vm2286 = vcmask 1041408
      %v2287 = vsel %vm2286, %v2274, %v2284
      %2288 = vst.msk [vmem:[%s253] sm:$0xff] %vm612, %v2267
      %2289 = vst.msk [vmem:[%s253 + $0x8] sm:$0xff] %vm612, %v2268
      %2290 = vst.msk [vmem:[%s253 + $0x10] sm:$0xff] %vm612, %v2269
      %2291 = vst.msk [vmem:[%s253 + $0x18] sm:$0xff] %vm612, %v2270
      %2292 = vst.msk [vmem:[%s253 + $0x20] sm:$0xff] %vm612, %v2271
      %2293 = vst.msk [vmem:[%s253 + $0x28] sm:$0xff] %vm612, %v2272
      %2294 = vst.msk [vmem:[%s253 + $0x30] sm:$0xff] %vm612, %v2273
      %vm2295 = vcmask 521216
      %2296 = vst.msk [vmem:[%s253 + $0x38] sm:$0x3f] %vm2295, %v2287
      %p2297 = scmp.lt.s32.totalorder %s19, 1
      %s2298 = scalar_select %p2297, %s19, 1
      %p2299 = scmp.lt.s32.totalorder %s20, 0
      %s2300 = scalar_select %p2299, %s20, 0
      %s2301 = smul.addr %s2298, 8
      %s2302 = sadd.s32 %s2300, %s2301
      %s2303 = smul.addr %s2302, 8
      %s2304 = scalar_lea.vmem %s4, %s2303
      // Predicated region
      $region41: #{stem_forward.3} parent=35 // pred_check
        %p2305 = pneg %p143
      $region42: #{stem_forward.3} parent=35 // pred_check_branch
        %2307 = sbr.rel (%p2305) target = $region44
      $region43: #{stem_forward.3} parent=35 // pred_region
        _
      $region44: #{stem_forward.3} parent=35 // pred_fallthru
        _
    $region36: #{stem_forward.3} parent=5 // pred_fallthru
      _
    %p2308 = scmp.le.s32.totalorder 2, %s10
    // Predicated region
    $region45: #{stem_forward.3} parent=5 // pred_check
      %p2309 = pneg %p2308
    $region46: #{stem_forward.3} parent=5 // pred_check_branch
      %2311 = sbr.rel (%p2309) target = $region48
    $region47: #{stem_forward.3} parent=5 // pred_region
      %s2312 = ssub.s32 %s10, 2
      // Predicated region
      $region49: #{stem_forward.3} parent=47 // pred_check
        %p2313 = pneg %p149
      $region50: #{stem_forward.3} parent=47 // pred_check_branch
        %2315 = sbr.rel (%p2313) target = $region52
      $region51: #{stem_forward.3} parent=47 // pred_region
        %p2316 = scmp.lt.s32.totalorder %s21, 1
        %s2317 = scalar_select %p2316, %s21, 1
        %p2318 = scmp.lt.s32.totalorder %s22, 0
        %s2319 = scalar_select %p2318, %s22, 0
        %s2320 = smul.addr %s2317, 8
        %s2321 = sadd.s32 %s2319, %s2320
        %s2322 = smul.addr %s2321, 8
        %s2323 = scalar_lea.vmem %s4, %s2322
      $region52: #{stem_forward.3} parent=47 // pred_fallthru
        _
    $region48: #{stem_forward.3} parent=5 // pred_fallthru
      _
  $region6: #{stem_forward.3} parent=0 // loop_footer
    %s14 = sadd.s32 1, %s10
  $region7: #{stem_forward.3} parent=0 // loop_footer_branch
    %9 = sbr.rel target = $region3
  $region8: #{stem_forward.3} parent=0 // loop_exit
    _

</llo_original>
